<compile_context>
chip_gen: v5e
topology: v5e:2x2
jax: 0.10.0
libtpu: 0.0.40
codegen_flags: <defaults>
</compile_context>

<pallas_src>
import functools
import math

import jax
import jax.numpy as jnp
import numpy as np
from jax.experimental import pallas as pl
from jax.experimental.pallas import tpu as pltpu

_CPARAMS = pltpu.CompilerParams(
    dimension_semantics=("parallel",),
    vmem_limit_bytes=32 * 1024 * 1024,
)


def _round_up(n, m):
    return ((n + m - 1) // m) * m


# ------------------------------ BlockSpec helpers ---------------------------

def _bspec_b(shape):
    """Per-batch block: (1, ...) tile indexed by the grid's batch axis."""
    nd = len(shape)

    def idx(b):
        return (b,) + (0,) * (nd - 1)

    return pl.BlockSpec((1,) + tuple(shape[1:]), idx)


def _bspec_s(shape):
    """Shared (weight-like) block: full array, same block every grid step."""
    nd = len(shape)

    def idx(b):
        return (0,) * nd

    return pl.BlockSpec(tuple(shape), idx)


# ------------------------------ static matrices -----------------------------

@functools.lru_cache(maxsize=None)
def _avg_matrix_np(L, K):
    # Banded averaging matrix implementing AvgPool1d(K, stride=1) with
    # replicate padding of (K-1)//2 on each side (Autoformer series_decomp).
    assert K % 2 == 1, "moving_avg kernel size must be odd"
    pad = (K - 1) // 2
    A = np.zeros((L, L), np.float32)
    for t in range(L):
        for s in range(K):
            j = min(max(t + s - pad, 0), L - 1)
            A[t, j] += 1.0 / K
    return A


def avg_matrix(L, K):
    return jnp.asarray(_avg_matrix_np(L, K))


@functools.lru_cache(maxsize=None)
def _shift_matrices_np(L):
    # P[0] @ x == roll(x, +1, axis=0)  (x_prev for circular conv tap 0)
    # P[1] @ x == roll(x, -1, axis=0)  (x_next for circular conv tap 2)
    p_prev = np.zeros((L, L), np.float32)
    p_next = np.zeros((L, L), np.float32)
    for t in range(L):
        p_prev[t, (t - 1) % L] = 1.0
        p_next[t, (t + 1) % L] = 1.0
    return np.stack([p_prev, p_next]).astype(np.float32)


def shift_matrices(L):
    return jnp.asarray(_shift_matrices_np(L))


# ----------------------------- Pallas kernel bodies -------------------------

def _linear_kernel(x_ref, w_ref, b_ref, o_ref):
    # x: (1, L, Din) f32, w: (Din, Np) bf16, b: (1, Np) f32 -> (1, L, Np) f32
    x = x_ref[0]
    y = jnp.dot(x.astype(jnp.bfloat16), w_ref[...],
                preferred_element_type=jnp.float32) + b_ref[...]
    o_ref[...] = y[None]


def _proj_res_decomp_kernel(ctx_ref, xres_ref, wo_ref, bo_ref, A_ref,
                            res_ref, *mean_refs, with_trend):
    # out-projection + residual add + series decomposition, all in VMEM.
    ctx = ctx_ref[0]                                           # (L, D)
    new_x = jnp.dot(ctx.astype(jnp.bfloat16), wo_ref[...],
                    preferred_element_type=jnp.float32) + bo_ref[...]
    s = xres_ref[0] + new_x
    mean = jnp.dot(A_ref[...], s, preferred_element_type=jnp.float32)
    res_ref[...] = (s - mean)[None]
    if with_trend:
        mean_refs[0][...] = mean[None]


def _ffn_res_decomp_kernel(x_ref, w1_ref, w2_ref, A_ref,
                           res_ref, *mean_refs, with_trend):
    # pointwise-conv FFN (hidden stays in VMEM) + residual + decomposition.
    x = x_ref[0]                                               # (L, D)
    h = jnp.maximum(jnp.dot(x.astype(jnp.bfloat16), w1_ref[...],
                            preferred_element_type=jnp.float32), 0.0)
    y = jnp.dot(h.astype(jnp.bfloat16), w2_ref[...],
                preferred_element_type=jnp.float32)
    s = x + y
    mean = jnp.dot(A_ref[...], s, preferred_element_type=jnp.float32)
    res_ref[...] = (s - mean)[None]
    if with_trend:
        mean_refs[0][...] = mean[None]


def _embed_kernel(x_ref, xm_ref, tok_w_ref, temp_w_ref, pe_ref, shift_ref,
                  o_ref):
    # TokenEmbedding (circular Conv1d k=3, no bias, via shift matmuls)
    # + TimeFeatureEmbedding (Linear, no bias) + positional embedding.
    x = x_ref[0]                                               # (L, C)
    x_prev = jnp.dot(shift_ref[0], x, preferred_element_type=jnp.float32)
    x_next = jnp.dot(shift_ref[1], x, preferred_element_type=jnp.float32)
    tok = (jnp.dot(x_prev, tok_w_ref[0], preferred_element_type=jnp.float32)
           + jnp.dot(x, tok_w_ref[1], preferred_element_type=jnp.float32)
           + jnp.dot(x_next, tok_w_ref[2], preferred_element_type=jnp.float32))
    temp = jnp.dot(xm_ref[0], temp_w_ref[...],
                   preferred_element_type=jnp.float32)
    o_ref[...] = (tok + temp + pe_ref[0])[None]


def _trend_kernel(trend_ref, t1_ref, t2_ref, t3_ref, w_ref, shift_ref, o_ref):
    # residual_trend = t1+t2+t3 ; circular Conv1d(k=3, d_model->c_out, no bias);
    # trend accumulator update, all fused.
    t = t1_ref[0] + t2_ref[0] + t3_ref[0]                      # (L, D)
    t_prev = jnp.dot(shift_ref[0], t, preferred_element_type=jnp.float32)
    t_next = jnp.dot(shift_ref[1], t, preferred_element_type=jnp.float32)
    proj = (jnp.dot(t_prev, w_ref[0], preferred_element_type=jnp.float32)
            + jnp.dot(t, w_ref[1], preferred_element_type=jnp.float32)
            + jnp.dot(t_next, w_ref[2], preferred_element_type=jnp.float32))
    o_ref[...] = (trend_ref[0] + proj)[None]


def _layernorm_kernel(x_ref, g_ref, b_ref, o_ref):
    # my_Layernorm: LayerNorm over channels, then subtract per-series time mean.
    x = x_ref[0]                                               # (L, D)
    mu = jnp.mean(x, axis=-1, keepdims=True)
    var = jnp.mean((x - mu) ** 2, axis=-1, keepdims=True)
    xhat = (x - mu) * jax.lax.rsqrt(var + 1e-5) * g_ref[...] + b_ref[...]
    o_ref[...] = (xhat - jnp.mean(xhat, axis=0, keepdims=True))[None]


def _final_kernel(x_ref, g_ref, b_ref, w_ref, pb_ref, trend_ref, o_ref):
    # decoder norm (my_Layernorm) + projection (d_model -> c_out) + trend add.
    x = x_ref[0]
    mu = jnp.mean(x, axis=-1, keepdims=True)
    var = jnp.mean((x - mu) ** 2, axis=-1, keepdims=True)
    xhat = (x - mu) * jax.lax.rsqrt(var + 1e-5) * g_ref[...] + b_ref[...]
    xhat = xhat - jnp.mean(xhat, axis=0, keepdims=True)
    seasonal = jnp.dot(xhat, w_ref[...],
                       preferred_element_type=jnp.float32) + pb_ref[...]
    o_ref[...] = (trend_ref[0] + seasonal)[None]


def _decomp_kernel(x_ref, A_ref, res_ref, mean_ref):
    x = x_ref[0]
    mean = jnp.dot(A_ref[...], x, preferred_element_type=jnp.float32)
    res_ref[...] = (x - mean)[None]
    mean_ref[...] = mean[None]


# ------------------------------ kernel wrappers ----------------------------

def pallas_linear3(x, w, b):
    """(B, L, Din) @ bf16 (Din, Np) + b -> (B, L, Np) f32, lane-dense Np."""
    B, L, _ = x.shape
    Np = w.shape[1]
    return pl.pallas_call(
        _linear_kernel,
        grid=(B,),
        out_shape=jax.ShapeDtypeStruct((B, L, Np), jnp.float32),
        in_specs=[_bspec_b(x.shape), _bspec_s(w.shape), _bspec_s(b.shape)],
        out_specs=_bspec_b((B, L, Np)),
        compiler_params=_CPARAMS,
    )(x, w, b)


def proj_res_decomp(ctx, x_res, wo, bo, A, with_trend):
    B, L, D = x_res.shape
    kern = functools.partial(_proj_res_decomp_kernel, with_trend=with_trend)
    out_shapes = [jax.ShapeDtypeStruct((B, L, D), jnp.float32)]
    out_specs = [_bspec_b((B, L, D))]
    if with_trend:
        out_shapes.append(jax.ShapeDtypeStruct((B, L, D), jnp.float32))
        out_specs.append(_bspec_b((B, L, D)))
    out = pl.pallas_call(
        kern,
        grid=(B,),
        out_shape=tuple(out_shapes),
        in_specs=[_bspec_b(ctx.shape), _bspec_b(x_res.shape),
                  _bspec_s(wo.shape), _bspec_s(bo.shape), _bspec_s(A.shape)],
        out_specs=tuple(out_specs),
        compiler_params=_CPARAMS,
    )(ctx, x_res, wo, bo, A)
    return out if with_trend else out[0]


def ffn_res_decomp(x, w1, w2, A, with_trend):
    B, L, D = x.shape
    kern = functools.partial(_ffn_res_decomp_kernel, with_trend=with_trend)
    out_shapes = [jax.ShapeDtypeStruct((B, L, D), jnp.float32)]
    out_specs = [_bspec_b((B, L, D))]
    if with_trend:
        out_shapes.append(jax.ShapeDtypeStruct((B, L, D), jnp.float32))
        out_specs.append(_bspec_b((B, L, D)))
    out = pl.pallas_call(
        kern,
        grid=(B,),
        out_shape=tuple(out_shapes),
        in_specs=[_bspec_b(x.shape), _bspec_s(w1.shape), _bspec_s(w2.shape),
                  _bspec_s(A.shape)],
        out_specs=tuple(out_specs),
        compiler_params=_CPARAMS,
    )(x, w1, w2, A)
    return out if with_trend else out[0]


def pallas_embed(x, x_mark, token_w, temp_w, pe, shifts):
    B, L, _ = x.shape
    D = temp_w.shape[1]
    return pl.pallas_call(
        _embed_kernel,
        grid=(B,),
        out_shape=jax.ShapeDtypeStruct((B, L, D), jnp.float32),
        in_specs=[_bspec_b(x.shape), _bspec_b(x_mark.shape),
                  _bspec_s(token_w.shape), _bspec_s(temp_w.shape),
                  _bspec_s(pe.shape), _bspec_s(shifts.shape)],
        out_specs=_bspec_b((B, L, D)),
        compiler_params=_CPARAMS,
    )(x, x_mark, token_w, temp_w, pe, shifts)


def pallas_trend_update(trend, t1, t2, t3, w, shifts):
    B, L, c_out = trend.shape
    return pl.pallas_call(
        _trend_kernel,
        grid=(B,),
        out_shape=jax.ShapeDtypeStruct((B, L, c_out), jnp.float32),
        in_specs=[_bspec_b(trend.shape), _bspec_b(t1.shape), _bspec_b(t2.shape),
                  _bspec_b(t3.shape), _bspec_s(w.shape), _bspec_s(shifts.shape)],
        out_specs=_bspec_b((B, L, c_out)),
        compiler_params=_CPARAMS,
    )(trend, t1, t2, t3, w, shifts)


def pallas_my_layernorm(x, g, b):
    B, L, D = x.shape
    return pl.pallas_call(
        _layernorm_kernel,
        grid=(B,),
        out_shape=jax.ShapeDtypeStruct((B, L, D), jnp.float32),
        in_specs=[_bspec_b(x.shape), _bspec_s(g.shape), _bspec_s(b.shape)],
        out_specs=_bspec_b((B, L, D)),
        compiler_params=_CPARAMS,
    )(x, g, b)


def pallas_final(x, g, b, w, pb, trend):
    B, L, _ = x.shape
    c_out = w.shape[1]
    return pl.pallas_call(
        _final_kernel,
        grid=(B,),
        out_shape=jax.ShapeDtypeStruct((B, L, c_out), jnp.float32),
        in_specs=[_bspec_b(x.shape), _bspec_s(g.shape), _bspec_s(b.shape),
                  _bspec_s(w.shape), _bspec_s(pb.shape), _bspec_b(trend.shape)],
        out_specs=_bspec_b((B, L, c_out)),
        compiler_params=_CPARAMS,
    )(x, g, b, w, pb, trend)


def pallas_decomp(x, A):
    B, L, C = x.shape
    return pl.pallas_call(
        _decomp_kernel,
        grid=(B,),
        out_shape=(jax.ShapeDtypeStruct((B, L, C), jnp.float32),
                   jax.ShapeDtypeStruct((B, L, C), jnp.float32)),
        in_specs=[_bspec_b(x.shape), _bspec_s(A.shape)],
        out_specs=(_bspec_b((B, L, C)), _bspec_b((B, L, C))),
        compiler_params=_CPARAMS,
    )(x, A)


# ------------------------- AutoCorrelation (JAX glue) -----------------------

def time_delay_agg_inference(values, corr, factor):
    # values, corr: (B, H, E, L).  Vectorized: one gather + one einsum instead
    # of a Python top_k loop.
    B, H, C, L = values.shape
    top_k = max(int(factor * math.log(L)), 1)
    mean_value = jnp.mean(corr, axis=(1, 2))                       # (B, L)
    # TODO(synk): top_k + data-dependent gather have no clean Pallas equivalent.
    weights, delay = jax.lax.top_k(mean_value, top_k)              # (B, K)
    tmp_corr = jax.nn.softmax(weights, axis=-1)                    # (B, K)
    tmp_values = jnp.concatenate([values, values], axis=-1)        # (B,H,C,2L)
    init_index = jnp.arange(L, dtype=jnp.int32)
    idx = init_index[None, None, :] + delay[:, :, None]            # (B, K, L)
    idx = jnp.broadcast_to(idx[:, :, None, None, :], (B, top_k, H, C, L))
    tv = jnp.broadcast_to(tmp_values[:, None], (B, top_k, H, C, 2 * L))
    patterns = jnp.take_along_axis(tv, idx, axis=-1)               # (B,K,H,C,L)
    return jnp.einsum('bk,bkhcl->bhcl', tmp_corr, patterns)


def autocorrelation(q, k, v, factor):
    # q: (B, L, H, E), k/v: (B, S, H, E)
    B, L, H, E = q.shape
    S = v.shape[1]
    if L > S:
        zeros = jnp.zeros((B, L - S, H, E), q.dtype)
        v = jnp.concatenate([v, zeros], axis=1)
        k = jnp.concatenate([k, zeros], axis=1)
    else:
        v = v[:, :L]
        k = k[:, :L]
    # TODO(synk): rfft/irfft have no Pallas equivalent; circular correlation via jnp.fft.
    qf = jnp.fft.rfft(jnp.transpose(q, (0, 2, 3, 1)), axis=-1)
    kf = jnp.fft.rfft(jnp.transpose(k, (0, 2, 3, 1)), axis=-1)
    corr = jnp.fft.irfft(qf * jnp.conj(kf), n=L, axis=-1)          # (B,H,E,L)
    vals = jnp.transpose(v, (0, 2, 3, 1))                          # (B,H,E,L)
    agg = time_delay_agg_inference(vals, corr, factor)             # (B,H,E,L)
    return jnp.transpose(agg, (0, 3, 1, 2))                        # (B,L,H,E)


# ------------------------------ model blocks -------------------------------

def encoder_layer(p, x, cfg):
    B, L, D = x.shape
    H = cfg['n_heads']
    A = avg_matrix(L, cfg['moving_avg'])
    qkv = pallas_linear3(x, p['attn']['w_qkv'], p['attn']['b_qkv'])
    q = qkv[..., 0:D].reshape(B, L, H, -1)
    k = qkv[..., D:2 * D].reshape(B, L, H, -1)
    v = qkv[..., 2 * D:3 * D].reshape(B, L, H, -1)
    ctx = autocorrelation(q, k, v, cfg['factor']).reshape(B, L, D)
    x = proj_res_decomp(ctx, x, p['attn']['wo'], p['attn']['bo'], A,
                        with_trend=False)
    x = ffn_res_decomp(x, p['w1'], p['w2'], A, with_trend=False)
    return x


def encoder(p, x, cfg):
    for lp in p['layers']:
        x = encoder_layer(lp, x, cfg)
    return pallas_my_layernorm(x, p['norm_g'], p['norm_b'])


def decoder_layer(p, x, cross, cfg, A):
    B, L, D = x.shape
    S = cross.shape[1]
    H = cfg['n_heads']
    # self attention (fused QKV)
    qkv = pallas_linear3(x, p['self_attn']['w_qkv'], p['self_attn']['b_qkv'])
    q = qkv[..., 0:D].reshape(B, L, H, -1)
    k = qkv[..., D:2 * D].reshape(B, L, H, -1)
    v = qkv[..., 2 * D:3 * D].reshape(B, L, H, -1)
    ctx = autocorrelation(q, k, v, cfg['factor']).reshape(B, L, D)
    x, trend1 = proj_res_decomp(ctx, x, p['self_attn']['wo'],
                                p['self_attn']['bo'], A, with_trend=True)
    # cross attention (Q from x, fused KV from cross)
    q = pallas_linear3(x, p['cross_attn']['w_q'],
                       p['cross_attn']['b_q'])[..., 0:D].reshape(B, L, H, -1)
    kv = pallas_linear3(cross, p['cross_attn']['w_kv'], p['cross_attn']['b_kv'])
    k = kv[..., 0:D].reshape(B, S, H, -1)
    v = kv[..., D:2 * D].reshape(B, S, H, -1)
    ctx = autocorrelation(q, k, v, cfg['factor']).reshape(B, L, D)
    x, trend2 = proj_res_decomp(ctx, x, p['cross_attn']['wo'],
                                p['cross_attn']['bo'], A, with_trend=True)
    # FFN
    x, trend3 = ffn_res_decomp(x, p['w1'], p['w2'], A, with_trend=True)
    return x, trend1, trend2, trend3


def decoder(p, x, cross, trend, cfg):
    B, L, D = x.shape
    A = avg_matrix(L, cfg['moving_avg'])
    shifts = shift_matrices(L)
    for lp in p['layers']:
        x, t1, t2, t3 = decoder_layer(lp, x, cross, cfg, A)
        trend = pallas_trend_update(trend, t1, t2, t3, lp['trend_w'], shifts)
    return pallas_final(x, p['norm_g'], p['norm_b'], p['proj_w'], p['proj_b'],
                        trend)


def sinusoidal_pe(max_len, d_model):
    position = np.arange(max_len, dtype=np.float32)[:, None]
    div_term = np.exp(np.arange(0, d_model, 2, dtype=np.float32)
                      * -(math.log(10000.0) / d_model))
    pe = np.zeros((max_len, d_model), np.float32)
    pe[:, 0::2] = np.sin(position * div_term)
    pe[:, 1::2] = np.cos(position * div_term)
    return jnp.asarray(pe)[None]


def forecast(params, x_enc, x_mark_enc, x_dec, x_mark_dec, cfg):
    B, L_enc, _ = x_enc.shape
    L_dec = cfg['label_len'] + cfg['pred_len']
    dm = params['pe'].shape[-1]

    mean = jnp.repeat(jnp.mean(x_enc, axis=1, keepdims=True),
                      cfg['pred_len'], axis=1)
    zeros = jnp.zeros((x_dec.shape[0], cfg['pred_len'], x_dec.shape[2]),
                      x_enc.dtype)
    A_in = avg_matrix(L_enc, cfg['moving_avg'])
    seasonal_init, trend_init = pallas_decomp(x_enc, A_in)
    trend_init = jnp.concatenate(
        [trend_init[:, -cfg['label_len']:, :], mean], axis=1)
    seasonal_init = jnp.concatenate(
        [seasonal_init[:, -cfg['label_len']:, :], zeros], axis=1)

    pe_enc = params['pe'][:, :L_enc, :]
    pe_zero = jnp.zeros((1, L_dec, dm), jnp.float32)   # DataEmbedding_wo_pos

    enc_out = pallas_embed(x_enc, x_mark_enc,
                           params['enc_emb']['token_w'],
                           params['enc_emb']['temp_w'],
                           pe_enc, shift_matrices(L_enc))
    enc_out = encoder(params['encoder'], enc_out, cfg)

    dec_in = pallas_embed(seasonal_init, x_mark_dec,
                          params['dec_emb']['token_w'],
                          params['dec_emb']['temp_w'],
                          pe_zero, shift_matrices(L_dec))
    dec_out = decoder(params['decoder'], dec_in, enc_out, trend_init, cfg)
    return dec_out[:, -cfg['pred_len']:, :]


def model_forward(params, x_enc, x_mark_enc, x_mark_enc_binary, x_dec,
                  x_mark_dec, cfg):
    # task_name == 'long_term_forecast'
    return forecast(params, x_enc, x_mark_enc, x_dec, x_mark_dec, cfg)


# ------------------------------- parameters --------------------------------

def init_params(key, cfg):
    dm, dff, c_out = cfg['d_model'], cfg['d_ff'], cfg['c_out']
    enc_in, dec_in, mark = cfg['enc_in'], cfg['dec_in'], cfg['mark_dim']
    keys = iter(jax.random.split(key, 512))

    def w(shape, scale=0.1):
        return jax.random.normal(next(keys), shape, jnp.float32) * scale

    def fused_proj(ws, bs):
        # concat + zero-pad columns to a lane-dense multiple of 128, bf16 weights
        wcat = jnp.concatenate(ws, axis=1)
        bcat = jnp.concatenate(bs)
        n = _round_up(wcat.shape[1], 128)
        wpad = jnp.pad(wcat, ((0, 0), (0, n - wcat.shape[1]))).astype(jnp.bfloat16)
        bpad = jnp.pad(bcat, (0, n - bcat.shape[0])).reshape(1, n)
        return wpad, bpad

    def attn_self():
        wq, wk, wv = w((dm, dm)), w((dm, dm)), w((dm, dm))
        bq, bk, bv = w((dm,)), w((dm,)), w((dm,))
        w_qkv, b_qkv = fused_proj([wq, wk, wv], [bq, bk, bv])
        return dict(w_qkv=w_qkv, b_qkv=b_qkv,
                    wo=w((dm, dm)).astype(jnp.bfloat16),
                    bo=w((dm,)).reshape(1, dm))

    def attn_cross():
        wq, wk, wv = w((dm, dm)), w((dm, dm)), w((dm, dm))
        bq, bk, bv = w((dm,)), w((dm,)), w((dm,))
        w_q, b_q = fused_proj([wq], [bq])
        w_kv, b_kv = fused_proj([wk, wv], [bk, bv])
        return dict(w_q=w_q, b_q=b_q, w_kv=w_kv, b_kv=b_kv,
                    wo=w((dm, dm)).astype(jnp.bfloat16),
                    bo=w((dm,)).reshape(1, dm))

    enc_layers = [dict(attn=attn_self(),
                       w1=w((dm, dff)).astype(jnp.bfloat16),
                       w2=w((dff, dm)).astype(jnp.bfloat16))
                  for _ in range(cfg['e_layers'])]
    dec_layers = [dict(self_attn=attn_self(), cross_attn=attn_cross(),
                       w1=w((dm, dff)).astype(jnp.bfloat16),
                       w2=w((dff, dm)).astype(jnp.bfloat16),
                       trend_w=w((3, dm, c_out)))
                  for _ in range(cfg['d_layers'])]

    max_len = max(cfg['seq_len'], cfg['label_len'] + cfg['pred_len'])
    params = dict(
        pe=sinusoidal_pe(max_len, dm),
        enc_emb=dict(token_w=w((3, enc_in, dm)), temp_w=w((mark, dm))),
        dec_emb=dict(token_w=w((3, dec_in, dm)), temp_w=w((mark, dm))),
        encoder=dict(layers=enc_layers,
                     norm_g=jnp.ones((1, dm), jnp.float32),
                     norm_b=jnp.zeros((1, dm), jnp.float32)),
        decoder=dict(layers=dec_layers,
                     norm_g=jnp.ones((1, dm), jnp.float32),
                     norm_b=jnp.zeros((1, dm), jnp.float32),
                     proj_w=w((dm, c_out)),
                     proj_b=w((c_out,)).reshape(1, c_out)),
    )
    return params


# ----------------------------------- main -----------------------------------

if __name__ == "__main__":
    cfg = dict(task_name='long_term_forecast',
               seq_len=16, label_len=8, pred_len=8,
               enc_in=4, dec_in=4, c_out=4, mark_dim=4,
               d_model=32, n_heads=4, d_ff=64,
               e_layers=1, d_layers=1,
               moving_avg=5, factor=1, activation='relu')

    key = jax.random.PRNGKey(0)
    kp, k1, k2, k3, k4 = jax.random.split(key, 5)
    params = init_params(kp, cfg)

    B = 2
    x_enc = jax.random.normal(k1, (B, cfg['seq_len'], cfg['enc_in']), jnp.float32)
    x_mark_enc = jax.random.normal(k2, (B, cfg['seq_len'], cfg['mark_dim']), jnp.float32)
    dec_len = cfg['label_len'] + cfg['pred_len']
    x_dec = jax.random.normal(k3, (B, dec_len, cfg['dec_in']), jnp.float32)
    x_mark_dec = jax.random.normal(k4, (B, dec_len, cfg['mark_dim']), jnp.float32)
    x_mark_enc_binary = jnp.ones((B, cfg['seq_len'], 1), jnp.float32)  # unused

    fwd = jax.jit(lambda p, xe, xme, xmb, xd, xmd:
                  model_forward(p, xe, xme, xmb, xd, xmd, cfg))
    out = fwd(params, x_enc, x_mark_enc, x_mark_enc_binary, x_dec, x_mark_dec)
    out = jax.block_until_ready(out)
    assert out.shape == (B, cfg['pred_len'], cfg['c_out'])
    assert bool(jnp.all(jnp.isfinite(out)))
    print("KERNEL_OK")
</pallas_src>

<mosaic_0001>
module attributes {stable_mosaic.version = 11 : i64} {
  func.func @_decomp_kernel(%arg0: i32, %arg1: memref<1x16x4xf32, #tpu.memory_space<vmem>>, %arg2: memref<16x16xf32, #tpu.memory_space<vmem>>, %arg3: memref<1x16x4xf32, #tpu.memory_space<vmem>>, %arg4: memref<1x16x4xf32, #tpu.memory_space<vmem>>) attributes {dimension_semantics = [#tpu.dimension_semantics<parallel>], iteration_bounds = array<i64: 2>, scalar_prefetch = 0 : i64, scratch_operands = 0 : i64, tpu.core_type = #tpu.core_type<tc>, window_params = [{transform_indices = @transform_0, window_bounds = array<i64: 1, 16, 4>}, {pipeline_mode = #tpu.pipeline_mode<synchronous>, transform_indices = @transform_1, window_bounds = array<i64: 16, 16>}, {transform_indices = @transform_2, window_bounds = array<i64: 1, 16, 4>}, {transform_indices = @transform_3, window_bounds = array<i64: 1, 16, 4>}]} {
    %c0 = arith.constant 0 : index
    %c0_0 = arith.constant 0 : index
    %c0_1 = arith.constant 0 : index
    %0 = vector.load %arg1[%c0, %c0_0, %c0_1] : memref<1x16x4xf32, #tpu.memory_space<vmem>>, vector<1x16x4xf32>
    %1 = vector.shape_cast %0 : vector<1x16x4xf32> to vector<16x4xf32>
    %c0_2 = arith.constant 0 : index
    %c0_3 = arith.constant 0 : index
    %2 = vector.load %arg2[%c0_2, %c0_3] : memref<16x16xf32, #tpu.memory_space<vmem>>, vector<16x16xf32>
    %cst = arith.constant dense<0.000000e+00> : vector<16x4xf32>
    %3 = tpu.matmul %2, %1, %cst {dimension_numbers = #tpu.dot_dimension_numbers<[1], [0], [0], [1], [0, 0, 1, 1], [], []>} : vector<16x16xf32>, vector<16x4xf32>, vector<16x4xf32> -> vector<16x4xf32>
    %4 = arith.subf %1, %3 : vector<16x4xf32>
    %5 = vector.shape_cast %4 : vector<16x4xf32> to vector<1x16x4xf32>
    %c0_4 = arith.constant 0 : index
    %c0_5 = arith.constant 0 : index
    %c0_6 = arith.constant 0 : index
    %6 = vector.load %arg3[%c0_4, %c0_5, %c0_6] : memref<1x16x4xf32, #tpu.memory_space<vmem>>, vector<1x16x4xf32>
    tpu.vector_store %arg3[%c0_4, %c0_5, %c0_6], %5 {strides = array<i32>} : memref<1x16x4xf32, #tpu.memory_space<vmem>>, vector<1x16x4xf32>,
    %7 = vector.shape_cast %3 : vector<16x4xf32> to vector<1x16x4xf32>
    %c0_7 = arith.constant 0 : index
    %c0_8 = arith.constant 0 : index
    %c0_9 = arith.constant 0 : index
    %8 = vector.load %arg4[%c0_7, %c0_8, %c0_9] : memref<1x16x4xf32, #tpu.memory_space<vmem>>, vector<1x16x4xf32>
    tpu.vector_store %arg4[%c0_7, %c0_8, %c0_9], %7 {strides = array<i32>} : memref<1x16x4xf32, #tpu.memory_space<vmem>>, vector<1x16x4xf32>,
    return
  }
  func.func @transform_0(%arg0: i32) -> (i32, i32, i32) {
    %c0_i32 = arith.constant 0 : i32
    %c0_i32_0 = arith.constant 0 : i32
    %c0_i32_1 = arith.constant 0 : i32
    return %arg0, %c0_i32, %c0_i32_0 : i32, i32, i32
  }
  func.func @transform_1(%arg0: i32) -> (i32, i32) {
    %c0_i32 = arith.constant 0 : i32
    %c0_i32_0 = arith.constant 0 : i32
    %c0_i32_1 = arith.constant 0 : i32
    return %c0_i32, %c0_i32_0 : i32, i32
  }
  func.func @transform_2(%arg0: i32) -> (i32, i32, i32) {
    %c0_i32 = arith.constant 0 : i32
    %c0_i32_0 = arith.constant 0 : i32
    %c0_i32_1 = arith.constant 0 : i32
    return %arg0, %c0_i32, %c0_i32_0 : i32, i32, i32
  }
  func.func @transform_3(%arg0: i32) -> (i32, i32, i32) {
    %c0_i32 = arith.constant 0 : i32
    %c0_i32_0 = arith.constant 0 : i32
    %c0_i32_1 = arith.constant 0 : i32
    return %arg0, %c0_i32, %c0_i32_0 : i32, i32, i32
  }
}

module attributes {stable_mosaic.version = 11 : i64} {
  func.func @_linear_kernel(%arg0: i32, %arg1: memref<1x16x32xf32, #tpu.memory_space<vmem>>, %arg2: memref<32x128xbf16, #tpu.memory_space<vmem>>, %arg3: memref<1x128xf32, #tpu.memory_space<vmem>>, %arg4: memref<1x16x128xf32, #tpu.memory_space<vmem>>) attributes {dimension_semantics = [#tpu.dimension_semantics<parallel>], iteration_bounds = array<i64: 2>, scalar_prefetch = 0 : i64, scratch_operands = 0 : i64, tpu.core_type = #tpu.core_type<tc>, window_params = [{transform_indices = @transform_0, window_bounds = array<i64: 1, 16, 32>}, {pipeline_mode = #tpu.pipeline_mode<synchronous>, transform_indices = @transform_1, window_bounds = array<i64: 32, 128>}, {pipeline_mode = #tpu.pipeline_mode<synchronous>, transform_indices = @transform_2, window_bounds = array<i64: 1, 128>}, {transform_indices = @transform_3, window_bounds = array<i64: 1, 16, 128>}]} {
    %c0 = arith.constant 0 : index
    %c0_0 = arith.constant 0 : index
    %c0_1 = arith.constant 0 : index
    %0 = vector.load %arg1[%c0, %c0_0, %c0_1] : memref<1x16x32xf32, #tpu.memory_space<vmem>>, vector<1x16x32xf32>
    %1 = vector.shape_cast %0 : vector<1x16x32xf32> to vector<16x32xf32>
    %2 = arith.truncf %1 : vector<16x32xf32> to vector<16x32xbf16>
    %c0_2 = arith.constant 0 : index
    %c0_3 = arith.constant 0 : index
    %3 = vector.load %arg2[%c0_2, %c0_3] : memref<32x128xbf16, #tpu.memory_space<vmem>>, vector<32x128xbf16>
    %cst = arith.constant dense<0.000000e+00> : vector<16x128xf32>
    %4 = tpu.matmul %2, %3, %cst {dimension_numbers = #tpu.dot_dimension_numbers<[1], [0], [0], [1], [0, 0, 1, 1], [], []>} : vector<16x32xbf16>, vector<32x128xbf16>, vector<16x128xf32> -> vector<16x128xf32>
    %c0_4 = arith.constant 0 : index
    %c0_5 = arith.constant 0 : index
    %5 = vector.load %arg3[%c0_4, %c0_5] : memref<1x128xf32, #tpu.memory_space<vmem>>, vector<1x128xf32>
    %6 = vector.broadcast %5 : vector<1x128xf32> to vector<16x128xf32>
    %7 = arith.addf %4, %6 : vector<16x128xf32>
    %8 = vector.shape_cast %7 : vector<16x128xf32> to vector<1x16x128xf32>
    %c0_6 = arith.constant 0 : index
    %c0_7 = arith.constant 0 : index
    %c0_8 = arith.constant 0 : index
    %9 = vector.load %arg4[%c0_6, %c0_7, %c0_8] : memref<1x16x128xf32, #tpu.memory_space<vmem>>, vector<1x16x128xf32>
    tpu.vector_store %arg4[%c0_6, %c0_7, %c0_8], %8 {strides = array<i32>} : memref<1x16x128xf32, #tpu.memory_space<vmem>>, vector<1x16x128xf32>,
    return
  }
  func.func @transform_0(%arg0: i32) -> (i32, i32, i32) {
    %c0_i32 = arith.constant 0 : i32
    %c0_i32_0 = arith.constant 0 : i32
    %c0_i32_1 = arith.constant 0 : i32
    return %arg0, %c0_i32, %c0_i32_0 : i32, i32, i32
  }
  func.func @transform_1(%arg0: i32) -> (i32, i32) {
    %c0_i32 = arith.constant 0 : i32
    %c0_i32_0 = arith.constant 0 : i32
    %c0_i32_1 = arith.constant 0 : i32
    return %c0_i32, %c0_i32_0 : i32, i32
  }
  func.func @transform_2(%arg0: i32) -> (i32, i32) {
    %c0_i32 = arith.constant 0 : i32
    %c0_i32_0 = arith.constant 0 : i32
    %c0_i32_1 = arith.constant 0 : i32
    return %c0_i32, %c0_i32_0 : i32, i32
  }
  func.func @transform_3(%arg0: i32) -> (i32, i32, i32) {
    %c0_i32 = arith.constant 0 : i32
    %c0_i32_0 = arith.constant 0 : i32
    %c0_i32_1 = arith.constant 0 : i32
    return %arg0, %c0_i32, %c0_i32_0 : i32, i32, i32
  }
}

module attributes {stable_mosaic.version = 11 : i64} {
  func.func @_embed_kernel(%arg0: i32, %arg1: memref<1x16x4xf32, #tpu.memory_space<vmem>>, %arg2: memref<1x16x4xf32, #tpu.memory_space<vmem>>, %arg3: memref<3x4x32xf32, #tpu.memory_space<vmem>>, %arg4: memref<4x32xf32, #tpu.memory_space<vmem>>, %arg5: memref<1x16x32xf32, #tpu.memory_space<vmem>>, %arg6: memref<2x16x16xf32, #tpu.memory_space<vmem>>, %arg7: memref<1x16x32xf32, #tpu.memory_space<vmem>>) attributes {dimension_semantics = [#tpu.dimension_semantics<parallel>], iteration_bounds = array<i64: 2>, scalar_prefetch = 0 : i64, scratch_operands = 0 : i64, tpu.core_type = #tpu.core_type<tc>, window_params = [{transform_indices = @transform_0, window_bounds = array<i64: 1, 16, 4>}, {transform_indices = @transform_1, window_bounds = array<i64: 1, 16, 4>}, {pipeline_mode = #tpu.pipeline_mode<synchronous>, transform_indices = @transform_2, window_bounds = array<i64: 3, 4, 32>}, {pipeline_mode = #tpu.pipeline_mode<synchronous>, transform_indices = @transform_3, window_bounds = array<i64: 4, 32>}, {pipeline_mode = #tpu.pipeline_mode<synchronous>, transform_indices = @transform_4, window_bounds = array<i64: 1, 16, 32>}, {pipeline_mode = #tpu.pipeline_mode<synchronous>, transform_indices = @transform_5, window_bounds = array<i64: 2, 16, 16>}, {transform_indices = @transform_6, window_bounds = array<i64: 1, 16, 32>}]} {
    %c0 = arith.constant 0 : index
    %c0_0 = arith.constant 0 : index
    %c0_1 = arith.constant 0 : index
    %0 = vector.load %arg1[%c0, %c0_0, %c0_1] : memref<1x16x4xf32, #tpu.memory_space<vmem>>, vector<1x16x4xf32>
    %1 = vector.shape_cast %0 : vector<1x16x4xf32> to vector<16x4xf32>
    %c0_2 = arith.constant 0 : index
    %c0_3 = arith.constant 0 : index
    %c0_4 = arith.constant 0 : index
    %2 = vector.load %arg6[%c0_2, %c0_3, %c0_4] : memref<2x16x16xf32, #tpu.memory_space<vmem>>, vector<1x16x16xf32>
    %3 = vector.shape_cast %2 : vector<1x16x16xf32> to vector<16x16xf32>
    %cst = arith.constant dense<0.000000e+00> : vector<16x4xf32>
    %4 = tpu.matmul %3, %1, %cst {dimension_numbers = #tpu.dot_dimension_numbers<[1], [0], [0], [1], [0, 0, 1, 1], [], []>} : vector<16x16xf32>, vector<16x4xf32>, vector<16x4xf32> -> vector<16x4xf32>
    %c1 = arith.constant 1 : index
    %c0_5 = arith.constant 0 : index
    %c0_6 = arith.constant 0 : index
    %5 = vector.load %arg6[%c1, %c0_5, %c0_6] : memref<2x16x16xf32, #tpu.memory_space<vmem>>, vector<1x16x16xf32>
    %6 = vector.shape_cast %5 : vector<1x16x16xf32> to vector<16x16xf32>
    %cst_7 = arith.constant dense<0.000000e+00> : vector<16x4xf32>
    %7 = tpu.matmul %6, %1, %cst_7 {dimension_numbers = #tpu.dot_dimension_numbers<[1], [0], [0], [1], [0, 0, 1, 1], [], []>} : vector<16x16xf32>, vector<16x4xf32>, vector<16x4xf32> -> vector<16x4xf32>
    %c0_8 = arith.constant 0 : index
    %c0_9 = arith.constant 0 : index
    %c0_10 = arith.constant 0 : index
    %8 = vector.load %arg3[%c0_8, %c0_9, %c0_10] : memref<3x4x32xf32, #tpu.memory_space<vmem>>, vector<1x4x32xf32>
    %9 = vector.shape_cast %8 : vector<1x4x32xf32> to vector<4x32xf32>
    %cst_11 = arith.constant dense<0.000000e+00> : vector<16x32xf32>
    %10 = tpu.matmul %4, %9, %cst_11 {dimension_numbers = #tpu.dot_dimension_numbers<[1], [0], [0], [1], [0, 0, 1, 1], [], []>} : vector<16x4xf32>, vector<4x32xf32>, vector<16x32xf32> -> vector<16x32xf32>
    %c1_12 = arith.constant 1 : index
    %c0_13 = arith.constant 0 : index
    %c0_14 = arith.constant 0 : index
    %11 = vector.load %arg3[%c1_12, %c0_13, %c0_14] : memref<3x4x32xf32, #tpu.memory_space<vmem>>, vector<1x4x32xf32>
    %12 = vector.shape_cast %11 : vector<1x4x32xf32> to vector<4x32xf32>
    %cst_15 = arith.constant dense<0.000000e+00> : vector<16x32xf32>
    %13 = tpu.matmul %1, %12, %cst_15 {dimension_numbers = #tpu.dot_dimension_numbers<[1], [0], [0], [1], [0, 0, 1, 1], [], []>} : vector<16x4xf32>, vector<4x32xf32>, vector<16x32xf32> -> vector<16x32xf32>
    %14 = arith.addf %10, %13 : vector<16x32xf32>
    %c2 = arith.constant 2 : index
    %c0_16 = arith.constant 0 : index
    %c0_17 = arith.constant 0 : index
    %15 = vector.load %arg3[%c2, %c0_16, %c0_17] : memref<3x4x32xf32, #tpu.memory_space<vmem>>, vector<1x4x32xf32>
    %16 = vector.shape_cast %15 : vector<1x4x32xf32> to vector<4x32xf32>
    %cst_18 = arith.constant dense<0.000000e+00> : vector<16x32xf32>
    %17 = tpu.matmul %7, %16, %cst_18 {dimension_numbers = #tpu.dot_dimension_numbers<[1], [0], [0], [1], [0, 0, 1, 1], [], []>} : vector<16x4xf32>, vector<4x32xf32>, vector<16x32xf32> -> vector<16x32xf32>
    %18 = arith.addf %14, %17 : vector<16x32xf32>
    %c0_19 = arith.constant 0 : index
    %c0_20 = arith.constant 0 : index
    %c0_21 = arith.constant 0 : index
    %19 = vector.load %arg2[%c0_19, %c0_20, %c0_21] : memref<1x16x4xf32, #tpu.memory_space<vmem>>, vector<1x16x4xf32>
    %20 = vector.shape_cast %19 : vector<1x16x4xf32> to vector<16x4xf32>
    %c0_22 = arith.constant 0 : index
    %c0_23 = arith.constant 0 : index
    %21 = vector.load %arg4[%c0_22, %c0_23] : memref<4x32xf32, #tpu.memory_space<vmem>>, vector<4x32xf32>
    %cst_24 = arith.constant dense<0.000000e+00> : vector<16x32xf32>
    %22 = tpu.matmul %20, %21, %cst_24 {dimension_numbers = #tpu.dot_dimension_numbers<[1], [0], [0], [1], [0, 0, 1, 1], [], []>} : vector<16x4xf32>, vector<4x32xf32>, vector<16x32xf32> -> vector<16x32xf32>
    %23 = arith.addf %18, %22 : vector<16x32xf32>
    %c0_25 = arith.constant 0 : index
    %c0_26 = arith.constant 0 : index
    %c0_27 = arith.constant 0 : index
    %24 = vector.load %arg5[%c0_25, %c0_26, %c0_27] : memref<1x16x32xf32, #tpu.memory_space<vmem>>, vector<1x16x32xf32>
    %25 = vector.shape_cast %24 : vector<1x16x32xf32> to vector<16x32xf32>
    %26 = arith.addf %23, %25 : vector<16x32xf32>
    %27 = vector.shape_cast %26 : vector<16x32xf32> to vector<1x16x32xf32>
    %c0_28 = arith.constant 0 : index
    %c0_29 = arith.constant 0 : index
    %c0_30 = arith.constant 0 : index
    %28 = vector.load %arg7[%c0_28, %c0_29, %c0_30] : memref<1x16x32xf32, #tpu.memory_space<vmem>>, vector<1x16x32xf32>
    tpu.vector_store %arg7[%c0_28, %c0_29, %c0_30], %27 {strides = array<i32>} : memref<1x16x32xf32, #tpu.memory_space<vmem>>, vector<1x16x32xf32>,
    return
  }
  func.func @transform_0(%arg0: i32) -> (i32, i32, i32) {
    %c0_i32 = arith.constant 0 : i32
    %c0_i32_0 = arith.constant 0 : i32
    %c0_i32_1 = arith.constant 0 : i32
    return %arg0, %c0_i32, %c0_i32_0 : i32, i32, i32
  }
  func.func @transform_1(%arg0: i32) -> (i32, i32, i32) {
    %c0_i32 = arith.constant 0 : i32
    %c0_i32_0 = arith.constant 0 : i32
    %c0_i32_1 = arith.constant 0 : i32
    return %arg0, %c0_i32, %c0_i32_0 : i32, i32, i32
  }
  func.func @transform_2(%arg0: i32) -> (i32, i32, i32) {
    %c0_i32 = arith.constant 0 : i32
    %c0_i32_0 = arith.constant 0 : i32
    %c0_i32_1 = arith.constant 0 : i32
    %c0_i32_2 = arith.constant 0 : i32
    return %c0_i32, %c0_i32_0, %c0_i32_1 : i32, i32, i32
  }
  func.func @transform_3(%arg0: i32) -> (i32, i32) {
    %c0_i32 = arith.constant 0 : i32
    %c0_i32_0 = arith.constant 0 : i32
    %c0_i32_1 = arith.constant 0 : i32
    return %c0_i32, %c0_i32_0 : i32, i32
  }
  func.func @transform_4(%arg0: i32) -> (i32, i32, i32) {
    %c0_i32 = arith.constant 0 : i32
    %c0_i32_0 = arith.constant 0 : i32
    %c0_i32_1 = arith.constant 0 : i32
    %c0_i32_2 = arith.constant 0 : i32
    return %c0_i32, %c0_i32_0, %c0_i32_1 : i32, i32, i32
  }
  func.func @transform_5(%arg0: i32) -> (i32, i32, i32) {
    %c0_i32 = arith.constant 0 : i32
    %c0_i32_0 = arith.constant 0 : i32
    %c0_i32_1 = arith.constant 0 : i32
    %c0_i32_2 = arith.constant 0 : i32
    return %c0_i32, %c0_i32_0, %c0_i32_1 : i32, i32, i32
  }
  func.func @transform_6(%arg0: i32) -> (i32, i32, i32) {
    %c0_i32 = arith.constant 0 : i32
    %c0_i32_0 = arith.constant 0 : i32
    %c0_i32_1 = arith.constant 0 : i32
    return %arg0, %c0_i32, %c0_i32_0 : i32, i32, i32
  }
}

module attributes {stable_mosaic.version = 11 : i64} {
  func.func @_proj_res_decomp_kernel(%arg0: i32, %arg1: memref<1x16x32xf32, #tpu.memory_space<vmem>>, %arg2: memref<1x16x32xf32, #tpu.memory_space<vmem>>, %arg3: memref<32x32xbf16, #tpu.memory_space<vmem>>, %arg4: memref<1x32xf32, #tpu.memory_space<vmem>>, %arg5: memref<16x16xf32, #tpu.memory_space<vmem>>, %arg6: memref<1x16x32xf32, #tpu.memory_space<vmem>>) attributes {dimension_semantics = [#tpu.dimension_semantics<parallel>], iteration_bounds = array<i64: 2>, scalar_prefetch = 0 : i64, scratch_operands = 0 : i64, tpu.core_type = #tpu.core_type<tc>, window_params = [{transform_indices = @transform_0, window_bounds = array<i64: 1, 16, 32>}, {transform_indices = @transform_1, window_bounds = array<i64: 1, 16, 32>}, {pipeline_mode = #tpu.pipeline_mode<synchronous>, transform_indices = @transform_2, window_bounds = array<i64: 32, 32>}, {pipeline_mode = #tpu.pipeline_mode<synchronous>, transform_indices = @transform_3, window_bounds = array<i64: 1, 32>}, {pipeline_mode = #tpu.pipeline_mode<synchronous>, transform_indices = @transform_4, window_bounds = array<i64: 16, 16>}, {transform_indices = @transform_5, window_bounds = array<i64: 1, 16, 32>}]} {
    %c0 = arith.constant 0 : index
    %c0_0 = arith.constant 0 : index
    %c0_1 = arith.constant 0 : index
    %0 = vector.load %arg1[%c0, %c0_0, %c0_1] : memref<1x16x32xf32, #tpu.memory_space<vmem>>, vector<1x16x32xf32>
    %1 = vector.shape_cast %0 : vector<1x16x32xf32> to vector<16x32xf32>
    %2 = arith.truncf %1 : vector<16x32xf32> to vector<16x32xbf16>
    %c0_2 = arith.constant 0 : index
    %c0_3 = arith.constant 0 : index
    %3 = vector.load %arg3[%c0_2, %c0_3] : memref<32x32xbf16, #tpu.memory_space<vmem>>, vector<32x32xbf16>
    %cst = arith.constant dense<0.000000e+00> : vector<16x32xf32>
    %4 = tpu.matmul %2, %3, %cst {dimension_numbers = #tpu.dot_dimension_numbers<[1], [0], [0], [1], [0, 0, 1, 1], [], []>} : vector<16x32xbf16>, vector<32x32xbf16>, vector<16x32xf32> -> vector<16x32xf32>
    %c0_4 = arith.constant 0 : index
    %c0_5 = arith.constant 0 : index
    %5 = vector.load %arg4[%c0_4, %c0_5] : memref<1x32xf32, #tpu.memory_space<vmem>>, vector<1x32xf32>
    %6 = vector.broadcast %5 : vector<1x32xf32> to vector<16x32xf32>
    %7 = arith.addf %4, %6 : vector<16x32xf32>
    %c0_6 = arith.constant 0 : index
    %c0_7 = arith.constant 0 : index
    %c0_8 = arith.constant 0 : index
    %8 = vector.load %arg2[%c0_6, %c0_7, %c0_8] : memref<1x16x32xf32, #tpu.memory_space<vmem>>, vector<1x16x32xf32>
    %9 = vector.shape_cast %8 : vector<1x16x32xf32> to vector<16x32xf32>
    %10 = arith.addf %9, %7 : vector<16x32xf32>
    %c0_9 = arith.constant 0 : index
    %c0_10 = arith.constant 0 : index
    %11 = vector.load %arg5[%c0_9, %c0_10] : memref<16x16xf32, #tpu.memory_space<vmem>>, vector<16x16xf32>
    %cst_11 = arith.constant dense<0.000000e+00> : vector<16x32xf32>
    %12 = tpu.matmul %11, %10, %cst_11 {dimension_numbers = #tpu.dot_dimension_numbers<[1], [0], [0], [1], [0, 0, 1, 1], [], []>} : vector<16x16xf32>, vector<16x32xf32>, vector<16x32xf32> -> vector<16x32xf32>
    %13 = arith.subf %10, %12 : vector<16x32xf32>
    %14 = vector.shape_cast %13 : vector<16x32xf32> to vector<1x16x32xf32>
    %c0_12 = arith.constant 0 : index
    %c0_13 = arith.constant 0 : index
    %c0_14 = arith.constant 0 : index
    %15 = vector.load %arg6[%c0_12, %c0_13, %c0_14] : memref<1x16x32xf32, #tpu.memory_space<vmem>>, vector<1x16x32xf32>
    tpu.vector_store %arg6[%c0_12, %c0_13, %c0_14], %14 {strides = array<i32>} : memref<1x16x32xf32, #tpu.memory_space<vmem>>, vector<1x16x32xf32>,
    return
  }
  func.func @transform_0(%arg0: i32) -> (i32, i32, i32) {
    %c0_i32 = arith.constant 0 : i32
    %c0_i32_0 = arith.constant 0 : i32
    %c0_i32_1 = arith.constant 0 : i32
    return %arg0, %c0_i32, %c0_i32_0 : i32, i32, i32
  }
  func.func @transform_1(%arg0: i32) -> (i32, i32, i32) {
    %c0_i32 = arith.constant 0 : i32
    %c0_i32_0 = arith.constant 0 : i32
    %c0_i32_1 = arith.constant 0 : i32
    return %arg0, %c0_i32, %c0_i32_0 : i32, i32, i32
  }
  func.func @transform_2(%arg0: i32) -> (i32, i32) {
    %c0_i32 = arith.constant 0 : i32
    %c0_i32_0 = arith.constant 0 : i32
    %c0_i32_1 = arith.constant 0 : i32
    return %c0_i32, %c0_i32_0 : i32, i32
  }
  func.func @transform_3(%arg0: i32) -> (i32, i32) {
    %c0_i32 = arith.constant 0 : i32
    %c0_i32_0 = arith.constant 0 : i32
    %c0_i32_1 = arith.constant 0 : i32
    return %c0_i32, %c0_i32_0 : i32, i32
  }
  func.func @transform_4(%arg0: i32) -> (i32, i32) {
    %c0_i32 = arith.constant 0 : i32
    %c0_i32_0 = arith.constant 0 : i32
    %c0_i32_1 = arith.constant 0 : i32
    return %c0_i32, %c0_i32_0 : i32, i32
  }
  func.func @transform_5(%arg0: i32) -> (i32, i32, i32) {
    %c0_i32 = arith.constant 0 : i32
    %c0_i32_0 = arith.constant 0 : i32
    %c0_i32_1 = arith.constant 0 : i32
    return %arg0, %c0_i32, %c0_i32_0 : i32, i32, i32
  }
}

module attributes {stable_mosaic.version = 11 : i64} {
  func.func @_proj_res_decomp_kernel(%arg0: i32, %arg1: memref<1x16x32xf32, #tpu.memory_space<vmem>>, %arg2: memref<1x16x32xf32, #tpu.memory_space<vmem>>, %arg3: memref<32x32xbf16, #tpu.memory_space<vmem>>, %arg4: memref<1x32xf32, #tpu.memory_space<vmem>>, %arg5: memref<16x16xf32, #tpu.memory_space<vmem>>, %arg6: memref<1x16x32xf32, #tpu.memory_space<vmem>>, %arg7: memref<1x16x32xf32, #tpu.memory_space<vmem>>) attributes {dimension_semantics = [#tpu.dimension_semantics<parallel>], iteration_bounds = array<i64: 2>, scalar_prefetch = 0 : i64, scratch_operands = 0 : i64, tpu.core_type = #tpu.core_type<tc>, window_params = [{transform_indices = @transform_0, window_bounds = array<i64: 1, 16, 32>}, {transform_indices = @transform_1, window_bounds = array<i64: 1, 16, 32>}, {pipeline_mode = #tpu.pipeline_mode<synchronous>, transform_indices = @transform_2, window_bounds = array<i64: 32, 32>}, {pipeline_mode = #tpu.pipeline_mode<synchronous>, transform_indices = @transform_3, window_bounds = array<i64: 1, 32>}, {pipeline_mode = #tpu.pipeline_mode<synchronous>, transform_indices = @transform_4, window_bounds = array<i64: 16, 16>}, {transform_indices = @transform_5, window_bounds = array<i64: 1, 16, 32>}, {transform_indices = @transform_6, window_bounds = array<i64: 1, 16, 32>}]} {
    %c0 = arith.constant 0 : index
    %c0_0 = arith.constant 0 : index
    %c0_1 = arith.constant 0 : index
    %0 = vector.load %arg1[%c0, %c0_0, %c0_1] : memref<1x16x32xf32, #tpu.memory_space<vmem>>, vector<1x16x32xf32>
    %1 = vector.shape_cast %0 : vector<1x16x32xf32> to vector<16x32xf32>
    %2 = arith.truncf %1 : vector<16x32xf32> to vector<16x32xbf16>
    %c0_2 = arith.constant 0 : index
    %c0_3 = arith.constant 0 : index
    %3 = vector.load %arg3[%c0_2, %c0_3] : memref<32x32xbf16, #tpu.memory_space<vmem>>, vector<32x32xbf16>
    %cst = arith.constant dense<0.000000e+00> : vector<16x32xf32>
    %4 = tpu.matmul %2, %3, %cst {dimension_numbers = #tpu.dot_dimension_numbers<[1], [0], [0], [1], [0, 0, 1, 1], [], []>} : vector<16x32xbf16>, vector<32x32xbf16>, vector<16x32xf32> -> vector<16x32xf32>
    %c0_4 = arith.constant 0 : index
    %c0_5 = arith.constant 0 : index
    %5 = vector.load %arg4[%c0_4, %c0_5] : memref<1x32xf32, #tpu.memory_space<vmem>>, vector<1x32xf32>
    %6 = vector.broadcast %5 : vector<1x32xf32> to vector<16x32xf32>
    %7 = arith.addf %4, %6 : vector<16x32xf32>
    %c0_6 = arith.constant 0 : index
    %c0_7 = arith.constant 0 : index
    %c0_8 = arith.constant 0 : index
    %8 = vector.load %arg2[%c0_6, %c0_7, %c0_8] : memref<1x16x32xf32, #tpu.memory_space<vmem>>, vector<1x16x32xf32>
    %9 = vector.shape_cast %8 : vector<1x16x32xf32> to vector<16x32xf32>
    %10 = arith.addf %9, %7 : vector<16x32xf32>
    %c0_9 = arith.constant 0 : index
    %c0_10 = arith.constant 0 : index
    %11 = vector.load %arg5[%c0_9, %c0_10] : memref<16x16xf32, #tpu.memory_space<vmem>>, vector<16x16xf32>
    %cst_11 = arith.constant dense<0.000000e+00> : vector<16x32xf32>
    %12 = tpu.matmul %11, %10, %cst_11 {dimension_numbers = #tpu.dot_dimension_numbers<[1], [0], [0], [1], [0, 0, 1, 1], [], []>} : vector<16x16xf32>, vector<16x32xf32>, vector<16x32xf32> -> vector<16x32xf32>
    %13 = arith.subf %10, %12 : vector<16x32xf32>
    %14 = vector.shape_cast %13 : vector<16x32xf32> to vector<1x16x32xf32>
    %c0_12 = arith.constant 0 : index
    %c0_13 = arith.constant 0 : index
    %c0_14 = arith.constant 0 : index
    %15 = vector.load %arg6[%c0_12, %c0_13, %c0_14] : memref<1x16x32xf32, #tpu.memory_space<vmem>>, vector<1x16x32xf32>
    tpu.vector_store %arg6[%c0_12, %c0_13, %c0_14], %14 {strides = array<i32>} : memref<1x16x32xf32, #tpu.memory_space<vmem>>, vector<1x16x32xf32>,
    %16 = vector.shape_cast %12 : vector<16x32xf32> to vector<1x16x32xf32>
    %c0_15 = arith.constant 0 : index
    %c0_16 = arith.constant 0 : index
    %c0_17 = arith.constant 0 : index
    %17 = vector.load %arg7[%c0_15, %c0_16, %c0_17] : memref<1x16x32xf32, #tpu.memory_space<vmem>>, vector<1x16x32xf32>
    tpu.vector_store %arg7[%c0_15, %c0_16, %c0_17], %16 {strides = array<i32>} : memref<1x16x32xf32, #tpu.memory_space<vmem>>, vector<1x16x32xf32>,
    return
  }
  func.func @transform_0(%arg0: i32) -> (i32, i32, i32) {
    %c0_i32 = arith.constant 0 : i32
    %c0_i32_0 = arith.constant 0 : i32
    %c0_i32_1 = arith.constant 0 : i32
    return %arg0, %c0_i32, %c0_i32_0 : i32, i32, i32
  }
  func.func @transform_1(%arg0: i32) -> (i32, i32, i32) {
    %c0_i32 = arith.constant 0 : i32
    %c0_i32_0 = arith.constant 0 : i32
    %c0_i32_1 = arith.constant 0 : i32
    return %arg0, %c0_i32, %c0_i32_0 : i32, i32, i32
  }
  func.func @transform_2(%arg0: i32) -> (i32, i32) {
    %c0_i32 = arith.constant 0 : i32
    %c0_i32_0 = arith.constant 0 : i32
    %c0_i32_1 = arith.constant 0 : i32
    return %c0_i32, %c0_i32_0 : i32, i32
  }
  func.func @transform_3(%arg0: i32) -> (i32, i32) {
    %c0_i32 = arith.constant 0 : i32
    %c0_i32_0 = arith.constant 0 : i32
    %c0_i32_1 = arith.constant 0 : i32
    return %c0_i32, %c0_i32_0 : i32, i32
  }
  func.func @transform_4(%arg0: i32) -> (i32, i32) {
    %c0_i32 = arith.constant 0 : i32
    %c0_i32_0 = arith.constant 0 : i32
    %c0_i32_1 = arith.constant 0 : i32
    return %c0_i32, %c0_i32_0 : i32, i32
  }
  func.func @transform_5(%arg0: i32) -> (i32, i32, i32) {
    %c0_i32 = arith.constant 0 : i32
    %c0_i32_0 = arith.constant 0 : i32
    %c0_i32_1 = arith.constant 0 : i32
    return %arg0, %c0_i32, %c0_i32_0 : i32, i32, i32
  }
  func.func @transform_6(%arg0: i32) -> (i32, i32, i32) {
    %c0_i32 = arith.constant 0 : i32
    %c0_i32_0 = arith.constant 0 : i32
    %c0_i32_1 = arith.constant 0 : i32
    return %arg0, %c0_i32, %c0_i32_0 : i32, i32, i32
  }
}

module attributes {stable_mosaic.version = 11 : i64} {
  func.func @_ffn_res_decomp_kernel(%arg0: i32, %arg1: memref<1x16x32xf32, #tpu.memory_space<vmem>>, %arg2: memref<32x64xbf16, #tpu.memory_space<vmem>>, %arg3: memref<64x32xbf16, #tpu.memory_space<vmem>>, %arg4: memref<16x16xf32, #tpu.memory_space<vmem>>, %arg5: memref<1x16x32xf32, #tpu.memory_space<vmem>>) attributes {dimension_semantics = [#tpu.dimension_semantics<parallel>], iteration_bounds = array<i64: 2>, scalar_prefetch = 0 : i64, scratch_operands = 0 : i64, tpu.core_type = #tpu.core_type<tc>, window_params = [{transform_indices = @transform_0, window_bounds = array<i64: 1, 16, 32>}, {pipeline_mode = #tpu.pipeline_mode<synchronous>, transform_indices = @transform_1, window_bounds = array<i64: 32, 64>}, {pipeline_mode = #tpu.pipeline_mode<synchronous>, transform_indices = @transform_2, window_bounds = array<i64: 64, 32>}, {pipeline_mode = #tpu.pipeline_mode<synchronous>, transform_indices = @transform_3, window_bounds = array<i64: 16, 16>}, {transform_indices = @transform_4, window_bounds = array<i64: 1, 16, 32>}]} {
    %c0 = arith.constant 0 : index
    %c0_0 = arith.constant 0 : index
    %c0_1 = arith.constant 0 : index
    %0 = vector.load %arg1[%c0, %c0_0, %c0_1] : memref<1x16x32xf32, #tpu.memory_space<vmem>>, vector<1x16x32xf32>
    %1 = vector.shape_cast %0 : vector<1x16x32xf32> to vector<16x32xf32>
    %2 = arith.truncf %1 : vector<16x32xf32> to vector<16x32xbf16>
    %c0_2 = arith.constant 0 : index
    %c0_3 = arith.constant 0 : index
    %3 = vector.load %arg2[%c0_2, %c0_3] : memref<32x64xbf16, #tpu.memory_space<vmem>>, vector<32x64xbf16>
    %cst = arith.constant dense<0.000000e+00> : vector<16x64xf32>
    %4 = tpu.matmul %2, %3, %cst {dimension_numbers = #tpu.dot_dimension_numbers<[1], [0], [0], [1], [0, 0, 1, 1], [], []>} : vector<16x32xbf16>, vector<32x64xbf16>, vector<16x64xf32> -> vector<16x64xf32>
    %cst_4 = arith.constant 0.000000e+00 : f32
    %5 = vector.broadcast %cst_4 : f32 to vector<16x64xf32>
    %6 = arith.maximumf %4, %5 : vector<16x64xf32>
    %7 = arith.truncf %6 : vector<16x64xf32> to vector<16x64xbf16>
    %c0_5 = arith.constant 0 : index
    %c0_6 = arith.constant 0 : index
    %8 = vector.load %arg3[%c0_5, %c0_6] : memref<64x32xbf16, #tpu.memory_space<vmem>>, vector<64x32xbf16>
    %cst_7 = arith.constant dense<0.000000e+00> : vector<16x32xf32>
    %9 = tpu.matmul %7, %8, %cst_7 {dimension_numbers = #tpu.dot_dimension_numbers<[1], [0], [0], [1], [0, 0, 1, 1], [], []>} : vector<16x64xbf16>, vector<64x32xbf16>, vector<16x32xf32> -> vector<16x32xf32>
    %10 = arith.addf %1, %9 : vector<16x32xf32>
    %c0_8 = arith.constant 0 : index
    %c0_9 = arith.constant 0 : index
    %11 = vector.load %arg4[%c0_8, %c0_9] : memref<16x16xf32, #tpu.memory_space<vmem>>, vector<16x16xf32>
    %cst_10 = arith.constant dense<0.000000e+00> : vector<16x32xf32>
    %12 = tpu.matmul %11, %10, %cst_10 {dimension_numbers = #tpu.dot_dimension_numbers<[1], [0], [0], [1], [0, 0, 1, 1], [], []>} : vector<16x16xf32>, vector<16x32xf32>, vector<16x32xf32> -> vector<16x32xf32>
    %13 = arith.subf %10, %12 : vector<16x32xf32>
    %14 = vector.shape_cast %13 : vector<16x32xf32> to vector<1x16x32xf32>
    %c0_11 = arith.constant 0 : index
    %c0_12 = arith.constant 0 : index
    %c0_13 = arith.constant 0 : index
    %15 = vector.load %arg5[%c0_11, %c0_12, %c0_13] : memref<1x16x32xf32, #tpu.memory_space<vmem>>, vector<1x16x32xf32>
    tpu.vector_store %arg5[%c0_11, %c0_12, %c0_13], %14 {strides = array<i32>} : memref<1x16x32xf32, #tpu.memory_space<vmem>>, vector<1x16x32xf32>,
    return
  }
  func.func @transform_0(%arg0: i32) -> (i32, i32, i32) {
    %c0_i32 = arith.constant 0 : i32
    %c0_i32_0 = arith.constant 0 : i32
    %c0_i32_1 = arith.constant 0 : i32
    return %arg0, %c0_i32, %c0_i32_0 : i32, i32, i32
  }
  func.func @transform_1(%arg0: i32) -> (i32, i32) {
    %c0_i32 = arith.constant 0 : i32
    %c0_i32_0 = arith.constant 0 : i32
    %c0_i32_1 = arith.constant 0 : i32
    return %c0_i32, %c0_i32_0 : i32, i32
  }
  func.func @transform_2(%arg0: i32) -> (i32, i32) {
    %c0_i32 = arith.constant 0 : i32
    %c0_i32_0 = arith.constant 0 : i32
    %c0_i32_1 = arith.constant 0 : i32
    return %c0_i32, %c0_i32_0 : i32, i32
  }
  func.func @transform_3(%arg0: i32) -> (i32, i32) {
    %c0_i32 = arith.constant 0 : i32
    %c0_i32_0 = arith.constant 0 : i32
    %c0_i32_1 = arith.constant 0 : i32
    return %c0_i32, %c0_i32_0 : i32, i32
  }
  func.func @transform_4(%arg0: i32) -> (i32, i32, i32) {
    %c0_i32 = arith.constant 0 : i32
    %c0_i32_0 = arith.constant 0 : i32
    %c0_i32_1 = arith.constant 0 : i32
    return %arg0, %c0_i32, %c0_i32_0 : i32, i32, i32
  }
}

module attributes {stable_mosaic.version = 11 : i64} {
  func.func @_layernorm_kernel(%arg0: i32, %arg1: memref<1x16x32xf32, #tpu.memory_space<vmem>>, %arg2: memref<1x32xf32, #tpu.memory_space<vmem>>, %arg3: memref<1x32xf32, #tpu.memory_space<vmem>>, %arg4: memref<1x16x32xf32, #tpu.memory_space<vmem>>) attributes {dimension_semantics = [#tpu.dimension_semantics<parallel>], iteration_bounds = array<i64: 2>, scalar_prefetch = 0 : i64, scratch_operands = 0 : i64, tpu.core_type = #tpu.core_type<tc>, window_params = [{transform_indices = @transform_0, window_bounds = array<i64: 1, 16, 32>}, {pipeline_mode = #tpu.pipeline_mode<synchronous>, transform_indices = @transform_1, window_bounds = array<i64: 1, 32>}, {pipeline_mode = #tpu.pipeline_mode<synchronous>, transform_indices = @transform_2, window_bounds = array<i64: 1, 32>}, {transform_indices = @transform_3, window_bounds = array<i64: 1, 16, 32>}]} {
    %c0 = arith.constant 0 : index
    %c0_0 = arith.constant 0 : index
    %c0_1 = arith.constant 0 : index
    %0 = vector.load %arg1[%c0, %c0_0, %c0_1] : memref<1x16x32xf32, #tpu.memory_space<vmem>>, vector<1x16x32xf32>
    %1 = vector.shape_cast %0 : vector<1x16x32xf32> to vector<16x32xf32>
    %cst = arith.constant dense<0.000000e+00> : vector<16xf32>
    %2 = vector.multi_reduction <add>, %1, %cst [1] : vector<16x32xf32> to vector<16xf32>
    %3 = vector.shape_cast %2 : vector<16xf32> to vector<16x1xf32>
    %cst_2 = arith.constant 3.200000e+01 : f32
    %4 = vector.broadcast %cst_2 : f32 to vector<16x1xf32>
    %5 = arith.divf %3, %4 : vector<16x1xf32>
    %6 = vector.broadcast %5 : vector<16x1xf32> to vector<16x32xf32>
    %7 = arith.subf %1, %6 : vector<16x32xf32>
    %8 = arith.mulf %7, %7 : vector<16x32xf32>
    %cst_3 = arith.constant dense<0.000000e+00> : vector<16xf32>
    %9 = vector.multi_reduction <add>, %8, %cst_3 [1] : vector<16x32xf32> to vector<16xf32>
    %10 = vector.shape_cast %9 : vector<16xf32> to vector<16x1xf32>
    %cst_4 = arith.constant 3.200000e+01 : f32
    %11 = vector.broadcast %cst_4 : f32 to vector<16x1xf32>
    %12 = arith.divf %10, %11 : vector<16x1xf32>
    %13 = vector.broadcast %5 : vector<16x1xf32> to vector<16x32xf32>
    %14 = arith.subf %1, %13 : vector<16x32xf32>
    %cst_5 = arith.constant 9.99999974E-6 : f32
    %15 = vector.broadcast %cst_5 : f32 to vector<16x1xf32>
    %16 = arith.addf %12, %15 : vector<16x1xf32>
    %17 = math.rsqrt %16 : vector<16x1xf32>
    %18 = vector.broadcast %17 : vector<16x1xf32> to vector<16x32xf32>
    %19 = arith.mulf %14, %18 : vector<16x32xf32>
    %c0_6 = arith.constant 0 : index
    %c0_7 = arith.constant 0 : index
    %20 = vector.load %arg2[%c0_6, %c0_7] : memref<1x32xf32, #tpu.memory_space<vmem>>, vector<1x32xf32>
    %21 = vector.broadcast %20 : vector<1x32xf32> to vector<16x32xf32>
    %22 = arith.mulf %19, %21 : vector<16x32xf32>
    %c0_8 = arith.constant 0 : index
    %c0_9 = arith.constant 0 : index
    %23 = vector.load %arg3[%c0_8, %c0_9] : memref<1x32xf32, #tpu.memory_space<vmem>>, vector<1x32xf32>
    %24 = vector.broadcast %23 : vector<1x32xf32> to vector<16x32xf32>
    %25 = arith.addf %22, %24 : vector<16x32xf32>
    %cst_10 = arith.constant dense<0.000000e+00> : vector<32xf32>
    %26 = vector.multi_reduction <add>, %25, %cst_10 [0] : vector<16x32xf32> to vector<32xf32>
    %27 = vector.shape_cast %26 : vector<32xf32> to vector<1x32xf32>
    %cst_11 = arith.constant 1.600000e+01 : f32
    %28 = vector.broadcast %cst_11 : f32 to vector<1x32xf32>
    %29 = arith.divf %27, %28 : vector<1x32xf32>
    %30 = vector.broadcast %29 : vector<1x32xf32> to vector<16x32xf32>
    %31 = arith.subf %25, %30 : vector<16x32xf32>
    %32 = vector.shape_cast %31 : vector<16x32xf32> to vector<1x16x32xf32>
    %c0_12 = arith.constant 0 : index
    %c0_13 = arith.constant 0 : index
    %c0_14 = arith.constant 0 : index
    %33 = vector.load %arg4[%c0_12, %c0_13, %c0_14] : memref<1x16x32xf32, #tpu.memory_space<vmem>>, vector<1x16x32xf32>
    tpu.vector_store %arg4[%c0_12, %c0_13, %c0_14], %32 {strides = array<i32>} : memref<1x16x32xf32, #tpu.memory_space<vmem>>, vector<1x16x32xf32>,
    return
  }
  func.func @transform_0(%arg0: i32) -> (i32, i32, i32) {
    %c0_i32 = arith.constant 0 : i32
    %c0_i32_0 = arith.constant 0 : i32
    %c0_i32_1 = arith.constant 0 : i32
    return %arg0, %c0_i32, %c0_i32_0 : i32, i32, i32
  }
  func.func @transform_1(%arg0: i32) -> (i32, i32) {
    %c0_i32 = arith.constant 0 : i32
    %c0_i32_0 = arith.constant 0 : i32
    %c0_i32_1 = arith.constant 0 : i32
    return %c0_i32, %c0_i32_0 : i32, i32
  }
  func.func @transform_2(%arg0: i32) -> (i32, i32) {
    %c0_i32 = arith.constant 0 : i32
    %c0_i32_0 = arith.constant 0 : i32
    %c0_i32_1 = arith.constant 0 : i32
    return %c0_i32, %c0_i32_0 : i32, i32
  }
  func.func @transform_3(%arg0: i32) -> (i32, i32, i32) {
    %c0_i32 = arith.constant 0 : i32
    %c0_i32_0 = arith.constant 0 : i32
    %c0_i32_1 = arith.constant 0 : i32
    return %arg0, %c0_i32, %c0_i32_0 : i32, i32, i32
  }
}

module attributes {stable_mosaic.version = 11 : i64} {
  func.func @_ffn_res_decomp_kernel(%arg0: i32, %arg1: memref<1x16x32xf32, #tpu.memory_space<vmem>>, %arg2: memref<32x64xbf16, #tpu.memory_space<vmem>>, %arg3: memref<64x32xbf16, #tpu.memory_space<vmem>>, %arg4: memref<16x16xf32, #tpu.memory_space<vmem>>, %arg5: memref<1x16x32xf32, #tpu.memory_space<vmem>>, %arg6: memref<1x16x32xf32, #tpu.memory_space<vmem>>) attributes {dimension_semantics = [#tpu.dimension_semantics<parallel>], iteration_bounds = array<i64: 2>, scalar_prefetch = 0 : i64, scratch_operands = 0 : i64, tpu.core_type = #tpu.core_type<tc>, window_params = [{transform_indices = @transform_0, window_bounds = array<i64: 1, 16, 32>}, {pipeline_mode = #tpu.pipeline_mode<synchronous>, transform_indices = @transform_1, window_bounds = array<i64: 32, 64>}, {pipeline_mode = #tpu.pipeline_mode<synchronous>, transform_indices = @transform_2, window_bounds = array<i64: 64, 32>}, {pipeline_mode = #tpu.pipeline_mode<synchronous>, transform_indices = @transform_3, window_bounds = array<i64: 16, 16>}, {transform_indices = @transform_4, window_bounds = array<i64: 1, 16, 32>}, {transform_indices = @transform_5, window_bounds = array<i64: 1, 16, 32>}]} {
    %c0 = arith.constant 0 : index
    %c0_0 = arith.constant 0 : index
    %c0_1 = arith.constant 0 : index
    %0 = vector.load %arg1[%c0, %c0_0, %c0_1] : memref<1x16x32xf32, #tpu.memory_space<vmem>>, vector<1x16x32xf32>
    %1 = vector.shape_cast %0 : vector<1x16x32xf32> to vector<16x32xf32>
    %2 = arith.truncf %1 : vector<16x32xf32> to vector<16x32xbf16>
    %c0_2 = arith.constant 0 : index
    %c0_3 = arith.constant 0 : index
    %3 = vector.load %arg2[%c0_2, %c0_3] : memref<32x64xbf16, #tpu.memory_space<vmem>>, vector<32x64xbf16>
    %cst = arith.constant dense<0.000000e+00> : vector<16x64xf32>
    %4 = tpu.matmul %2, %3, %cst {dimension_numbers = #tpu.dot_dimension_numbers<[1], [0], [0], [1], [0, 0, 1, 1], [], []>} : vector<16x32xbf16>, vector<32x64xbf16>, vector<16x64xf32> -> vector<16x64xf32>
    %cst_4 = arith.constant 0.000000e+00 : f32
    %5 = vector.broadcast %cst_4 : f32 to vector<16x64xf32>
    %6 = arith.maximumf %4, %5 : vector<16x64xf32>
    %7 = arith.truncf %6 : vector<16x64xf32> to vector<16x64xbf16>
    %c0_5 = arith.constant 0 : index
    %c0_6 = arith.constant 0 : index
    %8 = vector.load %arg3[%c0_5, %c0_6] : memref<64x32xbf16, #tpu.memory_space<vmem>>, vector<64x32xbf16>
    %cst_7 = arith.constant dense<0.000000e+00> : vector<16x32xf32>
    %9 = tpu.matmul %7, %8, %cst_7 {dimension_numbers = #tpu.dot_dimension_numbers<[1], [0], [0], [1], [0, 0, 1, 1], [], []>} : vector<16x64xbf16>, vector<64x32xbf16>, vector<16x32xf32> -> vector<16x32xf32>
    %10 = arith.addf %1, %9 : vector<16x32xf32>
    %c0_8 = arith.constant 0 : index
    %c0_9 = arith.constant 0 : index
    %11 = vector.load %arg4[%c0_8, %c0_9] : memref<16x16xf32, #tpu.memory_space<vmem>>, vector<16x16xf32>
    %cst_10 = arith.constant dense<0.000000e+00> : vector<16x32xf32>
    %12 = tpu.matmul %11, %10, %cst_10 {dimension_numbers = #tpu.dot_dimension_numbers<[1], [0], [0], [1], [0, 0, 1, 1], [], []>} : vector<16x16xf32>, vector<16x32xf32>, vector<16x32xf32> -> vector<16x32xf32>
    %13 = arith.subf %10, %12 : vector<16x32xf32>
    %14 = vector.shape_cast %13 : vector<16x32xf32> to vector<1x16x32xf32>
    %c0_11 = arith.constant 0 : index
    %c0_12 = arith.constant 0 : index
    %c0_13 = arith.constant 0 : index
    %15 = vector.load %arg5[%c0_11, %c0_12, %c0_13] : memref<1x16x32xf32, #tpu.memory_space<vmem>>, vector<1x16x32xf32>
    tpu.vector_store %arg5[%c0_11, %c0_12, %c0_13], %14 {strides = array<i32>} : memref<1x16x32xf32, #tpu.memory_space<vmem>>, vector<1x16x32xf32>,
    %16 = vector.shape_cast %12 : vector<16x32xf32> to vector<1x16x32xf32>
    %c0_14 = arith.constant 0 : index
    %c0_15 = arith.constant 0 : index
    %c0_16 = arith.constant 0 : index
    %17 = vector.load %arg6[%c0_14, %c0_15, %c0_16] : memref<1x16x32xf32, #tpu.memory_space<vmem>>, vector<1x16x32xf32>
    tpu.vector_store %arg6[%c0_14, %c0_15, %c0_16], %16 {strides = array<i32>} : memref<1x16x32xf32, #tpu.memory_space<vmem>>, vector<1x16x32xf32>,
    return
  }
  func.func @transform_0(%arg0: i32) -> (i32, i32, i32) {
    %c0_i32 = arith.constant 0 : i32
    %c0_i32_0 = arith.constant 0 : i32
    %c0_i32_1 = arith.constant 0 : i32
    return %arg0, %c0_i32, %c0_i32_0 : i32, i32, i32
  }
  func.func @transform_1(%arg0: i32) -> (i32, i32) {
    %c0_i32 = arith.constant 0 : i32
    %c0_i32_0 = arith.constant 0 : i32
    %c0_i32_1 = arith.constant 0 : i32
    return %c0_i32, %c0_i32_0 : i32, i32
  }
  func.func @transform_2(%arg0: i32) -> (i32, i32) {
    %c0_i32 = arith.constant 0 : i32
    %c0_i32_0 = arith.constant 0 : i32
    %c0_i32_1 = arith.constant 0 : i32
    return %c0_i32, %c0_i32_0 : i32, i32
  }
  func.func @transform_3(%arg0: i32) -> (i32, i32) {
    %c0_i32 = arith.constant 0 : i32
    %c0_i32_0 = arith.constant 0 : i32
    %c0_i32_1 = arith.constant 0 : i32
    return %c0_i32, %c0_i32_0 : i32, i32
  }
  func.func @transform_4(%arg0: i32) -> (i32, i32, i32) {
    %c0_i32 = arith.constant 0 : i32
    %c0_i32_0 = arith.constant 0 : i32
    %c0_i32_1 = arith.constant 0 : i32
    return %arg0, %c0_i32, %c0_i32_0 : i32, i32, i32
  }
  func.func @transform_5(%arg0: i32) -> (i32, i32, i32) {
    %c0_i32 = arith.constant 0 : i32
    %c0_i32_0 = arith.constant 0 : i32
    %c0_i32_1 = arith.constant 0 : i32
    return %arg0, %c0_i32, %c0_i32_0 : i32, i32, i32
  }
}

module attributes {stable_mosaic.version = 11 : i64} {
  func.func @_trend_kernel(%arg0: i32, %arg1: memref<1x16x4xf32, #tpu.memory_space<vmem>>, %arg2: memref<1x16x32xf32, #tpu.memory_space<vmem>>, %arg3: memref<1x16x32xf32, #tpu.memory_space<vmem>>, %arg4: memref<1x16x32xf32, #tpu.memory_space<vmem>>, %arg5: memref<3x32x4xf32, #tpu.memory_space<vmem>>, %arg6: memref<2x16x16xf32, #tpu.memory_space<vmem>>, %arg7: memref<1x16x4xf32, #tpu.memory_space<vmem>>) attributes {dimension_semantics = [#tpu.dimension_semantics<parallel>], iteration_bounds = array<i64: 2>, scalar_prefetch = 0 : i64, scratch_operands = 0 : i64, tpu.core_type = #tpu.core_type<tc>, window_params = [{transform_indices = @transform_0, window_bounds = array<i64: 1, 16, 4>}, {transform_indices = @transform_1, window_bounds = array<i64: 1, 16, 32>}, {transform_indices = @transform_2, window_bounds = array<i64: 1, 16, 32>}, {transform_indices = @transform_3, window_bounds = array<i64: 1, 16, 32>}, {pipeline_mode = #tpu.pipeline_mode<synchronous>, transform_indices = @transform_4, window_bounds = array<i64: 3, 32, 4>}, {pipeline_mode = #tpu.pipeline_mode<synchronous>, transform_indices = @transform_5, window_bounds = array<i64: 2, 16, 16>}, {transform_indices = @transform_6, window_bounds = array<i64: 1, 16, 4>}]} {
    %c0 = arith.constant 0 : index
    %c0_0 = arith.constant 0 : index
    %c0_1 = arith.constant 0 : index
    %0 = vector.load %arg2[%c0, %c0_0, %c0_1] : memref<1x16x32xf32, #tpu.memory_space<vmem>>, vector<1x16x32xf32>
    %1 = vector.shape_cast %0 : vector<1x16x32xf32> to vector<16x32xf32>
    %c0_2 = arith.constant 0 : index
    %c0_3 = arith.constant 0 : index
    %c0_4 = arith.constant 0 : index
    %2 = vector.load %arg3[%c0_2, %c0_3, %c0_4] : memref<1x16x32xf32, #tpu.memory_space<vmem>>, vector<1x16x32xf32>
    %3 = vector.shape_cast %2 : vector<1x16x32xf32> to vector<16x32xf32>
    %4 = arith.addf %1, %3 : vector<16x32xf32>
    %c0_5 = arith.constant 0 : index
    %c0_6 = arith.constant 0 : index
    %c0_7 = arith.constant 0 : index
    %5 = vector.load %arg4[%c0_5, %c0_6, %c0_7] : memref<1x16x32xf32, #tpu.memory_space<vmem>>, vector<1x16x32xf32>
    %6 = vector.shape_cast %5 : vector<1x16x32xf32> to vector<16x32xf32>
    %7 = arith.addf %4, %6 : vector<16x32xf32>
    %c0_8 = arith.constant 0 : index
    %c0_9 = arith.constant 0 : index
    %c0_10 = arith.constant 0 : index
    %8 = vector.load %arg6[%c0_8, %c0_9, %c0_10] : memref<2x16x16xf32, #tpu.memory_space<vmem>>, vector<1x16x16xf32>
    %9 = vector.shape_cast %8 : vector<1x16x16xf32> to vector<16x16xf32>
    %cst = arith.constant dense<0.000000e+00> : vector<16x32xf32>
    %10 = tpu.matmul %9, %7, %cst {dimension_numbers = #tpu.dot_dimension_numbers<[1], [0], [0], [1], [0, 0, 1, 1], [], []>} : vector<16x16xf32>, vector<16x32xf32>, vector<16x32xf32> -> vector<16x32xf32>
    %c1 = arith.constant 1 : index
    %c0_11 = arith.constant 0 : index
    %c0_12 = arith.constant 0 : index
    %11 = vector.load %arg6[%c1, %c0_11, %c0_12] : memref<2x16x16xf32, #tpu.memory_space<vmem>>, vector<1x16x16xf32>
    %12 = vector.shape_cast %11 : vector<1x16x16xf32> to vector<16x16xf32>
    %cst_13 = arith.constant dense<0.000000e+00> : vector<16x32xf32>
    %13 = tpu.matmul %12, %7, %cst_13 {dimension_numbers = #tpu.dot_dimension_numbers<[1], [0], [0], [1], [0, 0, 1, 1], [], []>} : vector<16x16xf32>, vector<16x32xf32>, vector<16x32xf32> -> vector<16x32xf32>
    %c0_14 = arith.constant 0 : index
    %c0_15 = arith.constant 0 : index
    %c0_16 = arith.constant 0 : index
    %14 = vector.load %arg5[%c0_14, %c0_15, %c0_16] : memref<3x32x4xf32, #tpu.memory_space<vmem>>, vector<1x32x4xf32>
    %15 = vector.shape_cast %14 : vector<1x32x4xf32> to vector<32x4xf32>
    %cst_17 = arith.constant dense<0.000000e+00> : vector<16x4xf32>
    %16 = tpu.matmul %10, %15, %cst_17 {dimension_numbers = #tpu.dot_dimension_numbers<[1], [0], [0], [1], [0, 0, 1, 1], [], []>} : vector<16x32xf32>, vector<32x4xf32>, vector<16x4xf32> -> vector<16x4xf32>
    %c1_18 = arith.constant 1 : index
    %c0_19 = arith.constant 0 : index
    %c0_20 = arith.constant 0 : index
    %17 = vector.load %arg5[%c1_18, %c0_19, %c0_20] : memref<3x32x4xf32, #tpu.memory_space<vmem>>, vector<1x32x4xf32>
    %18 = vector.shape_cast %17 : vector<1x32x4xf32> to vector<32x4xf32>
    %cst_21 = arith.constant dense<0.000000e+00> : vector<16x4xf32>
    %19 = tpu.matmul %7, %18, %cst_21 {dimension_numbers = #tpu.dot_dimension_numbers<[1], [0], [0], [1], [0, 0, 1, 1], [], []>} : vector<16x32xf32>, vector<32x4xf32>, vector<16x4xf32> -> vector<16x4xf32>
    %20 = arith.addf %16, %19 : vector<16x4xf32>
    %c2 = arith.constant 2 : index
    %c0_22 = arith.constant 0 : index
    %c0_23 = arith.constant 0 : index
    %21 = vector.load %arg5[%c2, %c0_22, %c0_23] : memref<3x32x4xf32, #tpu.memory_space<vmem>>, vector<1x32x4xf32>
    %22 = vector.shape_cast %21 : vector<1x32x4xf32> to vector<32x4xf32>
    %cst_24 = arith.constant dense<0.000000e+00> : vector<16x4xf32>
    %23 = tpu.matmul %13, %22, %cst_24 {dimension_numbers = #tpu.dot_dimension_numbers<[1], [0], [0], [1], [0, 0, 1, 1], [], []>} : vector<16x32xf32>, vector<32x4xf32>, vector<16x4xf32> -> vector<16x4xf32>
    %24 = arith.addf %20, %23 : vector<16x4xf32>
    %c0_25 = arith.constant 0 : index
    %c0_26 = arith.constant 0 : index
    %c0_27 = arith.constant 0 : index
    %25 = vector.load %arg1[%c0_25, %c0_26, %c0_27] : memref<1x16x4xf32, #tpu.memory_space<vmem>>, vector<1x16x4xf32>
    %26 = vector.shape_cast %25 : vector<1x16x4xf32> to vector<16x4xf32>
    %27 = arith.addf %26, %24 : vector<16x4xf32>
    %28 = vector.shape_cast %27 : vector<16x4xf32> to vector<1x16x4xf32>
    %c0_28 = arith.constant 0 : index
    %c0_29 = arith.constant 0 : index
    %c0_30 = arith.constant 0 : index
    %29 = vector.load %arg7[%c0_28, %c0_29, %c0_30] : memref<1x16x4xf32, #tpu.memory_space<vmem>>, vector<1x16x4xf32>
    tpu.vector_store %arg7[%c0_28, %c0_29, %c0_30], %28 {strides = array<i32>} : memref<1x16x4xf32, #tpu.memory_space<vmem>>, vector<1x16x4xf32>,
    return
  }
  func.func @transform_0(%arg0: i32) -> (i32, i32, i32) {
    %c0_i32 = arith.constant 0 : i32
    %c0_i32_0 = arith.constant 0 : i32
    %c0_i32_1 = arith.constant 0 : i32
    return %arg0, %c0_i32, %c0_i32_0 : i32, i32, i32
  }
  func.func @transform_1(%arg0: i32) -> (i32, i32, i32) {
    %c0_i32 = arith.constant 0 : i32
    %c0_i32_0 = arith.constant 0 : i32
    %c0_i32_1 = arith.constant 0 : i32
    return %arg0, %c0_i32, %c0_i32_0 : i32, i32, i32
  }
  func.func @transform_2(%arg0: i32) -> (i32, i32, i32) {
    %c0_i32 = arith.constant 0 : i32
    %c0_i32_0 = arith.constant 0 : i32
    %c0_i32_1 = arith.constant 0 : i32
    return %arg0, %c0_i32, %c0_i32_0 : i32, i32, i32
  }
  func.func @transform_3(%arg0: i32) -> (i32, i32, i32) {
    %c0_i32 = arith.constant 0 : i32
    %c0_i32_0 = arith.constant 0 : i32
    %c0_i32_1 = arith.constant 0 : i32
    return %arg0, %c0_i32, %c0_i32_0 : i32, i32, i32
  }
  func.func @transform_4(%arg0: i32) -> (i32, i32, i32) {
    %c0_i32 = arith.constant 0 : i32
    %c0_i32_0 = arith.constant 0 : i32
    %c0_i32_1 = arith.constant 0 : i32
    %c0_i32_2 = arith.constant 0 : i32
    return %c0_i32, %c0_i32_0, %c0_i32_1 : i32, i32, i32
  }
  func.func @transform_5(%arg0: i32) -> (i32, i32, i32) {
    %c0_i32 = arith.constant 0 : i32
    %c0_i32_0 = arith.constant 0 : i32
    %c0_i32_1 = arith.constant 0 : i32
    %c0_i32_2 = arith.constant 0 : i32
    return %c0_i32, %c0_i32_0, %c0_i32_1 : i32, i32, i32
  }
  func.func @transform_6(%arg0: i32) -> (i32, i32, i32) {
    %c0_i32 = arith.constant 0 : i32
    %c0_i32_0 = arith.constant 0 : i32
    %c0_i32_1 = arith.constant 0 : i32
    return %arg0, %c0_i32, %c0_i32_0 : i32, i32, i32
  }
}

module attributes {stable_mosaic.version = 11 : i64} {
  func.func @_final_kernel(%arg0: i32, %arg1: memref<1x16x32xf32, #tpu.memory_space<vmem>>, %arg2: memref<1x32xf32, #tpu.memory_space<vmem>>, %arg3: memref<1x32xf32, #tpu.memory_space<vmem>>, %arg4: memref<32x4xf32, #tpu.memory_space<vmem>>, %arg5: memref<1x4xf32, #tpu.memory_space<vmem>>, %arg6: memref<1x16x4xf32, #tpu.memory_space<vmem>>, %arg7: memref<1x16x4xf32, #tpu.memory_space<vmem>>) attributes {dimension_semantics = [#tpu.dimension_semantics<parallel>], iteration_bounds = array<i64: 2>, scalar_prefetch = 0 : i64, scratch_operands = 0 : i64, tpu.core_type = #tpu.core_type<tc>, window_params = [{transform_indices = @transform_0, window_bounds = array<i64: 1, 16, 32>}, {pipeline_mode = #tpu.pipeline_mode<synchronous>, transform_indices = @transform_1, window_bounds = array<i64: 1, 32>}, {pipeline_mode = #tpu.pipeline_mode<synchronous>, transform_indices = @transform_2, window_bounds = array<i64: 1, 32>}, {pipeline_mode = #tpu.pipeline_mode<synchronous>, transform_indices = @transform_3, window_bounds = array<i64: 32, 4>}, {pipeline_mode = #tpu.pipeline_mode<synchronous>, transform_indices = @transform_4, window_bounds = array<i64: 1, 4>}, {transform_indices = @transform_5, window_bounds = array<i64: 1, 16, 4>}, {transform_indices = @transform_6, window_bounds = array<i64: 1, 16, 4>}]} {
    %c0 = arith.constant 0 : index
    %c0_0 = arith.constant 0 : index
    %c0_1 = arith.constant 0 : index
    %0 = vector.load %arg1[%c0, %c0_0, %c0_1] : memref<1x16x32xf32, #tpu.memory_space<vmem>>, vector<1x16x32xf32>
    %1 = vector.shape_cast %0 : vector<1x16x32xf32> to vector<16x32xf32>
    %cst = arith.constant dense<0.000000e+00> : vector<16xf32>
    %2 = vector.multi_reduction <add>, %1, %cst [1] : vector<16x32xf32> to vector<16xf32>
    %3 = vector.shape_cast %2 : vector<16xf32> to vector<16x1xf32>
    %cst_2 = arith.constant 3.200000e+01 : f32
    %4 = vector.broadcast %cst_2 : f32 to vector<16x1xf32>
    %5 = arith.divf %3, %4 : vector<16x1xf32>
    %6 = vector.broadcast %5 : vector<16x1xf32> to vector<16x32xf32>
    %7 = arith.subf %1, %6 : vector<16x32xf32>
    %8 = arith.mulf %7, %7 : vector<16x32xf32>
    %cst_3 = arith.constant dense<0.000000e+00> : vector<16xf32>
    %9 = vector.multi_reduction <add>, %8, %cst_3 [1] : vector<16x32xf32> to vector<16xf32>
    %10 = vector.shape_cast %9 : vector<16xf32> to vector<16x1xf32>
    %cst_4 = arith.constant 3.200000e+01 : f32
    %11 = vector.broadcast %cst_4 : f32 to vector<16x1xf32>
    %12 = arith.divf %10, %11 : vector<16x1xf32>
    %13 = vector.broadcast %5 : vector<16x1xf32> to vector<16x32xf32>
    %14 = arith.subf %1, %13 : vector<16x32xf32>
    %cst_5 = arith.constant 9.99999974E-6 : f32
    %15 = vector.broadcast %cst_5 : f32 to vector<16x1xf32>
    %16 = arith.addf %12, %15 : vector<16x1xf32>
    %17 = math.rsqrt %16 : vector<16x1xf32>
    %18 = vector.broadcast %17 : vector<16x1xf32> to vector<16x32xf32>
    %19 = arith.mulf %14, %18 : vector<16x32xf32>
    %c0_6 = arith.constant 0 : index
    %c0_7 = arith.constant 0 : index
    %20 = vector.load %arg2[%c0_6, %c0_7] : memref<1x32xf32, #tpu.memory_space<vmem>>, vector<1x32xf32>
    %21 = vector.broadcast %20 : vector<1x32xf32> to vector<16x32xf32>
    %22 = arith.mulf %19, %21 : vector<16x32xf32>
    %c0_8 = arith.constant 0 : index
    %c0_9 = arith.constant 0 : index
    %23 = vector.load %arg3[%c0_8, %c0_9] : memref<1x32xf32, #tpu.memory_space<vmem>>, vector<1x32xf32>
    %24 = vector.broadcast %23 : vector<1x32xf32> to vector<16x32xf32>
    %25 = arith.addf %22, %24 : vector<16x32xf32>
    %cst_10 = arith.constant dense<0.000000e+00> : vector<32xf32>
    %26 = vector.multi_reduction <add>, %25, %cst_10 [0] : vector<16x32xf32> to vector<32xf32>
    %27 = vector.shape_cast %26 : vector<32xf32> to vector<1x32xf32>
    %cst_11 = arith.constant 1.600000e+01 : f32
    %28 = vector.broadcast %cst_11 : f32 to vector<1x32xf32>
    %29 = arith.divf %27, %28 : vector<1x32xf32>
    %30 = vector.broadcast %29 : vector<1x32xf32> to vector<16x32xf32>
    %31 = arith.subf %25, %30 : vector<16x32xf32>
    %c0_12 = arith.constant 0 : index
    %c0_13 = arith.constant 0 : index
    %32 = vector.load %arg4[%c0_12, %c0_13] : memref<32x4xf32, #tpu.memory_space<vmem>>, vector<32x4xf32>
    %cst_14 = arith.constant dense<0.000000e+00> : vector<16x4xf32>
    %33 = tpu.matmul %31, %32, %cst_14 {dimension_numbers = #tpu.dot_dimension_numbers<[1], [0], [0], [1], [0, 0, 1, 1], [], []>} : vector<16x32xf32>, vector<32x4xf32>, vector<16x4xf32> -> vector<16x4xf32>
    %c0_15 = arith.constant 0 : index
    %c0_16 = arith.constant 0 : index
    %34 = vector.load %arg5[%c0_15, %c0_16] : memref<1x4xf32, #tpu.memory_space<vmem>>, vector<1x4xf32>
    %35 = vector.broadcast %34 : vector<1x4xf32> to vector<16x4xf32>
    %36 = arith.addf %33, %35 : vector<16x4xf32>
    %c0_17 = arith.constant 0 : index
    %c0_18 = arith.constant 0 : index
    %c0_19 = arith.constant 0 : index
    %37 = vector.load %arg6[%c0_17, %c0_18, %c0_19] : memref<1x16x4xf32, #tpu.memory_space<vmem>>, vector<1x16x4xf32>
    %38 = vector.shape_cast %37 : vector<1x16x4xf32> to vector<16x4xf32>
    %39 = arith.addf %38, %36 : vector<16x4xf32>
    %40 = vector.shape_cast %39 : vector<16x4xf32> to vector<1x16x4xf32>
    %c0_20 = arith.constant 0 : index
    %c0_21 = arith.constant 0 : index
    %c0_22 = arith.constant 0 : index
    %41 = vector.load %arg7[%c0_20, %c0_21, %c0_22] : memref<1x16x4xf32, #tpu.memory_space<vmem>>, vector<1x16x4xf32>
    tpu.vector_store %arg7[%c0_20, %c0_21, %c0_22], %40 {strides = array<i32>} : memref<1x16x4xf32, #tpu.memory_space<vmem>>, vector<1x16x4xf32>,
    return
  }
  func.func @transform_0(%arg0: i32) -> (i32, i32, i32) {
    %c0_i32 = arith.constant 0 : i32
    %c0_i32_0 = arith.constant 0 : i32
    %c0_i32_1 = arith.constant 0 : i32
    return %arg0, %c0_i32, %c0_i32_0 : i32, i32, i32
  }
  func.func @transform_1(%arg0: i32) -> (i32, i32) {
    %c0_i32 = arith.constant 0 : i32
    %c0_i32_0 = arith.constant 0 : i32
    %c0_i32_1 = arith.constant 0 : i32
    return %c0_i32, %c0_i32_0 : i32, i32
  }
  func.func @transform_2(%arg0: i32) -> (i32, i32) {
    %c0_i32 = arith.constant 0 : i32
    %c0_i32_0 = arith.constant 0 : i32
    %c0_i32_1 = arith.constant 0 : i32
    return %c0_i32, %c0_i32_0 : i32, i32
  }
  func.func @transform_3(%arg0: i32) -> (i32, i32) {
    %c0_i32 = arith.constant 0 : i32
    %c0_i32_0 = arith.constant 0 : i32
    %c0_i32_1 = arith.constant 0 : i32
    return %c0_i32, %c0_i32_0 : i32, i32
  }
  func.func @transform_4(%arg0: i32) -> (i32, i32) {
    %c0_i32 = arith.constant 0 : i32
    %c0_i32_0 = arith.constant 0 : i32
    %c0_i32_1 = arith.constant 0 : i32
    return %c0_i32, %c0_i32_0 : i32, i32
  }
  func.func @transform_5(%arg0: i32) -> (i32, i32, i32) {
    %c0_i32 = arith.constant 0 : i32
    %c0_i32_0 = arith.constant 0 : i32
    %c0_i32_1 = arith.constant 0 : i32
    return %arg0, %c0_i32, %c0_i32_0 : i32, i32, i32
  }
  func.func @transform_6(%arg0: i32) -> (i32, i32, i32) {
    %c0_i32 = arith.constant 0 : i32
    %c0_i32_0 = arith.constant 0 : i32
    %c0_i32_1 = arith.constant 0 : i32
    return %arg0, %c0_i32, %c0_i32_0 : i32, i32, i32
  }
}

</mosaic_0001>

<llo_original>
// kernel: _lambda_.15
$region0: #{_lambda_.15}
  #allocation0 [shape = 'u32[]', space=smem, size = 0x4, offset = 0x4, fixed_abs, tag = 'smem constant byte address 0x4 - core index']
  #allocation1 [shape = 'u32[72,128]{1,0:T(1,128)}', space=vmem, size = 0x9000, scoped, tag = 'internal scratch']
  %s0 = inlined_call_operand.vmem [shape: f32[2,16,4], index: 0, kind: input, shape index: {}]
  %s1 = inlined_call_operand.vmem [shape: f32[16,16], index: 1, kind: input, shape index: {}]
  %s2 = inlined_call_operand.vmem [shape: f32[2,16,4], index: 2, kind: output, shape index: {0}]
  %s3 = inlined_call_operand.vmem [shape: f32[2,16,4], index: 3, kind: output, shape index: {1}]
  %4 = xla_tuple %s2, %s3
  %s5 = sld [smem:[#allocation0]]
  $region49: #{_lambda_.15} parent=0
    _
  %s7 = ssub.s32 1, %s5
  %s8 = scalar_select 0, %s7, %s5
  loop: start=0, step=1, limit=4
  $region2: #{_lambda_.15} parent=0 // loop_pre_header
    _
  $region3: #{_lambda_.15} parent=0 // loop_header
    %s10 = sphi 0, %s14
    %p11 = scmp.ge.s32.totalorder %s10, 4
    %s20 = sphi 0, %s22
    %s23 = sphi 0, %s20
    %s24 = sphi 0, %s23
    %s40 = sphi 0, %s24
    %s44 = sphi 0, %s44
    %s46 = sphi 0, %s44
    %s47 = sphi 0, %s46
    %s61 = sphi 0, %s47
    %s67 = sphi 0, %s69
    %s70 = sphi 0, %s67
    %s71 = sphi 0, %s70
    %s87 = sphi 0, %s71
    %s93 = sphi 0, %s95
    %s96 = sphi 0, %s93
    %s97 = sphi 0, %s96
    %s113 = sphi 0, %s97
  $region4: #{_lambda_.15} parent=0 // loop_header_branch
    %13 = sbr.rel (%p11) target = $region8
  $region5: #{_lambda_.15} parent=0 // loop_body
    %s15 = ssub.s32 %s10, 1
    %s16 = ssub.s32 %s10, 2
    %s17 = sadd.s32 %s10, 1
    %s18 = ssub.s32 %s10, %s17
    %p19 = scmp.eq.s32.totalorder %s18, 0
    %s21 = sadd.s32 %s20, 1
    %s22 = scalar_select %p19, %s20, %s21
    %p25 = pneg %p19
    %p26 = scmp.eq.s32.totalorder %s10, 1
    %p27 = por %p25, %p26
    %p28 = scmp.ne.s32.totalorder %s20, %s23
    %p29 = scmp.eq.s32.totalorder %s10, 0
    %p30 = por %p28, %p29
    %p31 = scmp.ne.s32.totalorder %s20, %s23
    %p32 = scmp.eq.s32.totalorder %s15, 1
    %p33 = por %p31, %p32
    %p34 = scmp.ne.s32.totalorder %s23, %s24
    %p35 = scmp.eq.s32.totalorder %s15, 0
    %p36 = por %p34, %p35
    %p37 = scmp.ne.s32.totalorder %s23, %s24
    %p38 = scmp.eq.s32.totalorder %s16, 1
    %p39 = por %p37, %p38
    %p41 = scmp.ne.s32.totalorder %s24, %s40
    %p42 = scmp.eq.s32.totalorder %s16, 0
    %p43 = por %p41, %p42
    %s45 = sadd.s32 %s44, 1
    %p48 = scmp.eq.s32.totalorder %s10, 1
    %p49 = scmp.ne.s32.totalorder %s44, %s46
    %p50 = scmp.eq.s32.totalorder %s10, 0
    %p51 = por %p49, %p50
    %p52 = scmp.ne.s32.totalorder %s44, %s46
    %p53 = scmp.eq.s32.totalorder %s15, 1
    %p54 = por %p52, %p53
    %p55 = scmp.ne.s32.totalorder %s46, %s47
    %p56 = scmp.eq.s32.totalorder %s15, 0
    %p57 = por %p55, %p56
    %p58 = scmp.ne.s32.totalorder %s46, %s47
    %p59 = scmp.eq.s32.totalorder %s16, 1
    %p60 = por %p58, %p59
    %p62 = scmp.ne.s32.totalorder %s47, %s61
    %p63 = scmp.eq.s32.totalorder %s16, 0
    %p64 = por %p62, %p63
    %s65 = ssub.s32 %s10, %s17
    %p66 = scmp.eq.s32.totalorder %s65, 0
    %s68 = sadd.s32 %s67, 1
    %s69 = scalar_select %p66, %s67, %s68
    %p72 = pneg %p66
    %p73 = scmp.eq.s32.totalorder %s10, 1
    %p74 = por %p72, %p73
    %p75 = scmp.ne.s32.totalorder %s67, %s70
    %p76 = scmp.eq.s32.totalorder %s10, 0
    %p77 = por %p75, %p76
    %p78 = scmp.ne.s32.totalorder %s67, %s70
    %p79 = scmp.eq.s32.totalorder %s15, 1
    %p80 = por %p78, %p79
    %p81 = scmp.ne.s32.totalorder %s70, %s71
    %p82 = scmp.eq.s32.totalorder %s15, 0
    %p83 = por %p81, %p82
    %p84 = scmp.ne.s32.totalorder %s70, %s71
    %p85 = scmp.eq.s32.totalorder %s16, 1
    %p86 = por %p84, %p85
    %p88 = scmp.ne.s32.totalorder %s71, %s87
    %p89 = scmp.eq.s32.totalorder %s16, 0
    %p90 = por %p88, %p89
    %s91 = ssub.s32 %s10, %s17
    %p92 = scmp.eq.s32.totalorder %s91, 0
    %s94 = sadd.s32 %s93, 1
    %s95 = scalar_select %p92, %s93, %s94
    %p98 = pneg %p92
    %p99 = scmp.eq.s32.totalorder %s10, 1
    %p100 = por %p98, %p99
    %p101 = scmp.ne.s32.totalorder %s93, %s96
    %p102 = scmp.eq.s32.totalorder %s10, 0
    %p103 = por %p101, %p102
    %p104 = scmp.ne.s32.totalorder %s93, %s96
    %p105 = scmp.eq.s32.totalorder %s15, 1
    %p106 = por %p104, %p105
    %p107 = scmp.ne.s32.totalorder %s96, %s97
    %p108 = scmp.eq.s32.totalorder %s15, 0
    %p109 = por %p107, %p108
    %p110 = scmp.ne.s32.totalorder %s96, %s97
    %p111 = scmp.eq.s32.totalorder %s16, 1
    %p112 = por %p110, %p111
    %p114 = scmp.ne.s32.totalorder %s97, %s113
    %p115 = scmp.eq.s32.totalorder %s16, 0
    %p116 = por %p114, %p115
    %p117 = scmp.le.s32.totalorder 1, %s10
    %p118 = scmp.lt.s32.totalorder %s10, 3
    %p119 = pnand %p117, %p118
    %p120 = pneg %p119
    // Predicated region
    $region9: #{_lambda_.15} parent=5 // pred_check
      _
    $region10: #{_lambda_.15} parent=5 // pred_check_branch
      %122 = sbr.rel (%p119) target = $region12
    $region11: #{_lambda_.15} parent=5 // pred_region
      %s123 = ssub.s32 %s10, 1
      // Predicated region
      $region13: #{_lambda_.15} parent=11 // pred_check
        %p124 = pneg %p57
      $region14: #{_lambda_.15} parent=11 // pred_check_branch
        %126 = sbr.rel (%p124) target = $region16
      $region15: #{_lambda_.15} parent=11 // pred_region
        _
      $region16: #{_lambda_.15} parent=11 // pred_fallthru
        _
    $region12: #{_lambda_.15} parent=5 // pred_fallthru
      _
    %p127 = scmp.lt.s32.totalorder %s10, 2
    // Predicated region
    $region17: #{_lambda_.15} parent=5 // pred_check
      %p128 = pneg %p127
    $region18: #{_lambda_.15} parent=5 // pred_check_branch
      %130 = sbr.rel (%p128) target = $region20
    $region19: #{_lambda_.15} parent=5 // pred_region
      // Predicated region
      $region21: #{_lambda_.15} parent=19 // pred_check
        %p131 = pneg %p30
      $region22: #{_lambda_.15} parent=19 // pred_check_branch
        %133 = sbr.rel (%p131) target = $region24
      $region23: #{_lambda_.15} parent=19 // pred_region
        %p134 = scmp.lt.s32.totalorder %s10, 1
        %s135 = scalar_select %p134, %s10, 1
        %s136 = smul.addr %s135, 2
        %s137 = smul.addr %s136, 8
        %s138 = scalar_lea.vmem %s0, %s137
      $region24: #{_lambda_.15} parent=19 // pred_fallthru
        _
    $region20: #{_lambda_.15} parent=5 // pred_fallthru
      _
    %p139 = scmp.le.s32.totalorder 1, %s10
    %p140 = scmp.lt.s32.totalorder %s10, 3
    %p141 = pnand %p139, %p140
    %p142 = pneg %p141
    // Predicated region
    $region25: #{_lambda_.15} parent=5 // pred_check
      _
    $region26: #{_lambda_.15} parent=5 // pred_check_branch
      %144 = sbr.rel (%p141) target = $region28
    $region27: #{_lambda_.15} parent=5 // pred_region
      %s145 = ssub.s32 %s10, 1
      %p146 = scmp.lt.s32.totalorder %s15, 1
      %s147 = scalar_select %p146, %s15, 1
      %s148 = smul.addr %s147, 2
      %s149 = smul.addr %s148, 8
      %s150 = scalar_lea.vmem %s0, %s149
      %p151 = pneg %p36
      %p152 = pneg %p33
      %p153 = pneg %p57
      %p154 = pneg %p54
      %p155 = pneg %p83
      %p156 = pneg %p80
      %p157 = scmp.lt.s32.totalorder %s15, 1
      %s158 = scalar_select %p157, %s15, 1
      %s159 = smul.addr %s158, 2
      %s160 = smul.addr %s159, 8
      %s161 = scalar_lea.vmem %s2, %s160
      %p162 = pneg %p109
      %p163 = pneg %p106
      %p164 = scmp.lt.s32.totalorder %s15, 1
      %s165 = scalar_select %p164, %s15, 1
      %s166 = smul.addr %s165, 2
      %s167 = smul.addr %s166, 8
      %s168 = scalar_lea.vmem %s3, %s167
      %p169 = scmp.lt.s32.totalorder %s15, 1
      %s170 = scalar_select %p169, %s15, 1
      %s171 = smul.addr %s170, 2
      %s172 = smul.addr %s171, 8
      %s173 = scalar_lea.vmem %s0, %s172
      %p174 = scmp.lt.s32.totalorder %s15, 1
      %s175 = scalar_select %p174, %s15, 1
      %s176 = smul.addr %s175, 2
      %s177 = smul.addr %s176, 8
      %s178 = scalar_lea.vmem %s2, %s177
      %p179 = scmp.lt.s32.totalorder %s15, 1
      %s180 = scalar_select %p179, %s15, 1
      %s181 = smul.addr %s180, 2
      %s182 = smul.addr %s181, 8
      %s183 = scalar_lea.vmem %s3, %s182
      %v184 = vld [vmem:[%s173] sm:$0xff]
      %v185 = vld [vmem:[%s173 + $0x8] sm:$0xff]
      %v186 = vld [vmem:[%s1] sm:$0xff]
      %v187 = vld [vmem:[%s1 + $0x8] sm:$0xff]
      %vm188 = vcmask 130048
      %v190 = vsel %vm188, %v186, 0
      %v193 = vsel %vm188, %v187, 0
      %195 = vmatpush.msra.mxu0 0.0
      %196 = vmatpush.msra.mxu0 0.0
      %197 = vmatpush.msra.mxu0 0.0
      %198 = vmatpush.msra.mxu0 0.0
      %199 = vmatpush.msra.mxu0 0.0
      %200 = vmatpush.msra.mxu0 0.0
      %201 = vmatpush.msra.mxu0 0.0
      %202 = vmatpush.msra.mxu0 0.0
      %203 = vmatpush.msra.mxu0 0.0
      %204 = vmatpush.msra.mxu0 0.0
      %205 = vmatpush.msra.mxu0 0.0
      %206 = vmatpush.msra.mxu0 0.0
      %207 = vmatpush.msra.mxu0 0.0
      %208 = vmatpush.msra.mxu0 0.0
      %209 = vmatpush.msra.mxu0 %v185
      %210 = vmatpush.msra.mxu0 %v184
      %211 = vmatmul.f32.gmra.mxu0 %v190
      %v212 = vpop.f32.mrf.mxu0
      %v213 = vadd.f32 0.0, %v212
      %214 = vmatmul.f32.gmra.mxu0 %v193
      %v215 = vpop.f32.mrf.mxu0
      %v216 = vadd.f32 0.0, %v215
      %217 = vdwg.mxu0
      %v218 = vsub.f32 %v184, %v213
      %v219 = vsub.f32 %v185, %v216
      %vm220 = vcmask 31744
      %221 = vst.msk [vmem:[%s178] sm:$0xff] %vm220, %v218
      %222 = vst.msk [vmem:[%s178 + $0x8] sm:$0xff] %vm220, %v219
      %223 = vst.msk [vmem:[%s183] sm:$0xff] %vm220, %v213
      %224 = vst.msk [vmem:[%s183 + $0x8] sm:$0xff] %vm220, %v216
      %p225 = scmp.lt.s32.totalorder %s15, 1
      %s226 = scalar_select %p225, %s15, 1
      %s227 = smul.addr %s226, 2
      %s228 = smul.addr %s227, 8
      %s229 = scalar_lea.vmem %s2, %s228
      %p230 = scmp.lt.s32.totalorder %s15, 1
      %s231 = scalar_select %p230, %s15, 1
      %s232 = smul.addr %s231, 2
      %s233 = smul.addr %s232, 8
      %s234 = scalar_lea.vmem %s3, %s233
      // Predicated region
      $region29: #{_lambda_.15} parent=27 // pred_check
        %p235 = pneg %p80
      $region30: #{_lambda_.15} parent=27 // pred_check_branch
        %237 = sbr.rel (%p235) target = $region32
      $region31: #{_lambda_.15} parent=27 // pred_region
        _
      $region32: #{_lambda_.15} parent=27 // pred_fallthru
        _
      // Predicated region
      $region33: #{_lambda_.15} parent=27 // pred_check
        %p238 = pneg %p106
      $region34: #{_lambda_.15} parent=27 // pred_check_branch
        %240 = sbr.rel (%p238) target = $region36
      $region35: #{_lambda_.15} parent=27 // pred_region
        _
      $region36: #{_lambda_.15} parent=27 // pred_fallthru
        _
    $region28: #{_lambda_.15} parent=5 // pred_fallthru
      _
    %p241 = scmp.le.s32.totalorder 2, %s10
    // Predicated region
    $region37: #{_lambda_.15} parent=5 // pred_check
      %p242 = pneg %p241
    $region38: #{_lambda_.15} parent=5 // pred_check_branch
      %244 = sbr.rel (%p242) target = $region40
    $region39: #{_lambda_.15} parent=5 // pred_region
      %s245 = ssub.s32 %s10, 2
      // Predicated region
      $region41: #{_lambda_.15} parent=39 // pred_check
        %p246 = pneg %p86
      $region42: #{_lambda_.15} parent=39 // pred_check_branch
        %248 = sbr.rel (%p246) target = $region44
      $region43: #{_lambda_.15} parent=39 // pred_region
        %p249 = scmp.lt.s32.totalorder %s16, 1
        %s250 = scalar_select %p249, %s16, 1
        %s251 = smul.addr %s250, 2
        %s252 = smul.addr %s251, 8
        %s253 = scalar_lea.vmem %s2, %s252
      $region44: #{_lambda_.15} parent=39 // pred_fallthru
        _
      // Predicated region
      $region45: #{_lambda_.15} parent=39 // pred_check
        %p254 = pneg %p112
      $region46: #{_lambda_.15} parent=39 // pred_check_branch
        %256 = sbr.rel (%p254) target = $region48
      $region47: #{_lambda_.15} parent=39 // pred_region
        %p257 = scmp.lt.s32.totalorder %s16, 1
        %s258 = scalar_select %p257, %s16, 1
        %s259 = smul.addr %s258, 2
        %s260 = smul.addr %s259, 8
        %s261 = scalar_lea.vmem %s3, %s260
      $region48: #{_lambda_.15} parent=39 // pred_fallthru
        _
    $region40: #{_lambda_.15} parent=5 // pred_fallthru
      _
  $region6: #{_lambda_.15} parent=0 // loop_footer
    %s14 = sadd.s32 1, %s10
  $region7: #{_lambda_.15} parent=0 // loop_footer_branch
    %9 = sbr.rel target = $region3
  $region8: #{_lambda_.15} parent=0 // loop_exit
    _

// kernel: _lambda_.17
$region0: #{_lambda_.17}
  #allocation0 [shape = 'u32[]', space=smem, size = 0x4, offset = 0x4, fixed_abs, tag = 'smem constant byte address 0x4 - core index']
  #allocation1 [shape = 'u32[72,128]{1,0:T(1,128)}', space=vmem, size = 0x9000, scoped, tag = 'internal scratch']
  %s0 = inlined_call_operand.vmem [shape: f32[2,16,32], index: 0, kind: input, shape index: {}]
  %s1 = inlined_call_operand.vmem [shape: bf16[32,128], index: 1, kind: input, shape index: {}]
  %s2 = inlined_call_operand.vmem [shape: f32[1,128], index: 2, kind: input, shape index: {}]
  %s3 = inlined_call_operand.vmem [shape: f32[2,16,128], index: 3, kind: output, shape index: {}]
  %s4 = sld [smem:[#allocation0]]
  $region45: #{_lambda_.17} parent=0
    _
  %s6 = ssub.s32 1, %s4
  %s7 = scalar_select 0, %s6, %s4
  loop: start=0, step=1, limit=4
  $region2: #{_lambda_.17} parent=0 // loop_pre_header
    _
  $region3: #{_lambda_.17} parent=0 // loop_header
    %s9 = sphi 0, %s13
    %p10 = scmp.ge.s32.totalorder %s9, 4
    %s19 = sphi 0, %s21
    %s22 = sphi 0, %s19
    %s23 = sphi 0, %s22
    %s39 = sphi 0, %s23
    %s43 = sphi 0, %s43
    %s45 = sphi 0, %s43
    %s46 = sphi 0, %s45
    %s60 = sphi 0, %s46
    %s64 = sphi 0, %s64
    %s66 = sphi 0, %s64
    %s67 = sphi 0, %s66
    %s81 = sphi 0, %s67
    %s87 = sphi 0, %s89
    %s90 = sphi 0, %s87
    %s91 = sphi 0, %s90
    %s107 = sphi 0, %s91
  $region4: #{_lambda_.17} parent=0 // loop_header_branch
    %12 = sbr.rel (%p10) target = $region8
  $region5: #{_lambda_.17} parent=0 // loop_body
    %s14 = ssub.s32 %s9, 1
    %s15 = ssub.s32 %s9, 2
    %s16 = sadd.s32 %s9, 1
    %s17 = ssub.s32 %s9, %s16
    %p18 = scmp.eq.s32.totalorder %s17, 0
    %s20 = sadd.s32 %s19, 1
    %s21 = scalar_select %p18, %s19, %s20
    %p24 = pneg %p18
    %p25 = scmp.eq.s32.totalorder %s9, 1
    %p26 = por %p24, %p25
    %p27 = scmp.ne.s32.totalorder %s19, %s22
    %p28 = scmp.eq.s32.totalorder %s9, 0
    %p29 = por %p27, %p28
    %p30 = scmp.ne.s32.totalorder %s19, %s22
    %p31 = scmp.eq.s32.totalorder %s14, 1
    %p32 = por %p30, %p31
    %p33 = scmp.ne.s32.totalorder %s22, %s23
    %p34 = scmp.eq.s32.totalorder %s14, 0
    %p35 = por %p33, %p34
    %p36 = scmp.ne.s32.totalorder %s22, %s23
    %p37 = scmp.eq.s32.totalorder %s15, 1
    %p38 = por %p36, %p37
    %p40 = scmp.ne.s32.totalorder %s23, %s39
    %p41 = scmp.eq.s32.totalorder %s15, 0
    %p42 = por %p40, %p41
    %s44 = sadd.s32 %s43, 1
    %p47 = scmp.eq.s32.totalorder %s9, 1
    %p48 = scmp.ne.s32.totalorder %s43, %s45
    %p49 = scmp.eq.s32.totalorder %s9, 0
    %p50 = por %p48, %p49
    %p51 = scmp.ne.s32.totalorder %s43, %s45
    %p52 = scmp.eq.s32.totalorder %s14, 1
    %p53 = por %p51, %p52
    %p54 = scmp.ne.s32.totalorder %s45, %s46
    %p55 = scmp.eq.s32.totalorder %s14, 0
    %p56 = por %p54, %p55
    %p57 = scmp.ne.s32.totalorder %s45, %s46
    %p58 = scmp.eq.s32.totalorder %s15, 1
    %p59 = por %p57, %p58
    %p61 = scmp.ne.s32.totalorder %s46, %s60
    %p62 = scmp.eq.s32.totalorder %s15, 0
    %p63 = por %p61, %p62
    %s65 = sadd.s32 %s64, 1
    %p68 = scmp.eq.s32.totalorder %s9, 1
    %p69 = scmp.ne.s32.totalorder %s64, %s66
    %p70 = scmp.eq.s32.totalorder %s9, 0
    %p71 = por %p69, %p70
    %p72 = scmp.ne.s32.totalorder %s64, %s66
    %p73 = scmp.eq.s32.totalorder %s14, 1
    %p74 = por %p72, %p73
    %p75 = scmp.ne.s32.totalorder %s66, %s67
    %p76 = scmp.eq.s32.totalorder %s14, 0
    %p77 = por %p75, %p76
    %p78 = scmp.ne.s32.totalorder %s66, %s67
    %p79 = scmp.eq.s32.totalorder %s15, 1
    %p80 = por %p78, %p79
    %p82 = scmp.ne.s32.totalorder %s67, %s81
    %p83 = scmp.eq.s32.totalorder %s15, 0
    %p84 = por %p82, %p83
    %s85 = ssub.s32 %s9, %s16
    %p86 = scmp.eq.s32.totalorder %s85, 0
    %s88 = sadd.s32 %s87, 1
    %s89 = scalar_select %p86, %s87, %s88
    %p92 = pneg %p86
    %p93 = scmp.eq.s32.totalorder %s9, 1
    %p94 = por %p92, %p93
    %p95 = scmp.ne.s32.totalorder %s87, %s90
    %p96 = scmp.eq.s32.totalorder %s9, 0
    %p97 = por %p95, %p96
    %p98 = scmp.ne.s32.totalorder %s87, %s90
    %p99 = scmp.eq.s32.totalorder %s14, 1
    %p100 = por %p98, %p99
    %p101 = scmp.ne.s32.totalorder %s90, %s91
    %p102 = scmp.eq.s32.totalorder %s14, 0
    %p103 = por %p101, %p102
    %p104 = scmp.ne.s32.totalorder %s90, %s91
    %p105 = scmp.eq.s32.totalorder %s15, 1
    %p106 = por %p104, %p105
    %p108 = scmp.ne.s32.totalorder %s91, %s107
    %p109 = scmp.eq.s32.totalorder %s15, 0
    %p110 = por %p108, %p109
    %p111 = scmp.le.s32.totalorder 1, %s9
    %p112 = scmp.lt.s32.totalorder %s9, 3
    %p113 = pnand %p111, %p112
    %p114 = pneg %p113
    // Predicated region
    $region9: #{_lambda_.17} parent=5 // pred_check
      _
    $region10: #{_lambda_.17} parent=5 // pred_check_branch
      %116 = sbr.rel (%p113) target = $region12
    $region11: #{_lambda_.17} parent=5 // pred_region
      %s117 = ssub.s32 %s9, 1
      // Predicated region
      $region13: #{_lambda_.17} parent=11 // pred_check
        %p118 = pneg %p56
      $region14: #{_lambda_.17} parent=11 // pred_check_branch
        %120 = sbr.rel (%p118) target = $region16
      $region15: #{_lambda_.17} parent=11 // pred_region
        _
      $region16: #{_lambda_.17} parent=11 // pred_fallthru
        _
      // Predicated region
      $region17: #{_lambda_.17} parent=11 // pred_check
        %p121 = pneg %p77
      $region18: #{_lambda_.17} parent=11 // pred_check_branch
        %123 = sbr.rel (%p121) target = $region20
      $region19: #{_lambda_.17} parent=11 // pred_region
        _
      $region20: #{_lambda_.17} parent=11 // pred_fallthru
        _
    $region12: #{_lambda_.17} parent=5 // pred_fallthru
      _
    %p124 = scmp.lt.s32.totalorder %s9, 2
    // Predicated region
    $region21: #{_lambda_.17} parent=5 // pred_check
      %p125 = pneg %p124
    $region22: #{_lambda_.17} parent=5 // pred_check_branch
      %127 = sbr.rel (%p125) target = $region24
    $region23: #{_lambda_.17} parent=5 // pred_region
      // Predicated region
      $region25: #{_lambda_.17} parent=23 // pred_check
        %p128 = pneg %p29
      $region26: #{_lambda_.17} parent=23 // pred_check_branch
        %130 = sbr.rel (%p128) target = $region28
      $region27: #{_lambda_.17} parent=23 // pred_region
        %p131 = scmp.lt.s32.totalorder %s9, 1
        %s132 = scalar_select %p131, %s9, 1
        %s133 = smul.addr %s132, 2
        %s134 = smul.addr %s133, 8
        %s135 = scalar_lea.vmem %s0, %s134
      $region28: #{_lambda_.17} parent=23 // pred_fallthru
        _
    $region24: #{_lambda_.17} parent=5 // pred_fallthru
      _
    %p136 = scmp.le.s32.totalorder 1, %s9
    %p137 = scmp.lt.s32.totalorder %s9, 3
    %p138 = pnand %p136, %p137
    %p139 = pneg %p138
    // Predicated region
    $region29: #{_lambda_.17} parent=5 // pred_check
      _
    $region30: #{_lambda_.17} parent=5 // pred_check_branch
      %141 = sbr.rel (%p138) target = $region32
    $region31: #{_lambda_.17} parent=5 // pred_region
      %s142 = ssub.s32 %s9, 1
      %p143 = scmp.lt.s32.totalorder %s14, 1
      %s144 = scalar_select %p143, %s14, 1
      %s145 = smul.addr %s144, 2
      %s146 = smul.addr %s145, 8
      %s147 = scalar_lea.vmem %s0, %s146
      %p148 = pneg %p35
      %p149 = pneg %p32
      %p150 = pneg %p56
      %p151 = pneg %p53
      %p152 = pneg %p77
      %p153 = pneg %p74
      %p154 = pneg %p103
      %p155 = pneg %p100
      %p156 = scmp.lt.s32.totalorder %s14, 1
      %s157 = scalar_select %p156, %s14, 1
      %s158 = smul.addr %s157, 2
      %s159 = smul.addr %s158, 8
      %s160 = scalar_lea.vmem %s3, %s159
      %p161 = scmp.lt.s32.totalorder %s14, 1
      %s162 = scalar_select %p161, %s14, 1
      %s163 = smul.addr %s162, 2
      %s164 = smul.addr %s163, 8
      %s165 = scalar_lea.vmem %s0, %s164
      %p166 = scmp.lt.s32.totalorder %s14, 1
      %s167 = scalar_select %p166, %s14, 1
      %s168 = smul.addr %s167, 2
      %s169 = smul.addr %s168, 8
      %s170 = scalar_lea.vmem %s3, %s169
      %v172 = vld [vmem:[%s165] sm:$0xff]
      %v173 = vld [vmem:[%s165 + $0x8] sm:$0xff]
      %v174 = vpack.c.bf16 %v173, %v172
      %v175 = vld [vmem:[%s1] sm:$0xf]
      %v176 = vld [vmem:[%s1 + $0x4] sm:$0xf]
      %v177 = vld [vmem:[%s1 + $0x8] sm:$0xf]
      %v178 = vld [vmem:[%s1 + $0xc] sm:$0xf]
      %v179 = vld [vmem:[%s2] sm:$0x1]
      %v181 = vperm.slane %v179, 0
      %v187 = vunpack.c.l.b16 %v175
      %v188 = vunpack.c.l.b16 %v176
      %v189 = vunpack.c.l.b16 %v177
      %v190 = vunpack.c.l.b16 %v178
      %v191 = vpack.c.b16 %v188, %v187
      %v192 = vpack.c.b16 %v190, %v189
      %vm195 = vcmask 261120
      %v197 = vsel %vm195, %v174, 0
      %199 = vmatpush.bf16.msra.mxu0 0
      %200 = vmatpush.bf16.msra.mxu0 0
      %201 = vmatpush.bf16.msra.mxu0 0
      %202 = vmatpush.bf16.msra.mxu0 0
      %203 = vmatpush.bf16.msra.mxu0 0
      %204 = vmatpush.bf16.msra.mxu0 0
      %205 = vmatpush.bf16.msra.mxu0 %v192
      %206 = vmatpush.bf16.msra.mxu0 %v191
      %207 = vmatmul.bf16.gmra.mxu0 %v197
      %v208 = vpop.f32.mrf.mxu0
      %v209 = vadd.f32 %v181, %v208
      %v210 = vpop.f32.mrf.mxu0
      %v211 = vadd.f32 %v181, %v210
      %212 = vdwg.mxu0
      %213 = vst [vmem:[%s170] sm:$0xff] %v209
      %214 = vst [vmem:[%s170 + $0x8] sm:$0xff] %v211
      %p215 = scmp.lt.s32.totalorder %s14, 1
      %s216 = scalar_select %p215, %s14, 1
      %s217 = smul.addr %s216, 2
      %s218 = smul.addr %s217, 8
      %s219 = scalar_lea.vmem %s3, %s218
      // Predicated region
      $region33: #{_lambda_.17} parent=31 // pred_check
        %p220 = pneg %p100
      $region34: #{_lambda_.17} parent=31 // pred_check_branch
        %222 = sbr.rel (%p220) target = $region36
      $region35: #{_lambda_.17} parent=31 // pred_region
        _
      $region36: #{_lambda_.17} parent=31 // pred_fallthru
        _
    $region32: #{_lambda_.17} parent=5 // pred_fallthru
      _
    %p223 = scmp.le.s32.totalorder 2, %s9
    // Predicated region
    $region37: #{_lambda_.17} parent=5 // pred_check
      %p224 = pneg %p223
    $region38: #{_lambda_.17} parent=5 // pred_check_branch
      %226 = sbr.rel (%p224) target = $region40
    $region39: #{_lambda_.17} parent=5 // pred_region
      %s227 = ssub.s32 %s9, 2
      // Predicated region
      $region41: #{_lambda_.17} parent=39 // pred_check
        %p228 = pneg %p106
      $region42: #{_lambda_.17} parent=39 // pred_check_branch
        %230 = sbr.rel (%p228) target = $region44
      $region43: #{_lambda_.17} parent=39 // pred_region
        %p231 = scmp.lt.s32.totalorder %s15, 1
        %s232 = scalar_select %p231, %s15, 1
        %s233 = smul.addr %s232, 2
        %s234 = smul.addr %s233, 8
        %s235 = scalar_lea.vmem %s3, %s234
      $region44: #{_lambda_.17} parent=39 // pred_fallthru
        _
    $region40: #{_lambda_.17} parent=5 // pred_fallthru
      _
  $region6: #{_lambda_.17} parent=0 // loop_footer
    %s13 = sadd.s32 1, %s9
  $region7: #{_lambda_.17} parent=0 // loop_footer_branch
    %8 = sbr.rel target = $region3
  $region8: #{_lambda_.17} parent=0 // loop_exit
    _

// kernel: _lambda_.16
$region0: #{_lambda_.16}
  #allocation0 [shape = 'u32[]', space=smem, size = 0x4, offset = 0x4, fixed_abs, tag = 'smem constant byte address 0x4 - core index']
  #allocation1 [shape = 'u32[72,128]{1,0:T(1,128)}', space=vmem, size = 0x9000, scoped, tag = 'internal scratch']
  %s0 = inlined_call_operand.vmem [shape: f32[2,16,4], index: 0, kind: input, shape index: {}]
  %s1 = inlined_call_operand.vmem [shape: f32[2,16,4], index: 1, kind: input, shape index: {}]
  %s2 = inlined_call_operand.vmem [shape: f32[3,4,32], index: 2, kind: input, shape index: {}]
  %s3 = inlined_call_operand.vmem [shape: f32[4,32], index: 3, kind: input, shape index: {}]
  %s4 = inlined_call_operand.vmem [shape: f32[1,16,32], index: 4, kind: input, shape index: {}]
  %s5 = inlined_call_operand.vmem [shape: f32[2,16,16], index: 5, kind: input, shape index: {}]
  %s6 = inlined_call_operand.vmem [shape: f32[2,16,32], index: 6, kind: output, shape index: {}]
  %s7 = sld [smem:[#allocation0]]
  $region57: #{_lambda_.16} parent=0
    _
  %s9 = ssub.s32 1, %s7
  %s10 = scalar_select 0, %s9, %s7
  loop: start=0, step=1, limit=4
  $region2: #{_lambda_.16} parent=0 // loop_pre_header
    _
  $region3: #{_lambda_.16} parent=0 // loop_header
    %s12 = sphi 0, %s16
    %p13 = scmp.ge.s32.totalorder %s12, 4
    %s22 = sphi 0, %s24
    %s25 = sphi 0, %s22
    %s26 = sphi 0, %s25
    %s42 = sphi 0, %s26
    %s48 = sphi 0, %s50
    %s51 = sphi 0, %s48
    %s52 = sphi 0, %s51
    %s68 = sphi 0, %s52
    %s72 = sphi 0, %s72
    %s74 = sphi 0, %s72
    %s75 = sphi 0, %s74
    %s89 = sphi 0, %s75
    %s93 = sphi 0, %s93
    %s95 = sphi 0, %s93
    %s96 = sphi 0, %s95
    %s110 = sphi 0, %s96
    %s114 = sphi 0, %s114
    %s116 = sphi 0, %s114
    %s117 = sphi 0, %s116
    %s131 = sphi 0, %s117
    %s135 = sphi 0, %s135
    %s137 = sphi 0, %s135
    %s138 = sphi 0, %s137
    %s152 = sphi 0, %s138
    %s158 = sphi 0, %s160
    %s161 = sphi 0, %s158
    %s162 = sphi 0, %s161
    %s178 = sphi 0, %s162
  $region4: #{_lambda_.16} parent=0 // loop_header_branch
    %15 = sbr.rel (%p13) target = $region8
  $region5: #{_lambda_.16} parent=0 // loop_body
    %s17 = ssub.s32 %s12, 1
    %s18 = ssub.s32 %s12, 2
    %s19 = sadd.s32 %s12, 1
    %s20 = ssub.s32 %s12, %s19
    %p21 = scmp.eq.s32.totalorder %s20, 0
    %s23 = sadd.s32 %s22, 1
    %s24 = scalar_select %p21, %s22, %s23
    %p27 = pneg %p21
    %p28 = scmp.eq.s32.totalorder %s12, 1
    %p29 = por %p27, %p28
    %p30 = scmp.ne.s32.totalorder %s22, %s25
    %p31 = scmp.eq.s32.totalorder %s12, 0
    %p32 = por %p30, %p31
    %p33 = scmp.ne.s32.totalorder %s22, %s25
    %p34 = scmp.eq.s32.totalorder %s17, 1
    %p35 = por %p33, %p34
    %p36 = scmp.ne.s32.totalorder %s25, %s26
    %p37 = scmp.eq.s32.totalorder %s17, 0
    %p38 = por %p36, %p37
    %p39 = scmp.ne.s32.totalorder %s25, %s26
    %p40 = scmp.eq.s32.totalorder %s18, 1
    %p41 = por %p39, %p40
    %p43 = scmp.ne.s32.totalorder %s26, %s42
    %p44 = scmp.eq.s32.totalorder %s18, 0
    %p45 = por %p43, %p44
    %s46 = ssub.s32 %s12, %s19
    %p47 = scmp.eq.s32.totalorder %s46, 0
    %s49 = sadd.s32 %s48, 1
    %s50 = scalar_select %p47, %s48, %s49
    %p53 = pneg %p47
    %p54 = scmp.eq.s32.totalorder %s12, 1
    %p55 = por %p53, %p54
    %p56 = scmp.ne.s32.totalorder %s48, %s51
    %p57 = scmp.eq.s32.totalorder %s12, 0
    %p58 = por %p56, %p57
    %p59 = scmp.ne.s32.totalorder %s48, %s51
    %p60 = scmp.eq.s32.totalorder %s17, 1
    %p61 = por %p59, %p60
    %p62 = scmp.ne.s32.totalorder %s51, %s52
    %p63 = scmp.eq.s32.totalorder %s17, 0
    %p64 = por %p62, %p63
    %p65 = scmp.ne.s32.totalorder %s51, %s52
    %p66 = scmp.eq.s32.totalorder %s18, 1
    %p67 = por %p65, %p66
    %p69 = scmp.ne.s32.totalorder %s52, %s68
    %p70 = scmp.eq.s32.totalorder %s18, 0
    %p71 = por %p69, %p70
    %s73 = sadd.s32 %s72, 1
    %p76 = scmp.eq.s32.totalorder %s12, 1
    %p77 = scmp.ne.s32.totalorder %s72, %s74
    %p78 = scmp.eq.s32.totalorder %s12, 0
    %p79 = por %p77, %p78
    %p80 = scmp.ne.s32.totalorder %s72, %s74
    %p81 = scmp.eq.s32.totalorder %s17, 1
    %p82 = por %p80, %p81
    %p83 = scmp.ne.s32.totalorder %s74, %s75
    %p84 = scmp.eq.s32.totalorder %s17, 0
    %p85 = por %p83, %p84
    %p86 = scmp.ne.s32.totalorder %s74, %s75
    %p87 = scmp.eq.s32.totalorder %s18, 1
    %p88 = por %p86, %p87
    %p90 = scmp.ne.s32.totalorder %s75, %s89
    %p91 = scmp.eq.s32.totalorder %s18, 0
    %p92 = por %p90, %p91
    %s94 = sadd.s32 %s93, 1
    %p97 = scmp.eq.s32.totalorder %s12, 1
    %p98 = scmp.ne.s32.totalorder %s93, %s95
    %p99 = scmp.eq.s32.totalorder %s12, 0
    %p100 = por %p98, %p99
    %p101 = scmp.ne.s32.totalorder %s93, %s95
    %p102 = scmp.eq.s32.totalorder %s17, 1
    %p103 = por %p101, %p102
    %p104 = scmp.ne.s32.totalorder %s95, %s96
    %p105 = scmp.eq.s32.totalorder %s17, 0
    %p106 = por %p104, %p105
    %p107 = scmp.ne.s32.totalorder %s95, %s96
    %p108 = scmp.eq.s32.totalorder %s18, 1
    %p109 = por %p107, %p108
    %p111 = scmp.ne.s32.totalorder %s96, %s110
    %p112 = scmp.eq.s32.totalorder %s18, 0
    %p113 = por %p111, %p112
    %s115 = sadd.s32 %s114, 1
    %p118 = scmp.eq.s32.totalorder %s12, 1
    %p119 = scmp.ne.s32.totalorder %s114, %s116
    %p120 = scmp.eq.s32.totalorder %s12, 0
    %p121 = por %p119, %p120
    %p122 = scmp.ne.s32.totalorder %s114, %s116
    %p123 = scmp.eq.s32.totalorder %s17, 1
    %p124 = por %p122, %p123
    %p125 = scmp.ne.s32.totalorder %s116, %s117
    %p126 = scmp.eq.s32.totalorder %s17, 0
    %p127 = por %p125, %p126
    %p128 = scmp.ne.s32.totalorder %s116, %s117
    %p129 = scmp.eq.s32.totalorder %s18, 1
    %p130 = por %p128, %p129
    %p132 = scmp.ne.s32.totalorder %s117, %s131
    %p133 = scmp.eq.s32.totalorder %s18, 0
    %p134 = por %p132, %p133
    %s136 = sadd.s32 %s135, 1
    %p139 = scmp.eq.s32.totalorder %s12, 1
    %p140 = scmp.ne.s32.totalorder %s135, %s137
    %p141 = scmp.eq.s32.totalorder %s12, 0
    %p142 = por %p140, %p141
    %p143 = scmp.ne.s32.totalorder %s135, %s137
    %p144 = scmp.eq.s32.totalorder %s17, 1
    %p145 = por %p143, %p144
    %p146 = scmp.ne.s32.totalorder %s137, %s138
    %p147 = scmp.eq.s32.totalorder %s17, 0
    %p148 = por %p146, %p147
    %p149 = scmp.ne.s32.totalorder %s137, %s138
    %p150 = scmp.eq.s32.totalorder %s18, 1
    %p151 = por %p149, %p150
    %p153 = scmp.ne.s32.totalorder %s138, %s152
    %p154 = scmp.eq.s32.totalorder %s18, 0
    %p155 = por %p153, %p154
    %s156 = ssub.s32 %s12, %s19
    %p157 = scmp.eq.s32.totalorder %s156, 0
    %s159 = sadd.s32 %s158, 1
    %s160 = scalar_select %p157, %s158, %s159
    %p163 = pneg %p157
    %p164 = scmp.eq.s32.totalorder %s12, 1
    %p165 = por %p163, %p164
    %p166 = scmp.ne.s32.totalorder %s158, %s161
    %p167 = scmp.eq.s32.totalorder %s12, 0
    %p168 = por %p166, %p167
    %p169 = scmp.ne.s32.totalorder %s158, %s161
    %p170 = scmp.eq.s32.totalorder %s17, 1
    %p171 = por %p169, %p170
    %p172 = scmp.ne.s32.totalorder %s161, %s162
    %p173 = scmp.eq.s32.totalorder %s17, 0
    %p174 = por %p172, %p173
    %p175 = scmp.ne.s32.totalorder %s161, %s162
    %p176 = scmp.eq.s32.totalorder %s18, 1
    %p177 = por %p175, %p176
    %p179 = scmp.ne.s32.totalorder %s162, %s178
    %p180 = scmp.eq.s32.totalorder %s18, 0
    %p181 = por %p179, %p180
    %p182 = scmp.le.s32.totalorder 1, %s12
    %p183 = scmp.lt.s32.totalorder %s12, 3
    %p184 = pnand %p182, %p183
    %p185 = pneg %p184
    // Predicated region
    $region9: #{_lambda_.16} parent=5 // pred_check
      _
    $region10: #{_lambda_.16} parent=5 // pred_check_branch
      %187 = sbr.rel (%p184) target = $region12
    $region11: #{_lambda_.16} parent=5 // pred_region
      %s188 = ssub.s32 %s12, 1
      // Predicated region
      $region13: #{_lambda_.16} parent=11 // pred_check
        %p189 = pneg %p85
      $region14: #{_lambda_.16} parent=11 // pred_check_branch
        %191 = sbr.rel (%p189) target = $region16
      $region15: #{_lambda_.16} parent=11 // pred_region
        _
      $region16: #{_lambda_.16} parent=11 // pred_fallthru
        _
      // Predicated region
      $region17: #{_lambda_.16} parent=11 // pred_check
        %p192 = pneg %p106
      $region18: #{_lambda_.16} parent=11 // pred_check_branch
        %194 = sbr.rel (%p192) target = $region20
      $region19: #{_lambda_.16} parent=11 // pred_region
        _
      $region20: #{_lambda_.16} parent=11 // pred_fallthru
        _
      // Predicated region
      $region21: #{_lambda_.16} parent=11 // pred_check
        %p195 = pneg %p127
      $region22: #{_lambda_.16} parent=11 // pred_check_branch
        %197 = sbr.rel (%p195) target = $region24
      $region23: #{_lambda_.16} parent=11 // pred_region
        _
      $region24: #{_lambda_.16} parent=11 // pred_fallthru
        _
      // Predicated region
      $region25: #{_lambda_.16} parent=11 // pred_check
        %p198 = pneg %p148
      $region26: #{_lambda_.16} parent=11 // pred_check_branch
        %200 = sbr.rel (%p198) target = $region28
      $region27: #{_lambda_.16} parent=11 // pred_region
        _
      $region28: #{_lambda_.16} parent=11 // pred_fallthru
        _
    $region12: #{_lambda_.16} parent=5 // pred_fallthru
      _
    %p201 = scmp.lt.s32.totalorder %s12, 2
    // Predicated region
    $region29: #{_lambda_.16} parent=5 // pred_check
      %p202 = pneg %p201
    $region30: #{_lambda_.16} parent=5 // pred_check_branch
      %204 = sbr.rel (%p202) target = $region32
    $region31: #{_lambda_.16} parent=5 // pred_region
      // Predicated region
      $region33: #{_lambda_.16} parent=31 // pred_check
        %p205 = pneg %p32
      $region34: #{_lambda_.16} parent=31 // pred_check_branch
        %207 = sbr.rel (%p205) target = $region36
      $region35: #{_lambda_.16} parent=31 // pred_region
        %p208 = scmp.lt.s32.totalorder %s12, 1
        %s209 = scalar_select %p208, %s12, 1
        %s210 = smul.addr %s209, 2
        %s211 = smul.addr %s210, 8
        %s212 = scalar_lea.vmem %s0, %s211
      $region36: #{_lambda_.16} parent=31 // pred_fallthru
        _
      // Predicated region
      $region37: #{_lambda_.16} parent=31 // pred_check
        %p213 = pneg %p58
      $region38: #{_lambda_.16} parent=31 // pred_check_branch
        %215 = sbr.rel (%p213) target = $region40
      $region39: #{_lambda_.16} parent=31 // pred_region
        %p216 = scmp.lt.s32.totalorder %s12, 1
        %s217 = scalar_select %p216, %s12, 1
        %s218 = smul.addr %s217, 2
        %s219 = smul.addr %s218, 8
        %s220 = scalar_lea.vmem %s1, %s219
      $region40: #{_lambda_.16} parent=31 // pred_fallthru
        _
    $region32: #{_lambda_.16} parent=5 // pred_fallthru
      _
    %p221 = scmp.le.s32.totalorder 1, %s12
    %p222 = scmp.lt.s32.totalorder %s12, 3
    %p223 = pnand %p221, %p222
    %p224 = pneg %p223
    // Predicated region
    $region41: #{_lambda_.16} parent=5 // pred_check
      _
    $region42: #{_lambda_.16} parent=5 // pred_check_branch
      %226 = sbr.rel (%p223) target = $region44
    $region43: #{_lambda_.16} parent=5 // pred_region
      %s227 = ssub.s32 %s12, 1
      %p228 = scmp.lt.s32.totalorder %s17, 1
      %s229 = scalar_select %p228, %s17, 1
      %s230 = smul.addr %s229, 2
      %s231 = smul.addr %s230, 8
      %s232 = scalar_lea.vmem %s0, %s231
      %p233 = pneg %p38
      %p234 = pneg %p35
      %p235 = scmp.lt.s32.totalorder %s17, 1
      %s236 = scalar_select %p235, %s17, 1
      %s237 = smul.addr %s236, 2
      %s238 = smul.addr %s237, 8
      %s239 = scalar_lea.vmem %s1, %s238
      %p240 = pneg %p64
      %p241 = pneg %p61
      %p242 = pneg %p85
      %p243 = pneg %p82
      %p244 = pneg %p106
      %p245 = pneg %p103
      %p246 = pneg %p127
      %p247 = pneg %p124
      %p248 = pneg %p148
      %p249 = pneg %p145
      %p250 = pneg %p174
      %p251 = pneg %p171
      %p252 = scmp.lt.s32.totalorder %s17, 1
      %s253 = scalar_select %p252, %s17, 1
      %s254 = smul.addr %s253, 2
      %s255 = smul.addr %s254, 8
      %s256 = scalar_lea.vmem %s6, %s255
      %p257 = scmp.lt.s32.totalorder %s17, 1
      %s258 = scalar_select %p257, %s17, 1
      %s259 = smul.addr %s258, 2
      %s260 = smul.addr %s259, 8
      %s261 = scalar_lea.vmem %s0, %s260
      %p262 = scmp.lt.s32.totalorder %s17, 1
      %s263 = scalar_select %p262, %s17, 1
      %s264 = smul.addr %s263, 2
      %s265 = smul.addr %s264, 8
      %s266 = scalar_lea.vmem %s1, %s265
      %p267 = scmp.lt.s32.totalorder %s17, 1
      %s268 = scalar_select %p267, %s17, 1
      %s269 = smul.addr %s268, 2
      %s270 = smul.addr %s269, 8
      %s271 = scalar_lea.vmem %s6, %s270
      %v272 = vld [vmem:[%s261] sm:$0xff]
      %v273 = vld [vmem:[%s261 + $0x8] sm:$0xff]
      %v274 = vld [vmem:[%s5] sm:$0xff]
      %v275 = vld [vmem:[%s5 + $0x8] sm:$0xff]
      %vm276 = vcmask 130048
      %v278 = vsel %vm276, %v274, 0
      %v281 = vsel %vm276, %v275, 0
      %283 = vmatpush.msra.mxu0 0.0
      %284 = vmatpush.msra.mxu0 0.0
      %285 = vmatpush.msra.mxu0 0.0
      %286 = vmatpush.msra.mxu0 0.0
      %287 = vmatpush.msra.mxu0 0.0
      %288 = vmatpush.msra.mxu0 0.0
      %289 = vmatpush.msra.mxu0 0.0
      %290 = vmatpush.msra.mxu0 0.0
      %291 = vmatpush.msra.mxu0 0.0
      %292 = vmatpush.msra.mxu0 0.0
      %293 = vmatpush.msra.mxu0 0.0
      %294 = vmatpush.msra.mxu0 0.0
      %295 = vmatpush.msra.mxu0 0.0
      %296 = vmatpush.msra.mxu0 0.0
      %297 = vmatpush.msra.mxu0 %v273
      %298 = vmatpush.msra.mxu0 %v272
      %299 = vmatmul.f32.gmra.mxu0 %v278
      %v300 = vpop.f32.mrf.mxu0
      %v301 = vadd.f32 0.0, %v300
      %302 = vmatmul.f32.gmra.mxu0 %v281
      %v303 = vpop.f32.mrf.mxu0
      %v304 = vadd.f32 0.0, %v303
      %305 = vdwg.mxu0
      %s306 = scalar_lea.vmem %s5, 16
      %v307 = vld [vmem:[%s306] sm:$0xff]
      %v308 = vld [vmem:[%s306 + $0x8] sm:$0xff]
      %v310 = vsel %vm276, %v307, 0
      %v313 = vsel %vm276, %v308, 0
      %315 = vmatpush.msra.mxu0 0.0
      %316 = vmatpush.msra.mxu0 0.0
      %317 = vmatpush.msra.mxu0 0.0
      %318 = vmatpush.msra.mxu0 0.0
      %319 = vmatpush.msra.mxu0 0.0
      %320 = vmatpush.msra.mxu0 0.0
      %321 = vmatpush.msra.mxu0 0.0
      %322 = vmatpush.msra.mxu0 0.0
      %323 = vmatpush.msra.mxu0 0.0
      %324 = vmatpush.msra.mxu0 0.0
      %325 = vmatpush.msra.mxu0 0.0
      %326 = vmatpush.msra.mxu0 0.0
      %327 = vmatpush.msra.mxu0 0.0
      %328 = vmatpush.msra.mxu0 0.0
      %329 = vmatpush.msra.mxu0 %v273
      %330 = vmatpush.msra.mxu0 %v272
      %331 = vmatmul.f32.gmra.mxu0 %v310
      %v332 = vpop.f32.mrf.mxu0
      %v333 = vadd.f32 0.0, %v332
      %334 = vmatmul.f32.gmra.mxu0 %v313
      %v335 = vpop.f32.mrf.mxu0
      %v336 = vadd.f32 0.0, %v335
      %337 = vdwg.mxu0
      %v338 = vld [vmem:[%s2] sm:$0xf]
      %s339 = scalar_lea.vmem %s2, 4
      %v340 = vld [vmem:[%s339] sm:$0xf]
      %vm341 = vcmask 31744
      %v343 = vsel %vm341, %v272, 0
      %v346 = vsel %vm341, %v273, 0
      %vm348 = vcmask 1043456
      %v350 = vsel %vm348, %v340, 0
      %352 = vmatpush.msra.mxu0 0.0
      %353 = vmatpush.msra.mxu0 0.0
      %354 = vmatpush.msra.mxu0 0.0
      %355 = vmatpush.msra.mxu0 0.0
      %356 = vmatpush.msra.mxu0 0.0
      %357 = vmatpush.msra.mxu0 0.0
      %358 = vmatpush.msra.mxu0 0.0
      %359 = vmatpush.msra.mxu0 0.0
      %360 = vmatpush.msra.mxu0 0.0
      %361 = vmatpush.msra.mxu0 0.0
      %362 = vmatpush.msra.mxu0 0.0
      %363 = vmatpush.msra.mxu0 0.0
      %364 = vmatpush.msra.mxu0 0.0
      %365 = vmatpush.msra.mxu0 0.0
      %366 = vmatpush.msra.mxu0 0.0
      %367 = vmatpush.msra.mxu0 %v350
      %368 = vmatmul.f32.gmra.mxu0 %v343
      %v369 = vpop.f32.mrf.mxu0
      %v370 = vadd.f32 0.0, %v369
      %371 = vmatmul.f32.gmra.mxu0 %v346
      %v372 = vpop.f32.mrf.mxu0
      %v373 = vadd.f32 0.0, %v372
      %374 = vdwg.mxu0
      %v376 = vsel %vm341, %v301, 0
      %v379 = vsel %vm341, %v304, 0
      %v382 = vsel %vm348, %v338, 0
      %384 = vmatpush.msra.mxu0 0.0
      %385 = vmatpush.msra.mxu0 0.0
      %386 = vmatpush.msra.mxu0 0.0
      %387 = vmatpush.msra.mxu0 0.0
      %388 = vmatpush.msra.mxu0 0.0
      %389 = vmatpush.msra.mxu0 0.0
      %390 = vmatpush.msra.mxu0 0.0
      %391 = vmatpush.msra.mxu0 0.0
      %392 = vmatpush.msra.mxu0 0.0
      %393 = vmatpush.msra.mxu0 0.0
      %394 = vmatpush.msra.mxu0 0.0
      %395 = vmatpush.msra.mxu0 0.0
      %396 = vmatpush.msra.mxu0 0.0
      %397 = vmatpush.msra.mxu0 0.0
      %398 = vmatpush.msra.mxu0 0.0
      %399 = vmatpush.msra.mxu0 %v382
      %400 = vmatmul.f32.gmra.mxu0 %v376
      %v401 = vpop.f32.mrf.mxu0
      %v402 = vadd.f32 %v370, %v401
      %403 = vmatmul.f32.gmra.mxu0 %v379
      %v404 = vpop.f32.mrf.mxu0
      %v405 = vadd.f32 %v373, %v404
      %406 = vdwg.mxu0
      %s407 = scalar_lea.vmem %s2, 8
      %v408 = vld [vmem:[%s407] sm:$0xf]
      %v410 = vsel %vm341, %v333, 0
      %v413 = vsel %vm341, %v336, 0
      %v416 = vsel %vm348, %v408, 0
      %418 = vmatpush.msra.mxu0 0.0
      %419 = vmatpush.msra.mxu0 0.0
      %420 = vmatpush.msra.mxu0 0.0
      %421 = vmatpush.msra.mxu0 0.0
      %422 = vmatpush.msra.mxu0 0.0
      %423 = vmatpush.msra.mxu0 0.0
      %424 = vmatpush.msra.mxu0 0.0
      %425 = vmatpush.msra.mxu0 0.0
      %426 = vmatpush.msra.mxu0 0.0
      %427 = vmatpush.msra.mxu0 0.0
      %428 = vmatpush.msra.mxu0 0.0
      %429 = vmatpush.msra.mxu0 0.0
      %430 = vmatpush.msra.mxu0 0.0
      %431 = vmatpush.msra.mxu0 0.0
      %432 = vmatpush.msra.mxu0 0.0
      %433 = vmatpush.msra.mxu0 %v416
      %434 = vmatmul.f32.gmra.mxu0 %v410
      %v435 = vpop.f32.mrf.mxu0
      %v436 = vadd.f32 0.0, %v435
      %437 = vmatmul.f32.gmra.mxu0 %v413
      %v438 = vpop.f32.mrf.mxu0
      %v439 = vadd.f32 0.0, %v438
      %440 = vdwg.mxu0
      %v441 = vadd.f32 %v402, %v436
      %v442 = vadd.f32 %v405, %v439
      %v443 = vld [vmem:[%s266] sm:$0xff]
      %v444 = vld [vmem:[%s266 + $0x8] sm:$0xff]
      %v445 = vld [vmem:[%s3] sm:$0xf]
      %v447 = vsel %vm341, %v443, 0
      %v450 = vsel %vm341, %v444, 0
      %v453 = vsel %vm348, %v445, 0
      %455 = vmatpush.msra.mxu0 0.0
      %456 = vmatpush.msra.mxu0 0.0
      %457 = vmatpush.msra.mxu0 0.0
      %458 = vmatpush.msra.mxu0 0.0
      %459 = vmatpush.msra.mxu0 0.0
      %460 = vmatpush.msra.mxu0 0.0
      %461 = vmatpush.msra.mxu0 0.0
      %462 = vmatpush.msra.mxu0 0.0
      %463 = vmatpush.msra.mxu0 0.0
      %464 = vmatpush.msra.mxu0 0.0
      %465 = vmatpush.msra.mxu0 0.0
      %466 = vmatpush.msra.mxu0 0.0
      %467 = vmatpush.msra.mxu0 0.0
      %468 = vmatpush.msra.mxu0 0.0
      %469 = vmatpush.msra.mxu0 0.0
      %470 = vmatpush.msra.mxu0 %v453
      %471 = vmatmul.f32.gmra.mxu0 %v447
      %v472 = vpop.f32.mrf.mxu0
      %v473 = vadd.f32 0.0, %v472
      %474 = vmatmul.f32.gmra.mxu0 %v450
      %v475 = vpop.f32.mrf.mxu0
      %v476 = vadd.f32 0.0, %v475
      %477 = vdwg.mxu0
      %v478 = vadd.f32 %v441, %v473
      %v479 = vadd.f32 %v442, %v476
      %v480 = vld [vmem:[%s4] sm:$0xff]
      %v481 = vld [vmem:[%s4 + $0x8] sm:$0xff]
      %v482 = vadd.f32 %v478, %v480
      %v483 = vadd.f32 %v479, %v481
      %vm484 = vcmask 261120
      %485 = vst.msk [vmem:[%s271] sm:$0xff] %vm484, %v482
      %486 = vst.msk [vmem:[%s271 + $0x8] sm:$0xff] %vm484, %v483
      %p487 = scmp.lt.s32.totalorder %s17, 1
      %s488 = scalar_select %p487, %s17, 1
      %s489 = smul.addr %s488, 2
      %s490 = smul.addr %s489, 8
      %s491 = scalar_lea.vmem %s6, %s490
      // Predicated region
      $region45: #{_lambda_.16} parent=43 // pred_check
        %p492 = pneg %p171
      $region46: #{_lambda_.16} parent=43 // pred_check_branch
        %494 = sbr.rel (%p492) target = $region48
      $region47: #{_lambda_.16} parent=43 // pred_region
        _
      $region48: #{_lambda_.16} parent=43 // pred_fallthru
        _
    $region44: #{_lambda_.16} parent=5 // pred_fallthru
      _
    %p495 = scmp.le.s32.totalorder 2, %s12
    // Predicated region
    $region49: #{_lambda_.16} parent=5 // pred_check
      %p496 = pneg %p495
    $region50: #{_lambda_.16} parent=5 // pred_check_branch
      %498 = sbr.rel (%p496) target = $region52
    $region51: #{_lambda_.16} parent=5 // pred_region
      %s499 = ssub.s32 %s12, 2
      // Predicated region
      $region53: #{_lambda_.16} parent=51 // pred_check
        %p500 = pneg %p177
      $region54: #{_lambda_.16} parent=51 // pred_check_branch
        %502 = sbr.rel (%p500) target = $region56
      $region55: #{_lambda_.16} parent=51 // pred_region
        %p503 = scmp.lt.s32.totalorder %s18, 1
        %s504 = scalar_select %p503, %s18, 1
        %s505 = smul.addr %s504, 2
        %s506 = smul.addr %s505, 8
        %s507 = scalar_lea.vmem %s6, %s506
      $region56: #{_lambda_.16} parent=51 // pred_fallthru
        _
    $region52: #{_lambda_.16} parent=5 // pred_fallthru
      _
  $region6: #{_lambda_.16} parent=0 // loop_footer
    %s16 = sadd.s32 1, %s12
  $region7: #{_lambda_.16} parent=0 // loop_footer_branch
    %11 = sbr.rel target = $region3
  $region8: #{_lambda_.16} parent=0 // loop_exit
    _

// kernel: reverse.7
$region0: #{reverse.7}
  %s0 = inlined_call_operand.vmem [shape: f32[2,4,8,7], index: 0, kind: input, shape index: {}]
  %s1 = inlined_call_operand.vmem [shape: f32[2,4,8,7], index: 1, kind: output, shape index: {}]
  %v2 = vlaneseq
  %v3 = vsub.s32 6, %v2
  %4 = vset.pattern.permute.xlu0 %v3
  $region1: #{reverse.7} parent=0
    #allocation0 [shape = 'u8[32768]{0}', space=vmem, size = 0x8000, scoped, tag = 'operand span for operand 0']
    #allocation1 [shape = 'u8[32768]{0}', space=vmem, size = 0x8000, scoped, tag = 'operand span for operand 1']
    // Predicated region
    $region2: #{reverse.7} parent=1 // pred_check
      _
    $region3: #{reverse.7} parent=1 // pred_check_branch
      %6 = sbr.rel (0) target = $region5
    $region4: #{reverse.7} parent=1 // pred_region
      // Predicated region
      $region6: #{reverse.7} parent=4 // pred_check
        _
      $region7: #{reverse.7} parent=4 // pred_check_branch
        %8 = sbr.rel (0) target = $region9
      $region8: #{reverse.7} parent=4 // pred_region
        // Predicated region
        $region21: #{reverse.7} parent=8 // pred_check
          _
        $region22: #{reverse.7} parent=8 // pred_check_branch
          %38 = sbr.rel (0) target = $region24
        $region23: #{reverse.7} parent=8 // pred_region
          loop: start=0, step=1, limit=1
          $region25: #{reverse.7} parent=23 // loop_pre_header
            _
          $region26: #{reverse.7} parent=23 // loop_header
            %s40 = sphi 0, %s44
            %p41 = scmp.ge.s32.totalorder %s40, 1
            %s45 = sphi %s0, %s0
            %s46 = sphi [#allocation0], [#allocation0]
          $region27: #{reverse.7} parent=23 // loop_header_branch
            %43 = sbr.rel (%p41) target = $region31
          $region28: #{reverse.7} parent=23 // loop_body
            %v47 = vld [vmem:[%s45] sm:$0xff]
            %48 = vst [vmem:[%s46] sm:$0xff] %v47
            %v49 = vld [vmem:[%s45 + $0x8] sm:$0xff]
            %50 = vst [vmem:[%s46 + $0x8] sm:$0xff] %v49
            %v51 = vld [vmem:[%s45 + $0x10] sm:$0xff]
            %52 = vst [vmem:[%s46 + $0x10] sm:$0xff] %v51
            %v53 = vld [vmem:[%s45 + $0x18] sm:$0xff]
            %54 = vst [vmem:[%s46 + $0x18] sm:$0xff] %v53
            %v55 = vld [vmem:[%s45 + $0x20] sm:$0xff]
            %56 = vst [vmem:[%s46 + $0x20] sm:$0xff] %v55
            %v57 = vld [vmem:[%s45 + $0x28] sm:$0xff]
            %58 = vst [vmem:[%s46 + $0x28] sm:$0xff] %v57
            %v59 = vld [vmem:[%s45 + $0x30] sm:$0xff]
            %60 = vst [vmem:[%s46 + $0x30] sm:$0xff] %v59
            %v61 = vld [vmem:[%s45 + $0x38] sm:$0xff]
            %62 = vst [vmem:[%s46 + $0x38] sm:$0xff] %v61
          $region29: #{reverse.7} parent=23 // loop_footer
            %s44 = sadd.s32 1, %s40
          $region30: #{reverse.7} parent=23 // loop_footer_branch
            %39 = sbr.rel target = $region26
          $region31: #{reverse.7} parent=23 // loop_exit
            _
        $region24: #{reverse.7} parent=8 // pred_fallthru
          _
        // Predicated region
        $region32: #{reverse.7} parent=8 // pred_check
          _
        $region33: #{reverse.7} parent=8 // pred_check_branch
          %64 = sbr.rel target = $region35
        $region34: #{reverse.7} parent=8 // pred_region
          _
        $region35: #{reverse.7} parent=8 // pred_fallthru
          _
      $region9: #{reverse.7} parent=4 // pred_fallthru
        _
      // Predicated region
      $region10: #{reverse.7} parent=4 // pred_check
        _
      $region11: #{reverse.7} parent=4 // pred_check_branch
        %10 = sbr.rel target = $region13
      $region12: #{reverse.7} parent=4 // pred_region
        %s12 = ssub.s32 256, 1
        loop: start=0, step=1, limit=1
        $region14: #{reverse.7} parent=12 // loop_pre_header
          _
        $region15: #{reverse.7} parent=12 // loop_header
          %s14 = sphi 0, %s18
          %p15 = scmp.ge.s32.totalorder %s14, 1
          %s19 = sphi %s0, %s0
          %s20 = sphi [#allocation0], [#allocation0]
        $region16: #{reverse.7} parent=12 // loop_header_branch
          %17 = sbr.rel (%p15) target = $region20
        $region17: #{reverse.7} parent=12 // loop_body
          %v21 = vld [vmem:[%s19] sm:%s12]
          %22 = vst [vmem:[%s20] sm:%s12] %v21
          %v23 = vld [vmem:[%s19 + $0x8] sm:%s12]
          %24 = vst [vmem:[%s20 + $0x8] sm:%s12] %v23
          %v25 = vld [vmem:[%s19 + $0x10] sm:%s12]
          %26 = vst [vmem:[%s20 + $0x10] sm:%s12] %v25
          %v27 = vld [vmem:[%s19 + $0x18] sm:%s12]
          %28 = vst [vmem:[%s20 + $0x18] sm:%s12] %v27
          %v29 = vld [vmem:[%s19 + $0x20] sm:%s12]
          %30 = vst [vmem:[%s20 + $0x20] sm:%s12] %v29
          %v31 = vld [vmem:[%s19 + $0x28] sm:%s12]
          %32 = vst [vmem:[%s20 + $0x28] sm:%s12] %v31
          %v33 = vld [vmem:[%s19 + $0x30] sm:%s12]
          %34 = vst [vmem:[%s20 + $0x30] sm:%s12] %v33
          %v35 = vld [vmem:[%s19 + $0x38] sm:%s12]
          %36 = vst [vmem:[%s20 + $0x38] sm:%s12] %v35
        $region18: #{reverse.7} parent=12 // loop_footer
          %s18 = sadd.s32 1, %s14
        $region19: #{reverse.7} parent=12 // loop_footer_branch
          %13 = sbr.rel target = $region15
        $region20: #{reverse.7} parent=12 // loop_exit
          _
      $region13: #{reverse.7} parent=4 // pred_fallthru
        _
    $region5: #{reverse.7} parent=1 // pred_fallthru
      _
    %65 = vnop
    %v66 = vld [vmem:[#allocation0] sm:$0xff]
    %67 = vperm.xlu0 %4, %v66
    %v68 = vpop.permute.xlu0 %67
    %69 = vst [vmem:[#allocation1] sm:$0xff] %v68
    %s70 = scalar_lea.vmem [#allocation1], 8
    %s71 = scalar_lea.vmem [#allocation0], 8
    %v72 = vld [vmem:[%s71] sm:$0xff]
    %73 = vperm.xlu0 %4, %v72
    %v74 = vpop.permute.xlu0 %73
    %75 = vst [vmem:[%s70] sm:$0xff] %v74
    %s76 = scalar_lea.vmem [#allocation1], 16
    %s77 = scalar_lea.vmem [#allocation0], 16
    %v78 = vld [vmem:[%s77] sm:$0xff]
    %79 = vperm.xlu0 %4, %v78
    %v80 = vpop.permute.xlu0 %79
    %81 = vst [vmem:[%s76] sm:$0xff] %v80
    %s82 = scalar_lea.vmem [#allocation1], 24
    %s83 = scalar_lea.vmem [#allocation0], 24
    %v84 = vld [vmem:[%s83] sm:$0xff]
    %85 = vperm.xlu0 %4, %v84
    %v86 = vpop.permute.xlu0 %85
    %87 = vst [vmem:[%s82] sm:$0xff] %v86
    %s88 = scalar_lea.vmem [#allocation1], 32
    %s89 = scalar_lea.vmem [#allocation0], 32
    %v90 = vld [vmem:[%s89] sm:$0xff]
    %91 = vperm.xlu0 %4, %v90
    %v92 = vpop.permute.xlu0 %91
    %93 = vst [vmem:[%s88] sm:$0xff] %v92
    %s94 = scalar_lea.vmem [#allocation1], 40
    %s95 = scalar_lea.vmem [#allocation0], 40
    %v96 = vld [vmem:[%s95] sm:$0xff]
    %97 = vperm.xlu0 %4, %v96
    %v98 = vpop.permute.xlu0 %97
    %99 = vst [vmem:[%s94] sm:$0xff] %v98
    %s100 = scalar_lea.vmem [#allocation1], 48
    %s101 = scalar_lea.vmem [#allocation0], 48
    %v102 = vld [vmem:[%s101] sm:$0xff]
    %103 = vperm.xlu0 %4, %v102
    %v104 = vpop.permute.xlu0 %103
    %105 = vst [vmem:[%s100] sm:$0xff] %v104
    %s106 = scalar_lea.vmem [#allocation1], 56
    %s107 = scalar_lea.vmem [#allocation0], 56
    %v108 = vld [vmem:[%s107] sm:$0xff]
    %109 = vperm.xlu0 %4, %v108
    %v110 = vpop.permute.xlu0 %109
    %111 = vst [vmem:[%s106] sm:$0xff] %v110
    // Predicated region
    $region36: #{reverse.7} parent=1 // pred_check
      _
    $region37: #{reverse.7} parent=1 // pred_check_branch
      %113 = sbr.rel (0) target = $region39
    $region38: #{reverse.7} parent=1 // pred_region
      // Predicated region
      $region40: #{reverse.7} parent=38 // pred_check
        _
      $region41: #{reverse.7} parent=38 // pred_check_branch
        %115 = sbr.rel (0) target = $region43
      $region42: #{reverse.7} parent=38 // pred_region
        // Predicated region
        $region55: #{reverse.7} parent=42 // pred_check
          _
        $region56: #{reverse.7} parent=42 // pred_check_branch
          %145 = sbr.rel (0) target = $region58
        $region57: #{reverse.7} parent=42 // pred_region
          loop: start=0, step=1, limit=1
          $region59: #{reverse.7} parent=57 // loop_pre_header
            _
          $region60: #{reverse.7} parent=57 // loop_header
            %s147 = sphi 0, %s151
            %p148 = scmp.ge.s32.totalorder %s147, 1
            %s152 = sphi [#allocation1], [#allocation1]
            %s153 = sphi %s1, %s1
          $region61: #{reverse.7} parent=57 // loop_header_branch
            %150 = sbr.rel (%p148) target = $region65
          $region62: #{reverse.7} parent=57 // loop_body
            %v154 = vld [vmem:[%s152] sm:$0xff]
            %155 = vst [vmem:[%s153] sm:$0xff] %v154
            %v156 = vld [vmem:[%s152 + $0x8] sm:$0xff]
            %157 = vst [vmem:[%s153 + $0x8] sm:$0xff] %v156
            %v158 = vld [vmem:[%s152 + $0x10] sm:$0xff]
            %159 = vst [vmem:[%s153 + $0x10] sm:$0xff] %v158
            %v160 = vld [vmem:[%s152 + $0x18] sm:$0xff]
            %161 = vst [vmem:[%s153 + $0x18] sm:$0xff] %v160
            %v162 = vld [vmem:[%s152 + $0x20] sm:$0xff]
            %163 = vst [vmem:[%s153 + $0x20] sm:$0xff] %v162
            %v164 = vld [vmem:[%s152 + $0x28] sm:$0xff]
            %165 = vst [vmem:[%s153 + $0x28] sm:$0xff] %v164
            %v166 = vld [vmem:[%s152 + $0x30] sm:$0xff]
            %167 = vst [vmem:[%s153 + $0x30] sm:$0xff] %v166
            %v168 = vld [vmem:[%s152 + $0x38] sm:$0xff]
            %169 = vst [vmem:[%s153 + $0x38] sm:$0xff] %v168
          $region63: #{reverse.7} parent=57 // loop_footer
            %s151 = sadd.s32 1, %s147
          $region64: #{reverse.7} parent=57 // loop_footer_branch
            %146 = sbr.rel target = $region60
          $region65: #{reverse.7} parent=57 // loop_exit
            _
        $region58: #{reverse.7} parent=42 // pred_fallthru
          _
        // Predicated region
        $region66: #{reverse.7} parent=42 // pred_check
          _
        $region67: #{reverse.7} parent=42 // pred_check_branch
          %171 = sbr.rel target = $region69
        $region68: #{reverse.7} parent=42 // pred_region
          _
        $region69: #{reverse.7} parent=42 // pred_fallthru
          _
      $region43: #{reverse.7} parent=38 // pred_fallthru
        _
      // Predicated region
      $region44: #{reverse.7} parent=38 // pred_check
        _
      $region45: #{reverse.7} parent=38 // pred_check_branch
        %117 = sbr.rel target = $region47
      $region46: #{reverse.7} parent=38 // pred_region
        %s119 = ssub.s32 256, 1
        loop: start=0, step=1, limit=1
        $region48: #{reverse.7} parent=46 // loop_pre_header
          _
        $region49: #{reverse.7} parent=46 // loop_header
          %s121 = sphi 0, %s125
          %p122 = scmp.ge.s32.totalorder %s121, 1
          %s126 = sphi [#allocation1], [#allocation1]
          %s127 = sphi %s1, %s1
        $region50: #{reverse.7} parent=46 // loop_header_branch
          %124 = sbr.rel (%p122) target = $region54
        $region51: #{reverse.7} parent=46 // loop_body
          %v128 = vld [vmem:[%s126] sm:%s119]
          %129 = vst [vmem:[%s127] sm:%s119] %v128
          %v130 = vld [vmem:[%s126 + $0x8] sm:%s119]
          %131 = vst [vmem:[%s127 + $0x8] sm:%s119] %v130
          %v132 = vld [vmem:[%s126 + $0x10] sm:%s119]
          %133 = vst [vmem:[%s127 + $0x10] sm:%s119] %v132
          %v134 = vld [vmem:[%s126 + $0x18] sm:%s119]
          %135 = vst [vmem:[%s127 + $0x18] sm:%s119] %v134
          %v136 = vld [vmem:[%s126 + $0x20] sm:%s119]
          %137 = vst [vmem:[%s127 + $0x20] sm:%s119] %v136
          %v138 = vld [vmem:[%s126 + $0x28] sm:%s119]
          %139 = vst [vmem:[%s127 + $0x28] sm:%s119] %v138
          %v140 = vld [vmem:[%s126 + $0x30] sm:%s119]
          %141 = vst [vmem:[%s127 + $0x30] sm:%s119] %v140
          %v142 = vld [vmem:[%s126 + $0x38] sm:%s119]
          %143 = vst [vmem:[%s127 + $0x38] sm:%s119] %v142
        $region52: #{reverse.7} parent=46 // loop_footer
          %s125 = sadd.s32 1, %s121
        $region53: #{reverse.7} parent=46 // loop_footer_branch
          %120 = sbr.rel target = $region49
        $region54: #{reverse.7} parent=46 // loop_exit
          _
      $region47: #{reverse.7} parent=38 // pred_fallthru
        _
    $region39: #{reverse.7} parent=1 // pred_fallthru
      _
    %172 = vnop

// kernel: _lambda_.22
$region0: #{_lambda_.22}
  #allocation0 [shape = 'u32[]', space=smem, size = 0x4, offset = 0x4, fixed_abs, tag = 'smem constant byte address 0x4 - core index']
  #allocation1 [shape = 'u32[72,128]{1,0:T(1,128)}', space=vmem, size = 0x9000, scoped, tag = 'internal scratch']
  %s0 = inlined_call_operand.vmem [shape: f32[2,16,32], index: 0, kind: input, shape index: {}]
  %s1 = inlined_call_operand.vmem [shape: f32[2,16,32], index: 1, kind: input, shape index: {}]
  %s2 = inlined_call_operand.vmem [shape: bf16[32,32], index: 2, kind: input, shape index: {}]
  %s3 = inlined_call_operand.vmem [shape: f32[1,32], index: 3, kind: input, shape index: {}]
  %s4 = inlined_call_operand.vmem [shape: f32[16,16], index: 4, kind: input, shape index: {}]
  %s5 = inlined_call_operand.vmem [shape: f32[2,16,32], index: 5, kind: output, shape index: {}]
  %s6 = sld [smem:[#allocation0]]
  $region53: #{_lambda_.22} parent=0
    _
  %s8 = ssub.s32 1, %s6
  %s9 = scalar_select 0, %s8, %s6
  loop: start=0, step=1, limit=4
  $region2: #{_lambda_.22} parent=0 // loop_pre_header
    _
  $region3: #{_lambda_.22} parent=0 // loop_header
    %s11 = sphi 0, %s15
    %p12 = scmp.ge.s32.totalorder %s11, 4
    %s21 = sphi 0, %s23
    %s24 = sphi 0, %s21
    %s25 = sphi 0, %s24
    %s41 = sphi 0, %s25
    %s47 = sphi 0, %s49
    %s50 = sphi 0, %s47
    %s51 = sphi 0, %s50
    %s67 = sphi 0, %s51
    %s71 = sphi 0, %s71
    %s73 = sphi 0, %s71
    %s74 = sphi 0, %s73
    %s88 = sphi 0, %s74
    %s92 = sphi 0, %s92
    %s94 = sphi 0, %s92
    %s95 = sphi 0, %s94
    %s109 = sphi 0, %s95
    %s113 = sphi 0, %s113
    %s115 = sphi 0, %s113
    %s116 = sphi 0, %s115
    %s130 = sphi 0, %s116
    %s136 = sphi 0, %s138
    %s139 = sphi 0, %s136
    %s140 = sphi 0, %s139
    %s156 = sphi 0, %s140
  $region4: #{_lambda_.22} parent=0 // loop_header_branch
    %14 = sbr.rel (%p12) target = $region8
  $region5: #{_lambda_.22} parent=0 // loop_body
    %s16 = ssub.s32 %s11, 1
    %s17 = ssub.s32 %s11, 2
    %s18 = sadd.s32 %s11, 1
    %s19 = ssub.s32 %s11, %s18
    %p20 = scmp.eq.s32.totalorder %s19, 0
    %s22 = sadd.s32 %s21, 1
    %s23 = scalar_select %p20, %s21, %s22
    %p26 = pneg %p20
    %p27 = scmp.eq.s32.totalorder %s11, 1
    %p28 = por %p26, %p27
    %p29 = scmp.ne.s32.totalorder %s21, %s24
    %p30 = scmp.eq.s32.totalorder %s11, 0
    %p31 = por %p29, %p30
    %p32 = scmp.ne.s32.totalorder %s21, %s24
    %p33 = scmp.eq.s32.totalorder %s16, 1
    %p34 = por %p32, %p33
    %p35 = scmp.ne.s32.totalorder %s24, %s25
    %p36 = scmp.eq.s32.totalorder %s16, 0
    %p37 = por %p35, %p36
    %p38 = scmp.ne.s32.totalorder %s24, %s25
    %p39 = scmp.eq.s32.totalorder %s17, 1
    %p40 = por %p38, %p39
    %p42 = scmp.ne.s32.totalorder %s25, %s41
    %p43 = scmp.eq.s32.totalorder %s17, 0
    %p44 = por %p42, %p43
    %s45 = ssub.s32 %s11, %s18
    %p46 = scmp.eq.s32.totalorder %s45, 0
    %s48 = sadd.s32 %s47, 1
    %s49 = scalar_select %p46, %s47, %s48
    %p52 = pneg %p46
    %p53 = scmp.eq.s32.totalorder %s11, 1
    %p54 = por %p52, %p53
    %p55 = scmp.ne.s32.totalorder %s47, %s50
    %p56 = scmp.eq.s32.totalorder %s11, 0
    %p57 = por %p55, %p56
    %p58 = scmp.ne.s32.totalorder %s47, %s50
    %p59 = scmp.eq.s32.totalorder %s16, 1
    %p60 = por %p58, %p59
    %p61 = scmp.ne.s32.totalorder %s50, %s51
    %p62 = scmp.eq.s32.totalorder %s16, 0
    %p63 = por %p61, %p62
    %p64 = scmp.ne.s32.totalorder %s50, %s51
    %p65 = scmp.eq.s32.totalorder %s17, 1
    %p66 = por %p64, %p65
    %p68 = scmp.ne.s32.totalorder %s51, %s67
    %p69 = scmp.eq.s32.totalorder %s17, 0
    %p70 = por %p68, %p69
    %s72 = sadd.s32 %s71, 1
    %p75 = scmp.eq.s32.totalorder %s11, 1
    %p76 = scmp.ne.s32.totalorder %s71, %s73
    %p77 = scmp.eq.s32.totalorder %s11, 0
    %p78 = por %p76, %p77
    %p79 = scmp.ne.s32.totalorder %s71, %s73
    %p80 = scmp.eq.s32.totalorder %s16, 1
    %p81 = por %p79, %p80
    %p82 = scmp.ne.s32.totalorder %s73, %s74
    %p83 = scmp.eq.s32.totalorder %s16, 0
    %p84 = por %p82, %p83
    %p85 = scmp.ne.s32.totalorder %s73, %s74
    %p86 = scmp.eq.s32.totalorder %s17, 1
    %p87 = por %p85, %p86
    %p89 = scmp.ne.s32.totalorder %s74, %s88
    %p90 = scmp.eq.s32.totalorder %s17, 0
    %p91 = por %p89, %p90
    %s93 = sadd.s32 %s92, 1
    %p96 = scmp.eq.s32.totalorder %s11, 1
    %p97 = scmp.ne.s32.totalorder %s92, %s94
    %p98 = scmp.eq.s32.totalorder %s11, 0
    %p99 = por %p97, %p98
    %p100 = scmp.ne.s32.totalorder %s92, %s94
    %p101 = scmp.eq.s32.totalorder %s16, 1
    %p102 = por %p100, %p101
    %p103 = scmp.ne.s32.totalorder %s94, %s95
    %p104 = scmp.eq.s32.totalorder %s16, 0
    %p105 = por %p103, %p104
    %p106 = scmp.ne.s32.totalorder %s94, %s95
    %p107 = scmp.eq.s32.totalorder %s17, 1
    %p108 = por %p106, %p107
    %p110 = scmp.ne.s32.totalorder %s95, %s109
    %p111 = scmp.eq.s32.totalorder %s17, 0
    %p112 = por %p110, %p111
    %s114 = sadd.s32 %s113, 1
    %p117 = scmp.eq.s32.totalorder %s11, 1
    %p118 = scmp.ne.s32.totalorder %s113, %s115
    %p119 = scmp.eq.s32.totalorder %s11, 0
    %p120 = por %p118, %p119
    %p121 = scmp.ne.s32.totalorder %s113, %s115
    %p122 = scmp.eq.s32.totalorder %s16, 1
    %p123 = por %p121, %p122
    %p124 = scmp.ne.s32.totalorder %s115, %s116
    %p125 = scmp.eq.s32.totalorder %s16, 0
    %p126 = por %p124, %p125
    %p127 = scmp.ne.s32.totalorder %s115, %s116
    %p128 = scmp.eq.s32.totalorder %s17, 1
    %p129 = por %p127, %p128
    %p131 = scmp.ne.s32.totalorder %s116, %s130
    %p132 = scmp.eq.s32.totalorder %s17, 0
    %p133 = por %p131, %p132
    %s134 = ssub.s32 %s11, %s18
    %p135 = scmp.eq.s32.totalorder %s134, 0
    %s137 = sadd.s32 %s136, 1
    %s138 = scalar_select %p135, %s136, %s137
    %p141 = pneg %p135
    %p142 = scmp.eq.s32.totalorder %s11, 1
    %p143 = por %p141, %p142
    %p144 = scmp.ne.s32.totalorder %s136, %s139
    %p145 = scmp.eq.s32.totalorder %s11, 0
    %p146 = por %p144, %p145
    %p147 = scmp.ne.s32.totalorder %s136, %s139
    %p148 = scmp.eq.s32.totalorder %s16, 1
    %p149 = por %p147, %p148
    %p150 = scmp.ne.s32.totalorder %s139, %s140
    %p151 = scmp.eq.s32.totalorder %s16, 0
    %p152 = por %p150, %p151
    %p153 = scmp.ne.s32.totalorder %s139, %s140
    %p154 = scmp.eq.s32.totalorder %s17, 1
    %p155 = por %p153, %p154
    %p157 = scmp.ne.s32.totalorder %s140, %s156
    %p158 = scmp.eq.s32.totalorder %s17, 0
    %p159 = por %p157, %p158
    %p160 = scmp.le.s32.totalorder 1, %s11
    %p161 = scmp.lt.s32.totalorder %s11, 3
    %p162 = pnand %p160, %p161
    %p163 = pneg %p162
    // Predicated region
    $region9: #{_lambda_.22} parent=5 // pred_check
      _
    $region10: #{_lambda_.22} parent=5 // pred_check_branch
      %165 = sbr.rel (%p162) target = $region12
    $region11: #{_lambda_.22} parent=5 // pred_region
      %s166 = ssub.s32 %s11, 1
      // Predicated region
      $region13: #{_lambda_.22} parent=11 // pred_check
        %p167 = pneg %p84
      $region14: #{_lambda_.22} parent=11 // pred_check_branch
        %169 = sbr.rel (%p167) target = $region16
      $region15: #{_lambda_.22} parent=11 // pred_region
        _
      $region16: #{_lambda_.22} parent=11 // pred_fallthru
        _
      // Predicated region
      $region17: #{_lambda_.22} parent=11 // pred_check
        %p170 = pneg %p105
      $region18: #{_lambda_.22} parent=11 // pred_check_branch
        %172 = sbr.rel (%p170) target = $region20
      $region19: #{_lambda_.22} parent=11 // pred_region
        _
      $region20: #{_lambda_.22} parent=11 // pred_fallthru
        _
      // Predicated region
      $region21: #{_lambda_.22} parent=11 // pred_check
        %p173 = pneg %p126
      $region22: #{_lambda_.22} parent=11 // pred_check_branch
        %175 = sbr.rel (%p173) target = $region24
      $region23: #{_lambda_.22} parent=11 // pred_region
        _
      $region24: #{_lambda_.22} parent=11 // pred_fallthru
        _
    $region12: #{_lambda_.22} parent=5 // pred_fallthru
      _
    %p176 = scmp.lt.s32.totalorder %s11, 2
    // Predicated region
    $region25: #{_lambda_.22} parent=5 // pred_check
      %p177 = pneg %p176
    $region26: #{_lambda_.22} parent=5 // pred_check_branch
      %179 = sbr.rel (%p177) target = $region28
    $region27: #{_lambda_.22} parent=5 // pred_region
      // Predicated region
      $region29: #{_lambda_.22} parent=27 // pred_check
        %p180 = pneg %p31
      $region30: #{_lambda_.22} parent=27 // pred_check_branch
        %182 = sbr.rel (%p180) target = $region32
      $region31: #{_lambda_.22} parent=27 // pred_region
        %p183 = scmp.lt.s32.totalorder %s11, 1
        %s184 = scalar_select %p183, %s11, 1
        %s185 = smul.addr %s184, 2
        %s186 = smul.addr %s185, 8
        %s187 = scalar_lea.vmem %s0, %s186
      $region32: #{_lambda_.22} parent=27 // pred_fallthru
        _
      // Predicated region
      $region33: #{_lambda_.22} parent=27 // pred_check
        %p188 = pneg %p57
      $region34: #{_lambda_.22} parent=27 // pred_check_branch
        %190 = sbr.rel (%p188) target = $region36
      $region35: #{_lambda_.22} parent=27 // pred_region
        %p191 = scmp.lt.s32.totalorder %s11, 1
        %s192 = scalar_select %p191, %s11, 1
        %s193 = smul.addr %s192, 2
        %s194 = smul.addr %s193, 8
        %s195 = scalar_lea.vmem %s1, %s194
      $region36: #{_lambda_.22} parent=27 // pred_fallthru
        _
    $region28: #{_lambda_.22} parent=5 // pred_fallthru
      _
    %p196 = scmp.le.s32.totalorder 1, %s11
    %p197 = scmp.lt.s32.totalorder %s11, 3
    %p198 = pnand %p196, %p197
    %p199 = pneg %p198
    // Predicated region
    $region37: #{_lambda_.22} parent=5 // pred_check
      _
    $region38: #{_lambda_.22} parent=5 // pred_check_branch
      %201 = sbr.rel (%p198) target = $region40
    $region39: #{_lambda_.22} parent=5 // pred_region
      %s202 = ssub.s32 %s11, 1
      %p203 = scmp.lt.s32.totalorder %s16, 1
      %s204 = scalar_select %p203, %s16, 1
      %s205 = smul.addr %s204, 2
      %s206 = smul.addr %s205, 8
      %s207 = scalar_lea.vmem %s0, %s206
      %p208 = pneg %p37
      %p209 = pneg %p34
      %p210 = scmp.lt.s32.totalorder %s16, 1
      %s211 = scalar_select %p210, %s16, 1
      %s212 = smul.addr %s211, 2
      %s213 = smul.addr %s212, 8
      %s214 = scalar_lea.vmem %s1, %s213
      %p215 = pneg %p63
      %p216 = pneg %p60
      %p217 = pneg %p84
      %p218 = pneg %p81
      %p219 = pneg %p105
      %p220 = pneg %p102
      %p221 = pneg %p126
      %p222 = pneg %p123
      %p223 = pneg %p152
      %p224 = pneg %p149
      %p225 = scmp.lt.s32.totalorder %s16, 1
      %s226 = scalar_select %p225, %s16, 1
      %s227 = smul.addr %s226, 2
      %s228 = smul.addr %s227, 8
      %s229 = scalar_lea.vmem %s5, %s228
      %p230 = scmp.lt.s32.totalorder %s16, 1
      %s231 = scalar_select %p230, %s16, 1
      %s232 = smul.addr %s231, 2
      %s233 = smul.addr %s232, 8
      %s234 = scalar_lea.vmem %s0, %s233
      %p235 = scmp.lt.s32.totalorder %s16, 1
      %s236 = scalar_select %p235, %s16, 1
      %s237 = smul.addr %s236, 2
      %s238 = smul.addr %s237, 8
      %s239 = scalar_lea.vmem %s1, %s238
      %p240 = scmp.lt.s32.totalorder %s16, 1
      %s241 = scalar_select %p240, %s16, 1
      %s242 = smul.addr %s241, 2
      %s243 = smul.addr %s242, 8
      %s244 = scalar_lea.vmem %s5, %s243
      %v246 = vld [vmem:[%s234] sm:$0xff]
      %v247 = vld [vmem:[%s234 + $0x8] sm:$0xff]
      %v248 = vpack.c.bf16 %v247, %v246
      %v249 = vld [vmem:[%s2] sm:$0xf]
      %v250 = vld [vmem:[%s2 + $0x4] sm:$0xf]
      %v251 = vld [vmem:[%s2 + $0x8] sm:$0xf]
      %v252 = vld [vmem:[%s2 + $0xc] sm:$0xf]
      %v253 = vld [vmem:[%s3] sm:$0x1]
      %v255 = vperm.slane %v253, 0
      %v261 = vunpack.c.l.b16 %v249
      %v262 = vunpack.c.l.b16 %v250
      %v263 = vunpack.c.l.b16 %v251
      %v264 = vunpack.c.l.b16 %v252
      %v265 = vpack.c.b16 %v262, %v261
      %v266 = vpack.c.b16 %v264, %v263
      %vm269 = vcmask 261120
      %v271 = vsel %vm269, %v248, 0
      %273 = vmatpush.bf16.msra.mxu0 0
      %274 = vmatpush.bf16.msra.mxu0 0
      %275 = vmatpush.bf16.msra.mxu0 0
      %276 = vmatpush.bf16.msra.mxu0 0
      %277 = vmatpush.bf16.msra.mxu0 0
      %278 = vmatpush.bf16.msra.mxu0 0
      %279 = vmatpush.bf16.msra.mxu0 %v266
      %280 = vmatpush.bf16.msra.mxu0 %v265
      %281 = vmatmul.bf16.gmra.mxu0 %v271
      %v282 = vpop.f32.mrf.mxu0
      %v283 = vadd.f32 %v255, %v282
      %v284 = vpop.f32.mrf.mxu0
      %v285 = vadd.f32 %v255, %v284
      %286 = vdwg.mxu0
      %v287 = vld [vmem:[%s239] sm:$0xff]
      %v288 = vld [vmem:[%s239 + $0x8] sm:$0xff]
      %v289 = vadd.f32 %v287, %v283
      %v290 = vadd.f32 %v288, %v285
      %v291 = vld [vmem:[%s4] sm:$0xff]
      %v292 = vld [vmem:[%s4 + $0x8] sm:$0xff]
      %vm293 = vcmask 130048
      %v295 = vsel %vm293, %v291, 0
      %v298 = vsel %vm293, %v292, 0
      %300 = vmatpush.msra.mxu0 0.0
      %301 = vmatpush.msra.mxu0 0.0
      %302 = vmatpush.msra.mxu0 0.0
      %303 = vmatpush.msra.mxu0 0.0
      %304 = vmatpush.msra.mxu0 0.0
      %305 = vmatpush.msra.mxu0 0.0
      %306 = vmatpush.msra.mxu0 0.0
      %307 = vmatpush.msra.mxu0 0.0
      %308 = vmatpush.msra.mxu0 0.0
      %309 = vmatpush.msra.mxu0 0.0
      %310 = vmatpush.msra.mxu0 0.0
      %311 = vmatpush.msra.mxu0 0.0
      %312 = vmatpush.msra.mxu0 0.0
      %313 = vmatpush.msra.mxu0 0.0
      %314 = vmatpush.msra.mxu0 %v290
      %315 = vmatpush.msra.mxu0 %v289
      %316 = vmatmul.f32.gmra.mxu0 %v295
      %v317 = vpop.f32.mrf.mxu0
      %v318 = vadd.f32 0.0, %v317
      %319 = vmatmul.f32.gmra.mxu0 %v298
      %v320 = vpop.f32.mrf.mxu0
      %v321 = vadd.f32 0.0, %v320
      %322 = vdwg.mxu0
      %v323 = vsub.f32 %v289, %v318
      %v324 = vsub.f32 %v290, %v321
      %325 = vst.msk [vmem:[%s244] sm:$0xff] %vm269, %v323
      %326 = vst.msk [vmem:[%s244 + $0x8] sm:$0xff] %vm269, %v324
      %p327 = scmp.lt.s32.totalorder %s16, 1
      %s328 = scalar_select %p327, %s16, 1
      %s329 = smul.addr %s328, 2
      %s330 = smul.addr %s329, 8
      %s331 = scalar_lea.vmem %s5, %s330
      // Predicated region
      $region41: #{_lambda_.22} parent=39 // pred_check
        %p332 = pneg %p149
      $region42: #{_lambda_.22} parent=39 // pred_check_branch
        %334 = sbr.rel (%p332) target = $region44
      $region43: #{_lambda_.22} parent=39 // pred_region
        _
      $region44: #{_lambda_.22} parent=39 // pred_fallthru
        _
    $region40: #{_lambda_.22} parent=5 // pred_fallthru
      _
    %p335 = scmp.le.s32.totalorder 2, %s11
    // Predicated region
    $region45: #{_lambda_.22} parent=5 // pred_check
      %p336 = pneg %p335
    $region46: #{_lambda_.22} parent=5 // pred_check_branch
      %338 = sbr.rel (%p336) target = $region48
    $region47: #{_lambda_.22} parent=5 // pred_region
      %s339 = ssub.s32 %s11, 2
      // Predicated region
      $region49: #{_lambda_.22} parent=47 // pred_check
        %p340 = pneg %p155
      $region50: #{_lambda_.22} parent=47 // pred_check_branch
        %342 = sbr.rel (%p340) target = $region52
      $region51: #{_lambda_.22} parent=47 // pred_region
        %p343 = scmp.lt.s32.totalorder %s17, 1
        %s344 = scalar_select %p343, %s17, 1
        %s345 = smul.addr %s344, 2
        %s346 = smul.addr %s345, 8
        %s347 = scalar_lea.vmem %s5, %s346
      $region52: #{_lambda_.22} parent=47 // pred_fallthru
        _
    $region48: #{_lambda_.22} parent=5 // pred_fallthru
      _
  $region6: #{_lambda_.22} parent=0 // loop_footer
    %s15 = sadd.s32 1, %s11
  $region7: #{_lambda_.22} parent=0 // loop_footer_branch
    %10 = sbr.rel target = $region3
  $region8: #{_lambda_.22} parent=0 // loop_exit
    _

// kernel: _lambda_.18
$region0: #{_lambda_.18}
  #allocation0 [shape = 'u32[]', space=smem, size = 0x4, offset = 0x4, fixed_abs, tag = 'smem constant byte address 0x4 - core index']
  #allocation1 [shape = 'u32[72,128]{1,0:T(1,128)}', space=vmem, size = 0x9000, scoped, tag = 'internal scratch']
  %s0 = inlined_call_operand.vmem [shape: f32[2,16,32], index: 0, kind: input, shape index: {}]
  %s1 = inlined_call_operand.vmem [shape: f32[2,16,32], index: 1, kind: input, shape index: {}]
  %s2 = inlined_call_operand.vmem [shape: bf16[32,32], index: 2, kind: input, shape index: {}]
  %s3 = inlined_call_operand.vmem [shape: f32[1,32], index: 3, kind: input, shape index: {}]
  %s4 = inlined_call_operand.vmem [shape: f32[16,16], index: 4, kind: input, shape index: {}]
  %s5 = inlined_call_operand.vmem [shape: f32[2,16,32], index: 5, kind: output, shape index: {0}]
  %s6 = inlined_call_operand.vmem [shape: f32[2,16,32], index: 6, kind: output, shape index: {1}]
  %7 = xla_tuple %s5, %s6
  %s8 = sld [smem:[#allocation0]]
  $region61: #{_lambda_.18} parent=0
    _
  %s10 = ssub.s32 1, %s8
  %s11 = scalar_select 0, %s10, %s8
  loop: start=0, step=1, limit=4
  $region2: #{_lambda_.18} parent=0 // loop_pre_header
    _
  $region3: #{_lambda_.18} parent=0 // loop_header
    %s13 = sphi 0, %s17
    %p14 = scmp.ge.s32.totalorder %s13, 4
    %s23 = sphi 0, %s25
    %s26 = sphi 0, %s23
    %s27 = sphi 0, %s26
    %s43 = sphi 0, %s27
    %s49 = sphi 0, %s51
    %s52 = sphi 0, %s49
    %s53 = sphi 0, %s52
    %s69 = sphi 0, %s53
    %s73 = sphi 0, %s73
    %s75 = sphi 0, %s73
    %s76 = sphi 0, %s75
    %s90 = sphi 0, %s76
    %s94 = sphi 0, %s94
    %s96 = sphi 0, %s94
    %s97 = sphi 0, %s96
    %s111 = sphi 0, %s97
    %s115 = sphi 0, %s115
    %s117 = sphi 0, %s115
    %s118 = sphi 0, %s117
    %s132 = sphi 0, %s118
    %s138 = sphi 0, %s140
    %s141 = sphi 0, %s138
    %s142 = sphi 0, %s141
    %s158 = sphi 0, %s142
    %s164 = sphi 0, %s166
    %s167 = sphi 0, %s164
    %s168 = sphi 0, %s167
    %s184 = sphi 0, %s168
  $region4: #{_lambda_.18} parent=0 // loop_header_branch
    %16 = sbr.rel (%p14) target = $region8
  $region5: #{_lambda_.18} parent=0 // loop_body
    %s18 = ssub.s32 %s13, 1
    %s19 = ssub.s32 %s13, 2
    %s20 = sadd.s32 %s13, 1
    %s21 = ssub.s32 %s13, %s20
    %p22 = scmp.eq.s32.totalorder %s21, 0
    %s24 = sadd.s32 %s23, 1
    %s25 = scalar_select %p22, %s23, %s24
    %p28 = pneg %p22
    %p29 = scmp.eq.s32.totalorder %s13, 1
    %p30 = por %p28, %p29
    %p31 = scmp.ne.s32.totalorder %s23, %s26
    %p32 = scmp.eq.s32.totalorder %s13, 0
    %p33 = por %p31, %p32
    %p34 = scmp.ne.s32.totalorder %s23, %s26
    %p35 = scmp.eq.s32.totalorder %s18, 1
    %p36 = por %p34, %p35
    %p37 = scmp.ne.s32.totalorder %s26, %s27
    %p38 = scmp.eq.s32.totalorder %s18, 0
    %p39 = por %p37, %p38
    %p40 = scmp.ne.s32.totalorder %s26, %s27
    %p41 = scmp.eq.s32.totalorder %s19, 1
    %p42 = por %p40, %p41
    %p44 = scmp.ne.s32.totalorder %s27, %s43
    %p45 = scmp.eq.s32.totalorder %s19, 0
    %p46 = por %p44, %p45
    %s47 = ssub.s32 %s13, %s20
    %p48 = scmp.eq.s32.totalorder %s47, 0
    %s50 = sadd.s32 %s49, 1
    %s51 = scalar_select %p48, %s49, %s50
    %p54 = pneg %p48
    %p55 = scmp.eq.s32.totalorder %s13, 1
    %p56 = por %p54, %p55
    %p57 = scmp.ne.s32.totalorder %s49, %s52
    %p58 = scmp.eq.s32.totalorder %s13, 0
    %p59 = por %p57, %p58
    %p60 = scmp.ne.s32.totalorder %s49, %s52
    %p61 = scmp.eq.s32.totalorder %s18, 1
    %p62 = por %p60, %p61
    %p63 = scmp.ne.s32.totalorder %s52, %s53
    %p64 = scmp.eq.s32.totalorder %s18, 0
    %p65 = por %p63, %p64
    %p66 = scmp.ne.s32.totalorder %s52, %s53
    %p67 = scmp.eq.s32.totalorder %s19, 1
    %p68 = por %p66, %p67
    %p70 = scmp.ne.s32.totalorder %s53, %s69
    %p71 = scmp.eq.s32.totalorder %s19, 0
    %p72 = por %p70, %p71
    %s74 = sadd.s32 %s73, 1
    %p77 = scmp.eq.s32.totalorder %s13, 1
    %p78 = scmp.ne.s32.totalorder %s73, %s75
    %p79 = scmp.eq.s32.totalorder %s13, 0
    %p80 = por %p78, %p79
    %p81 = scmp.ne.s32.totalorder %s73, %s75
    %p82 = scmp.eq.s32.totalorder %s18, 1
    %p83 = por %p81, %p82
    %p84 = scmp.ne.s32.totalorder %s75, %s76
    %p85 = scmp.eq.s32.totalorder %s18, 0
    %p86 = por %p84, %p85
    %p87 = scmp.ne.s32.totalorder %s75, %s76
    %p88 = scmp.eq.s32.totalorder %s19, 1
    %p89 = por %p87, %p88
    %p91 = scmp.ne.s32.totalorder %s76, %s90
    %p92 = scmp.eq.s32.totalorder %s19, 0
    %p93 = por %p91, %p92
    %s95 = sadd.s32 %s94, 1
    %p98 = scmp.eq.s32.totalorder %s13, 1
    %p99 = scmp.ne.s32.totalorder %s94, %s96
    %p100 = scmp.eq.s32.totalorder %s13, 0
    %p101 = por %p99, %p100
    %p102 = scmp.ne.s32.totalorder %s94, %s96
    %p103 = scmp.eq.s32.totalorder %s18, 1
    %p104 = por %p102, %p103
    %p105 = scmp.ne.s32.totalorder %s96, %s97
    %p106 = scmp.eq.s32.totalorder %s18, 0
    %p107 = por %p105, %p106
    %p108 = scmp.ne.s32.totalorder %s96, %s97
    %p109 = scmp.eq.s32.totalorder %s19, 1
    %p110 = por %p108, %p109
    %p112 = scmp.ne.s32.totalorder %s97, %s111
    %p113 = scmp.eq.s32.totalorder %s19, 0
    %p114 = por %p112, %p113
    %s116 = sadd.s32 %s115, 1
    %p119 = scmp.eq.s32.totalorder %s13, 1
    %p120 = scmp.ne.s32.totalorder %s115, %s117
    %p121 = scmp.eq.s32.totalorder %s13, 0
    %p122 = por %p120, %p121
    %p123 = scmp.ne.s32.totalorder %s115, %s117
    %p124 = scmp.eq.s32.totalorder %s18, 1
    %p125 = por %p123, %p124
    %p126 = scmp.ne.s32.totalorder %s117, %s118
    %p127 = scmp.eq.s32.totalorder %s18, 0
    %p128 = por %p126, %p127
    %p129 = scmp.ne.s32.totalorder %s117, %s118
    %p130 = scmp.eq.s32.totalorder %s19, 1
    %p131 = por %p129, %p130
    %p133 = scmp.ne.s32.totalorder %s118, %s132
    %p134 = scmp.eq.s32.totalorder %s19, 0
    %p135 = por %p133, %p134
    %s136 = ssub.s32 %s13, %s20
    %p137 = scmp.eq.s32.totalorder %s136, 0
    %s139 = sadd.s32 %s138, 1
    %s140 = scalar_select %p137, %s138, %s139
    %p143 = pneg %p137
    %p144 = scmp.eq.s32.totalorder %s13, 1
    %p145 = por %p143, %p144
    %p146 = scmp.ne.s32.totalorder %s138, %s141
    %p147 = scmp.eq.s32.totalorder %s13, 0
    %p148 = por %p146, %p147
    %p149 = scmp.ne.s32.totalorder %s138, %s141
    %p150 = scmp.eq.s32.totalorder %s18, 1
    %p151 = por %p149, %p150
    %p152 = scmp.ne.s32.totalorder %s141, %s142
    %p153 = scmp.eq.s32.totalorder %s18, 0
    %p154 = por %p152, %p153
    %p155 = scmp.ne.s32.totalorder %s141, %s142
    %p156 = scmp.eq.s32.totalorder %s19, 1
    %p157 = por %p155, %p156
    %p159 = scmp.ne.s32.totalorder %s142, %s158
    %p160 = scmp.eq.s32.totalorder %s19, 0
    %p161 = por %p159, %p160
    %s162 = ssub.s32 %s13, %s20
    %p163 = scmp.eq.s32.totalorder %s162, 0
    %s165 = sadd.s32 %s164, 1
    %s166 = scalar_select %p163, %s164, %s165
    %p169 = pneg %p163
    %p170 = scmp.eq.s32.totalorder %s13, 1
    %p171 = por %p169, %p170
    %p172 = scmp.ne.s32.totalorder %s164, %s167
    %p173 = scmp.eq.s32.totalorder %s13, 0
    %p174 = por %p172, %p173
    %p175 = scmp.ne.s32.totalorder %s164, %s167
    %p176 = scmp.eq.s32.totalorder %s18, 1
    %p177 = por %p175, %p176
    %p178 = scmp.ne.s32.totalorder %s167, %s168
    %p179 = scmp.eq.s32.totalorder %s18, 0
    %p180 = por %p178, %p179
    %p181 = scmp.ne.s32.totalorder %s167, %s168
    %p182 = scmp.eq.s32.totalorder %s19, 1
    %p183 = por %p181, %p182
    %p185 = scmp.ne.s32.totalorder %s168, %s184
    %p186 = scmp.eq.s32.totalorder %s19, 0
    %p187 = por %p185, %p186
    %p188 = scmp.le.s32.totalorder 1, %s13
    %p189 = scmp.lt.s32.totalorder %s13, 3
    %p190 = pnand %p188, %p189
    %p191 = pneg %p190
    // Predicated region
    $region9: #{_lambda_.18} parent=5 // pred_check
      _
    $region10: #{_lambda_.18} parent=5 // pred_check_branch
      %193 = sbr.rel (%p190) target = $region12
    $region11: #{_lambda_.18} parent=5 // pred_region
      %s194 = ssub.s32 %s13, 1
      // Predicated region
      $region13: #{_lambda_.18} parent=11 // pred_check
        %p195 = pneg %p86
      $region14: #{_lambda_.18} parent=11 // pred_check_branch
        %197 = sbr.rel (%p195) target = $region16
      $region15: #{_lambda_.18} parent=11 // pred_region
        _
      $region16: #{_lambda_.18} parent=11 // pred_fallthru
        _
      // Predicated region
      $region17: #{_lambda_.18} parent=11 // pred_check
        %p198 = pneg %p107
      $region18: #{_lambda_.18} parent=11 // pred_check_branch
        %200 = sbr.rel (%p198) target = $region20
      $region19: #{_lambda_.18} parent=11 // pred_region
        _
      $region20: #{_lambda_.18} parent=11 // pred_fallthru
        _
      // Predicated region
      $region21: #{_lambda_.18} parent=11 // pred_check
        %p201 = pneg %p128
      $region22: #{_lambda_.18} parent=11 // pred_check_branch
        %203 = sbr.rel (%p201) target = $region24
      $region23: #{_lambda_.18} parent=11 // pred_region
        _
      $region24: #{_lambda_.18} parent=11 // pred_fallthru
        _
    $region12: #{_lambda_.18} parent=5 // pred_fallthru
      _
    %p204 = scmp.lt.s32.totalorder %s13, 2
    // Predicated region
    $region25: #{_lambda_.18} parent=5 // pred_check
      %p205 = pneg %p204
    $region26: #{_lambda_.18} parent=5 // pred_check_branch
      %207 = sbr.rel (%p205) target = $region28
    $region27: #{_lambda_.18} parent=5 // pred_region
      // Predicated region
      $region29: #{_lambda_.18} parent=27 // pred_check
        %p208 = pneg %p33
      $region30: #{_lambda_.18} parent=27 // pred_check_branch
        %210 = sbr.rel (%p208) target = $region32
      $region31: #{_lambda_.18} parent=27 // pred_region
        %p211 = scmp.lt.s32.totalorder %s13, 1
        %s212 = scalar_select %p211, %s13, 1
        %s213 = smul.addr %s212, 2
        %s214 = smul.addr %s213, 8
        %s215 = scalar_lea.vmem %s0, %s214
      $region32: #{_lambda_.18} parent=27 // pred_fallthru
        _
      // Predicated region
      $region33: #{_lambda_.18} parent=27 // pred_check
        %p216 = pneg %p59
      $region34: #{_lambda_.18} parent=27 // pred_check_branch
        %218 = sbr.rel (%p216) target = $region36
      $region35: #{_lambda_.18} parent=27 // pred_region
        %p219 = scmp.lt.s32.totalorder %s13, 1
        %s220 = scalar_select %p219, %s13, 1
        %s221 = smul.addr %s220, 2
        %s222 = smul.addr %s221, 8
        %s223 = scalar_lea.vmem %s1, %s222
      $region36: #{_lambda_.18} parent=27 // pred_fallthru
        _
    $region28: #{_lambda_.18} parent=5 // pred_fallthru
      _
    %p224 = scmp.le.s32.totalorder 1, %s13
    %p225 = scmp.lt.s32.totalorder %s13, 3
    %p226 = pnand %p224, %p225
    %p227 = pneg %p226
    // Predicated region
    $region37: #{_lambda_.18} parent=5 // pred_check
      _
    $region38: #{_lambda_.18} parent=5 // pred_check_branch
      %229 = sbr.rel (%p226) target = $region40
    $region39: #{_lambda_.18} parent=5 // pred_region
      %s230 = ssub.s32 %s13, 1
      %p231 = scmp.lt.s32.totalorder %s18, 1
      %s232 = scalar_select %p231, %s18, 1
      %s233 = smul.addr %s232, 2
      %s234 = smul.addr %s233, 8
      %s235 = scalar_lea.vmem %s0, %s234
      %p236 = pneg %p39
      %p237 = pneg %p36
      %p238 = scmp.lt.s32.totalorder %s18, 1
      %s239 = scalar_select %p238, %s18, 1
      %s240 = smul.addr %s239, 2
      %s241 = smul.addr %s240, 8
      %s242 = scalar_lea.vmem %s1, %s241
      %p243 = pneg %p65
      %p244 = pneg %p62
      %p245 = pneg %p86
      %p246 = pneg %p83
      %p247 = pneg %p107
      %p248 = pneg %p104
      %p249 = pneg %p128
      %p250 = pneg %p125
      %p251 = pneg %p154
      %p252 = pneg %p151
      %p253 = scmp.lt.s32.totalorder %s18, 1
      %s254 = scalar_select %p253, %s18, 1
      %s255 = smul.addr %s254, 2
      %s256 = smul.addr %s255, 8
      %s257 = scalar_lea.vmem %s5, %s256
      %p258 = pneg %p180
      %p259 = pneg %p177
      %p260 = scmp.lt.s32.totalorder %s18, 1
      %s261 = scalar_select %p260, %s18, 1
      %s262 = smul.addr %s261, 2
      %s263 = smul.addr %s262, 8
      %s264 = scalar_lea.vmem %s6, %s263
      %p265 = scmp.lt.s32.totalorder %s18, 1
      %s266 = scalar_select %p265, %s18, 1
      %s267 = smul.addr %s266, 2
      %s268 = smul.addr %s267, 8
      %s269 = scalar_lea.vmem %s0, %s268
      %p270 = scmp.lt.s32.totalorder %s18, 1
      %s271 = scalar_select %p270, %s18, 1
      %s272 = smul.addr %s271, 2
      %s273 = smul.addr %s272, 8
      %s274 = scalar_lea.vmem %s1, %s273
      %p275 = scmp.lt.s32.totalorder %s18, 1
      %s276 = scalar_select %p275, %s18, 1
      %s277 = smul.addr %s276, 2
      %s278 = smul.addr %s277, 8
      %s279 = scalar_lea.vmem %s5, %s278
      %p280 = scmp.lt.s32.totalorder %s18, 1
      %s281 = scalar_select %p280, %s18, 1
      %s282 = smul.addr %s281, 2
      %s283 = smul.addr %s282, 8
      %s284 = scalar_lea.vmem %s6, %s283
      %v286 = vld [vmem:[%s269] sm:$0xff]
      %v287 = vld [vmem:[%s269 + $0x8] sm:$0xff]
      %v288 = vpack.c.bf16 %v287, %v286
      %v289 = vld [vmem:[%s2] sm:$0xf]
      %v290 = vld [vmem:[%s2 + $0x4] sm:$0xf]
      %v291 = vld [vmem:[%s2 + $0x8] sm:$0xf]
      %v292 = vld [vmem:[%s2 + $0xc] sm:$0xf]
      %v293 = vld [vmem:[%s3] sm:$0x1]
      %v295 = vperm.slane %v293, 0
      %v301 = vunpack.c.l.b16 %v289
      %v302 = vunpack.c.l.b16 %v290
      %v303 = vunpack.c.l.b16 %v291
      %v304 = vunpack.c.l.b16 %v292
      %v305 = vpack.c.b16 %v302, %v301
      %v306 = vpack.c.b16 %v304, %v303
      %vm309 = vcmask 261120
      %v311 = vsel %vm309, %v288, 0
      %313 = vmatpush.bf16.msra.mxu0 0
      %314 = vmatpush.bf16.msra.mxu0 0
      %315 = vmatpush.bf16.msra.mxu0 0
      %316 = vmatpush.bf16.msra.mxu0 0
      %317 = vmatpush.bf16.msra.mxu0 0
      %318 = vmatpush.bf16.msra.mxu0 0
      %319 = vmatpush.bf16.msra.mxu0 %v306
      %320 = vmatpush.bf16.msra.mxu0 %v305
      %321 = vmatmul.bf16.gmra.mxu0 %v311
      %v322 = vpop.f32.mrf.mxu0
      %v323 = vadd.f32 %v295, %v322
      %v324 = vpop.f32.mrf.mxu0
      %v325 = vadd.f32 %v295, %v324
      %326 = vdwg.mxu0
      %v327 = vld [vmem:[%s274] sm:$0xff]
      %v328 = vld [vmem:[%s274 + $0x8] sm:$0xff]
      %v329 = vadd.f32 %v327, %v323
      %v330 = vadd.f32 %v328, %v325
      %v331 = vld [vmem:[%s4] sm:$0xff]
      %v332 = vld [vmem:[%s4 + $0x8] sm:$0xff]
      %vm333 = vcmask 130048
      %v335 = vsel %vm333, %v331, 0
      %v338 = vsel %vm333, %v332, 0
      %340 = vmatpush.msra.mxu0 0.0
      %341 = vmatpush.msra.mxu0 0.0
      %342 = vmatpush.msra.mxu0 0.0
      %343 = vmatpush.msra.mxu0 0.0
      %344 = vmatpush.msra.mxu0 0.0
      %345 = vmatpush.msra.mxu0 0.0
      %346 = vmatpush.msra.mxu0 0.0
      %347 = vmatpush.msra.mxu0 0.0
      %348 = vmatpush.msra.mxu0 0.0
      %349 = vmatpush.msra.mxu0 0.0
      %350 = vmatpush.msra.mxu0 0.0
      %351 = vmatpush.msra.mxu0 0.0
      %352 = vmatpush.msra.mxu0 0.0
      %353 = vmatpush.msra.mxu0 0.0
      %354 = vmatpush.msra.mxu0 %v330
      %355 = vmatpush.msra.mxu0 %v329
      %356 = vmatmul.f32.gmra.mxu0 %v335
      %v357 = vpop.f32.mrf.mxu0
      %v358 = vadd.f32 0.0, %v357
      %359 = vmatmul.f32.gmra.mxu0 %v338
      %v360 = vpop.f32.mrf.mxu0
      %v361 = vadd.f32 0.0, %v360
      %362 = vdwg.mxu0
      %v363 = vsub.f32 %v329, %v358
      %v364 = vsub.f32 %v330, %v361
      %365 = vst.msk [vmem:[%s279] sm:$0xff] %vm309, %v363
      %366 = vst.msk [vmem:[%s279 + $0x8] sm:$0xff] %vm309, %v364
      %367 = vst.msk [vmem:[%s284] sm:$0xff] %vm309, %v358
      %368 = vst.msk [vmem:[%s284 + $0x8] sm:$0xff] %vm309, %v361
      %p369 = scmp.lt.s32.totalorder %s18, 1
      %s370 = scalar_select %p369, %s18, 1
      %s371 = smul.addr %s370, 2
      %s372 = smul.addr %s371, 8
      %s373 = scalar_lea.vmem %s5, %s372
      %p374 = scmp.lt.s32.totalorder %s18, 1
      %s375 = scalar_select %p374, %s18, 1
      %s376 = smul.addr %s375, 2
      %s377 = smul.addr %s376, 8
      %s378 = scalar_lea.vmem %s6, %s377
      // Predicated region
      $region41: #{_lambda_.18} parent=39 // pred_check
        %p379 = pneg %p151
      $region42: #{_lambda_.18} parent=39 // pred_check_branch
        %381 = sbr.rel (%p379) target = $region44
      $region43: #{_lambda_.18} parent=39 // pred_region
        _
      $region44: #{_lambda_.18} parent=39 // pred_fallthru
        _
      // Predicated region
      $region45: #{_lambda_.18} parent=39 // pred_check
        %p382 = pneg %p177
      $region46: #{_lambda_.18} parent=39 // pred_check_branch
        %384 = sbr.rel (%p382) target = $region48
      $region47: #{_lambda_.18} parent=39 // pred_region
        _
      $region48: #{_lambda_.18} parent=39 // pred_fallthru
        _
    $region40: #{_lambda_.18} parent=5 // pred_fallthru
      _
    %p385 = scmp.le.s32.totalorder 2, %s13
    // Predicated region
    $region49: #{_lambda_.18} parent=5 // pred_check
      %p386 = pneg %p385
    $region50: #{_lambda_.18} parent=5 // pred_check_branch
      %388 = sbr.rel (%p386) target = $region52
    $region51: #{_lambda_.18} parent=5 // pred_region
      %s389 = ssub.s32 %s13, 2
      // Predicated region
      $region53: #{_lambda_.18} parent=51 // pred_check
        %p390 = pneg %p157
      $region54: #{_lambda_.18} parent=51 // pred_check_branch
        %392 = sbr.rel (%p390) target = $region56
      $region55: #{_lambda_.18} parent=51 // pred_region
        %p393 = scmp.lt.s32.totalorder %s19, 1
        %s394 = scalar_select %p393, %s19, 1
        %s395 = smul.addr %s394, 2
        %s396 = smul.addr %s395, 8
        %s397 = scalar_lea.vmem %s5, %s396
      $region56: #{_lambda_.18} parent=51 // pred_fallthru
        _
      // Predicated region
      $region57: #{_lambda_.18} parent=51 // pred_check
        %p398 = pneg %p183
      $region58: #{_lambda_.18} parent=51 // pred_check_branch
        %400 = sbr.rel (%p398) target = $region60
      $region59: #{_lambda_.18} parent=51 // pred_region
        %p401 = scmp.lt.s32.totalorder %s19, 1
        %s402 = scalar_select %p401, %s19, 1
        %s403 = smul.addr %s402, 2
        %s404 = smul.addr %s403, 8
        %s405 = scalar_lea.vmem %s6, %s404
      $region60: #{_lambda_.18} parent=51 // pred_fallthru
        _
    $region52: #{_lambda_.18} parent=5 // pred_fallthru
      _
  $region6: #{_lambda_.18} parent=0 // loop_footer
    %s17 = sadd.s32 1, %s13
  $region7: #{_lambda_.18} parent=0 // loop_footer_branch
    %12 = sbr.rel target = $region3
  $region8: #{_lambda_.18} parent=0 // loop_exit
    _

// kernel: _lambda_.23
$region0: #{_lambda_.23}
  #allocation0 [shape = 'u32[]', space=smem, size = 0x4, offset = 0x4, fixed_abs, tag = 'smem constant byte address 0x4 - core index']
  #allocation1 [shape = 'u32[72,128]{1,0:T(1,128)}', space=vmem, size = 0x9000, scoped, tag = 'internal scratch']
  %s0 = inlined_call_operand.vmem [shape: f32[2,16,32], index: 0, kind: input, shape index: {}]
  %s1 = inlined_call_operand.vmem [shape: bf16[32,64], index: 1, kind: input, shape index: {}]
  %s2 = inlined_call_operand.vmem [shape: bf16[64,32], index: 2, kind: input, shape index: {}]
  %s3 = inlined_call_operand.vmem [shape: f32[16,16], index: 3, kind: input, shape index: {}]
  %s4 = inlined_call_operand.vmem [shape: f32[2,16,32], index: 4, kind: output, shape index: {}]
  %s5 = sld [smem:[#allocation0]]
  $region49: #{_lambda_.23} parent=0
    _
  %s7 = ssub.s32 1, %s5
  %s8 = scalar_select 0, %s7, %s5
  loop: start=0, step=1, limit=4
  $region2: #{_lambda_.23} parent=0 // loop_pre_header
    _
  $region3: #{_lambda_.23} parent=0 // loop_header
    %s10 = sphi 0, %s14
    %p11 = scmp.ge.s32.totalorder %s10, 4
    %s20 = sphi 0, %s22
    %s23 = sphi 0, %s20
    %s24 = sphi 0, %s23
    %s40 = sphi 0, %s24
    %s44 = sphi 0, %s44
    %s46 = sphi 0, %s44
    %s47 = sphi 0, %s46
    %s61 = sphi 0, %s47
    %s65 = sphi 0, %s65
    %s67 = sphi 0, %s65
    %s68 = sphi 0, %s67
    %s82 = sphi 0, %s68
    %s86 = sphi 0, %s86
    %s88 = sphi 0, %s86
    %s89 = sphi 0, %s88
    %s103 = sphi 0, %s89
    %s109 = sphi 0, %s111
    %s112 = sphi 0, %s109
    %s113 = sphi 0, %s112
    %s129 = sphi 0, %s113
  $region4: #{_lambda_.23} parent=0 // loop_header_branch
    %13 = sbr.rel (%p11) target = $region8
  $region5: #{_lambda_.23} parent=0 // loop_body
    %s15 = ssub.s32 %s10, 1
    %s16 = ssub.s32 %s10, 2
    %s17 = sadd.s32 %s10, 1
    %s18 = ssub.s32 %s10, %s17
    %p19 = scmp.eq.s32.totalorder %s18, 0
    %s21 = sadd.s32 %s20, 1
    %s22 = scalar_select %p19, %s20, %s21
    %p25 = pneg %p19
    %p26 = scmp.eq.s32.totalorder %s10, 1
    %p27 = por %p25, %p26
    %p28 = scmp.ne.s32.totalorder %s20, %s23
    %p29 = scmp.eq.s32.totalorder %s10, 0
    %p30 = por %p28, %p29
    %p31 = scmp.ne.s32.totalorder %s20, %s23
    %p32 = scmp.eq.s32.totalorder %s15, 1
    %p33 = por %p31, %p32
    %p34 = scmp.ne.s32.totalorder %s23, %s24
    %p35 = scmp.eq.s32.totalorder %s15, 0
    %p36 = por %p34, %p35
    %p37 = scmp.ne.s32.totalorder %s23, %s24
    %p38 = scmp.eq.s32.totalorder %s16, 1
    %p39 = por %p37, %p38
    %p41 = scmp.ne.s32.totalorder %s24, %s40
    %p42 = scmp.eq.s32.totalorder %s16, 0
    %p43 = por %p41, %p42
    %s45 = sadd.s32 %s44, 1
    %p48 = scmp.eq.s32.totalorder %s10, 1
    %p49 = scmp.ne.s32.totalorder %s44, %s46
    %p50 = scmp.eq.s32.totalorder %s10, 0
    %p51 = por %p49, %p50
    %p52 = scmp.ne.s32.totalorder %s44, %s46
    %p53 = scmp.eq.s32.totalorder %s15, 1
    %p54 = por %p52, %p53
    %p55 = scmp.ne.s32.totalorder %s46, %s47
    %p56 = scmp.eq.s32.totalorder %s15, 0
    %p57 = por %p55, %p56
    %p58 = scmp.ne.s32.totalorder %s46, %s47
    %p59 = scmp.eq.s32.totalorder %s16, 1
    %p60 = por %p58, %p59
    %p62 = scmp.ne.s32.totalorder %s47, %s61
    %p63 = scmp.eq.s32.totalorder %s16, 0
    %p64 = por %p62, %p63
    %s66 = sadd.s32 %s65, 1
    %p69 = scmp.eq.s32.totalorder %s10, 1
    %p70 = scmp.ne.s32.totalorder %s65, %s67
    %p71 = scmp.eq.s32.totalorder %s10, 0
    %p72 = por %p70, %p71
    %p73 = scmp.ne.s32.totalorder %s65, %s67
    %p74 = scmp.eq.s32.totalorder %s15, 1
    %p75 = por %p73, %p74
    %p76 = scmp.ne.s32.totalorder %s67, %s68
    %p77 = scmp.eq.s32.totalorder %s15, 0
    %p78 = por %p76, %p77
    %p79 = scmp.ne.s32.totalorder %s67, %s68
    %p80 = scmp.eq.s32.totalorder %s16, 1
    %p81 = por %p79, %p80
    %p83 = scmp.ne.s32.totalorder %s68, %s82
    %p84 = scmp.eq.s32.totalorder %s16, 0
    %p85 = por %p83, %p84
    %s87 = sadd.s32 %s86, 1
    %p90 = scmp.eq.s32.totalorder %s10, 1
    %p91 = scmp.ne.s32.totalorder %s86, %s88
    %p92 = scmp.eq.s32.totalorder %s10, 0
    %p93 = por %p91, %p92
    %p94 = scmp.ne.s32.totalorder %s86, %s88
    %p95 = scmp.eq.s32.totalorder %s15, 1
    %p96 = por %p94, %p95
    %p97 = scmp.ne.s32.totalorder %s88, %s89
    %p98 = scmp.eq.s32.totalorder %s15, 0
    %p99 = por %p97, %p98
    %p100 = scmp.ne.s32.totalorder %s88, %s89
    %p101 = scmp.eq.s32.totalorder %s16, 1
    %p102 = por %p100, %p101
    %p104 = scmp.ne.s32.totalorder %s89, %s103
    %p105 = scmp.eq.s32.totalorder %s16, 0
    %p106 = por %p104, %p105
    %s107 = ssub.s32 %s10, %s17
    %p108 = scmp.eq.s32.totalorder %s107, 0
    %s110 = sadd.s32 %s109, 1
    %s111 = scalar_select %p108, %s109, %s110
    %p114 = pneg %p108
    %p115 = scmp.eq.s32.totalorder %s10, 1
    %p116 = por %p114, %p115
    %p117 = scmp.ne.s32.totalorder %s109, %s112
    %p118 = scmp.eq.s32.totalorder %s10, 0
    %p119 = por %p117, %p118
    %p120 = scmp.ne.s32.totalorder %s109, %s112
    %p121 = scmp.eq.s32.totalorder %s15, 1
    %p122 = por %p120, %p121
    %p123 = scmp.ne.s32.totalorder %s112, %s113
    %p124 = scmp.eq.s32.totalorder %s15, 0
    %p125 = por %p123, %p124
    %p126 = scmp.ne.s32.totalorder %s112, %s113
    %p127 = scmp.eq.s32.totalorder %s16, 1
    %p128 = por %p126, %p127
    %p130 = scmp.ne.s32.totalorder %s113, %s129
    %p131 = scmp.eq.s32.totalorder %s16, 0
    %p132 = por %p130, %p131
    %p133 = scmp.le.s32.totalorder 1, %s10
    %p134 = scmp.lt.s32.totalorder %s10, 3
    %p135 = pnand %p133, %p134
    %p136 = pneg %p135
    // Predicated region
    $region9: #{_lambda_.23} parent=5 // pred_check
      _
    $region10: #{_lambda_.23} parent=5 // pred_check_branch
      %138 = sbr.rel (%p135) target = $region12
    $region11: #{_lambda_.23} parent=5 // pred_region
      %s139 = ssub.s32 %s10, 1
      // Predicated region
      $region13: #{_lambda_.23} parent=11 // pred_check
        %p140 = pneg %p57
      $region14: #{_lambda_.23} parent=11 // pred_check_branch
        %142 = sbr.rel (%p140) target = $region16
      $region15: #{_lambda_.23} parent=11 // pred_region
        _
      $region16: #{_lambda_.23} parent=11 // pred_fallthru
        _
      // Predicated region
      $region17: #{_lambda_.23} parent=11 // pred_check
        %p143 = pneg %p78
      $region18: #{_lambda_.23} parent=11 // pred_check_branch
        %145 = sbr.rel (%p143) target = $region20
      $region19: #{_lambda_.23} parent=11 // pred_region
        _
      $region20: #{_lambda_.23} parent=11 // pred_fallthru
        _
      // Predicated region
      $region21: #{_lambda_.23} parent=11 // pred_check
        %p146 = pneg %p99
      $region22: #{_lambda_.23} parent=11 // pred_check_branch
        %148 = sbr.rel (%p146) target = $region24
      $region23: #{_lambda_.23} parent=11 // pred_region
        _
      $region24: #{_lambda_.23} parent=11 // pred_fallthru
        _
    $region12: #{_lambda_.23} parent=5 // pred_fallthru
      _
    %p149 = scmp.lt.s32.totalorder %s10, 2
    // Predicated region
    $region25: #{_lambda_.23} parent=5 // pred_check
      %p150 = pneg %p149
    $region26: #{_lambda_.23} parent=5 // pred_check_branch
      %152 = sbr.rel (%p150) target = $region28
    $region27: #{_lambda_.23} parent=5 // pred_region
      // Predicated region
      $region29: #{_lambda_.23} parent=27 // pred_check
        %p153 = pneg %p30
      $region30: #{_lambda_.23} parent=27 // pred_check_branch
        %155 = sbr.rel (%p153) target = $region32
      $region31: #{_lambda_.23} parent=27 // pred_region
        %p156 = scmp.lt.s32.totalorder %s10, 1
        %s157 = scalar_select %p156, %s10, 1
        %s158 = smul.addr %s157, 2
        %s159 = smul.addr %s158, 8
        %s160 = scalar_lea.vmem %s0, %s159
      $region32: #{_lambda_.23} parent=27 // pred_fallthru
        _
    $region28: #{_lambda_.23} parent=5 // pred_fallthru
      _
    %p161 = scmp.le.s32.totalorder 1, %s10
    %p162 = scmp.lt.s32.totalorder %s10, 3
    %p163 = pnand %p161, %p162
    %p164 = pneg %p163
    // Predicated region
    $region33: #{_lambda_.23} parent=5 // pred_check
      _
    $region34: #{_lambda_.23} parent=5 // pred_check_branch
      %166 = sbr.rel (%p163) target = $region36
    $region35: #{_lambda_.23} parent=5 // pred_region
      %s167 = ssub.s32 %s10, 1
      %p168 = scmp.lt.s32.totalorder %s15, 1
      %s169 = scalar_select %p168, %s15, 1
      %s170 = smul.addr %s169, 2
      %s171 = smul.addr %s170, 8
      %s172 = scalar_lea.vmem %s0, %s171
      %p173 = pneg %p36
      %p174 = pneg %p33
      %p175 = pneg %p57
      %p176 = pneg %p54
      %p177 = pneg %p78
      %p178 = pneg %p75
      %p179 = pneg %p99
      %p180 = pneg %p96
      %p181 = pneg %p125
      %p182 = pneg %p122
      %p183 = scmp.lt.s32.totalorder %s15, 1
      %s184 = scalar_select %p183, %s15, 1
      %s185 = smul.addr %s184, 2
      %s186 = smul.addr %s185, 8
      %s187 = scalar_lea.vmem %s4, %s186
      %p188 = scmp.lt.s32.totalorder %s15, 1
      %s189 = scalar_select %p188, %s15, 1
      %s190 = smul.addr %s189, 2
      %s191 = smul.addr %s190, 8
      %s192 = scalar_lea.vmem %s0, %s191
      %p193 = scmp.lt.s32.totalorder %s15, 1
      %s194 = scalar_select %p193, %s15, 1
      %s195 = smul.addr %s194, 2
      %s196 = smul.addr %s195, 8
      %s197 = scalar_lea.vmem %s4, %s196
      %v199 = vld [vmem:[%s192] sm:$0xff]
      %v200 = vld [vmem:[%s192 + $0x8] sm:$0xff]
      %v201 = vpack.c.bf16 %v200, %v199
      %v202 = vld [vmem:[%s1] sm:$0xf]
      %v203 = vld [vmem:[%s1 + $0x4] sm:$0xf]
      %v204 = vld [vmem:[%s1 + $0x8] sm:$0xf]
      %v205 = vld [vmem:[%s1 + $0xc] sm:$0xf]
      %v210 = vunpack.c.l.b16 %v202
      %v211 = vunpack.c.l.b16 %v203
      %v212 = vunpack.c.l.b16 %v204
      %v213 = vunpack.c.l.b16 %v205
      %v214 = vpack.c.b16 %v211, %v210
      %v215 = vpack.c.b16 %v213, %v212
      %vm218 = vcmask 261120
      %v220 = vsel %vm218, %v201, 0
      %222 = vmatpush.bf16.msra.mxu0 0
      %223 = vmatpush.bf16.msra.mxu0 0
      %224 = vmatpush.bf16.msra.mxu0 0
      %225 = vmatpush.bf16.msra.mxu0 0
      %226 = vmatpush.bf16.msra.mxu0 0
      %227 = vmatpush.bf16.msra.mxu0 0
      %228 = vmatpush.bf16.msra.mxu0 %v215
      %229 = vmatpush.bf16.msra.mxu0 %v214
      %230 = vmatmul.bf16.gmra.mxu0 %v220
      %v231 = vpop.f32.mrf.mxu0
      %v232 = vadd.f32 0.0, %v231
      %v233 = vpop.f32.mrf.mxu0
      %v234 = vadd.f32 0.0, %v233
      %235 = vdwg.mxu0
      %v236 = vmax.f32 %v232, 0.0
      %v237 = vmax.f32 %v234, 0.0
      %v238 = vpack.c.bf16 %v237, %v236
      %v239 = vld [vmem:[%s2] sm:$0xf]
      %v240 = vld [vmem:[%s2 + $0x4] sm:$0xf]
      %v241 = vld [vmem:[%s2 + $0x8] sm:$0xf]
      %v242 = vld [vmem:[%s2 + $0xc] sm:$0xf]
      %v243 = vld [vmem:[%s2 + $0x10] sm:$0xf]
      %v244 = vld [vmem:[%s2 + $0x14] sm:$0xf]
      %v245 = vld [vmem:[%s2 + $0x18] sm:$0xf]
      %v246 = vld [vmem:[%s2 + $0x1c] sm:$0xf]
      %v255 = vunpack.c.l.b16 %v239
      %v256 = vunpack.c.l.b16 %v240
      %v257 = vunpack.c.l.b16 %v241
      %v258 = vunpack.c.l.b16 %v242
      %v259 = vunpack.c.l.b16 %v243
      %v260 = vunpack.c.l.b16 %v244
      %v261 = vunpack.c.l.b16 %v245
      %v262 = vunpack.c.l.b16 %v246
      %v263 = vpack.c.b16 %v256, %v255
      %v264 = vpack.c.b16 %v258, %v257
      %v265 = vpack.c.b16 %v260, %v259
      %v266 = vpack.c.b16 %v262, %v261
      %vm271 = vcmask 523264
      %v273 = vsel %vm271, %v238, 0
      %275 = vmatpush.bf16.msra.mxu0 0
      %276 = vmatpush.bf16.msra.mxu0 0
      %277 = vmatpush.bf16.msra.mxu0 0
      %278 = vmatpush.bf16.msra.mxu0 0
      %279 = vmatpush.bf16.msra.mxu0 %v266
      %280 = vmatpush.bf16.msra.mxu0 %v265
      %281 = vmatpush.bf16.msra.mxu0 %v264
      %282 = vmatpush.bf16.msra.mxu0 %v263
      %283 = vmatmul.bf16.gmra.mxu0 %v273
      %v284 = vpop.f32.mrf.mxu0
      %v285 = vadd.f32 0.0, %v284
      %v286 = vpop.f32.mrf.mxu0
      %v287 = vadd.f32 0.0, %v286
      %288 = vdwg.mxu0
      %v289 = vadd.f32 %v199, %v285
      %v290 = vadd.f32 %v200, %v287
      %v291 = vld [vmem:[%s3] sm:$0xff]
      %v292 = vld [vmem:[%s3 + $0x8] sm:$0xff]
      %vm293 = vcmask 130048
      %v295 = vsel %vm293, %v291, 0
      %v298 = vsel %vm293, %v292, 0
      %300 = vmatpush.msra.mxu0 0.0
      %301 = vmatpush.msra.mxu0 0.0
      %302 = vmatpush.msra.mxu0 0.0
      %303 = vmatpush.msra.mxu0 0.0
      %304 = vmatpush.msra.mxu0 0.0
      %305 = vmatpush.msra.mxu0 0.0
      %306 = vmatpush.msra.mxu0 0.0
      %307 = vmatpush.msra.mxu0 0.0
      %308 = vmatpush.msra.mxu0 0.0
      %309 = vmatpush.msra.mxu0 0.0
      %310 = vmatpush.msra.mxu0 0.0
      %311 = vmatpush.msra.mxu0 0.0
      %312 = vmatpush.msra.mxu0 0.0
      %313 = vmatpush.msra.mxu0 0.0
      %314 = vmatpush.msra.mxu0 %v290
      %315 = vmatpush.msra.mxu0 %v289
      %316 = vmatmul.f32.gmra.mxu0 %v295
      %v317 = vpop.f32.mrf.mxu0
      %v318 = vadd.f32 0.0, %v317
      %319 = vmatmul.f32.gmra.mxu0 %v298
      %v320 = vpop.f32.mrf.mxu0
      %v321 = vadd.f32 0.0, %v320
      %322 = vdwg.mxu0
      %v323 = vsub.f32 %v289, %v318
      %v324 = vsub.f32 %v290, %v321
      %325 = vst.msk [vmem:[%s197] sm:$0xff] %vm218, %v323
      %326 = vst.msk [vmem:[%s197 + $0x8] sm:$0xff] %vm218, %v324
      %p327 = scmp.lt.s32.totalorder %s15, 1
      %s328 = scalar_select %p327, %s15, 1
      %s329 = smul.addr %s328, 2
      %s330 = smul.addr %s329, 8
      %s331 = scalar_lea.vmem %s4, %s330
      // Predicated region
      $region37: #{_lambda_.23} parent=35 // pred_check
        %p332 = pneg %p122
      $region38: #{_lambda_.23} parent=35 // pred_check_branch
        %334 = sbr.rel (%p332) target = $region40
      $region39: #{_lambda_.23} parent=35 // pred_region
        _
      $region40: #{_lambda_.23} parent=35 // pred_fallthru
        _
    $region36: #{_lambda_.23} parent=5 // pred_fallthru
      _
    %p335 = scmp.le.s32.totalorder 2, %s10
    // Predicated region
    $region41: #{_lambda_.23} parent=5 // pred_check
      %p336 = pneg %p335
    $region42: #{_lambda_.23} parent=5 // pred_check_branch
      %338 = sbr.rel (%p336) target = $region44
    $region43: #{_lambda_.23} parent=5 // pred_region
      %s339 = ssub.s32 %s10, 2
      // Predicated region
      $region45: #{_lambda_.23} parent=43 // pred_check
        %p340 = pneg %p128
      $region46: #{_lambda_.23} parent=43 // pred_check_branch
        %342 = sbr.rel (%p340) target = $region48
      $region47: #{_lambda_.23} parent=43 // pred_region
        %p343 = scmp.lt.s32.totalorder %s16, 1
        %s344 = scalar_select %p343, %s16, 1
        %s345 = smul.addr %s344, 2
        %s346 = smul.addr %s345, 8
        %s347 = scalar_lea.vmem %s4, %s346
      $region48: #{_lambda_.23} parent=43 // pred_fallthru
        _
    $region44: #{_lambda_.23} parent=5 // pred_fallthru
      _
  $region6: #{_lambda_.23} parent=0 // loop_footer
    %s14 = sadd.s32 1, %s10
  $region7: #{_lambda_.23} parent=0 // loop_footer_branch
    %9 = sbr.rel target = $region3
  $region8: #{_lambda_.23} parent=0 // loop_exit
    _

// kernel: _lambda_.24
$region0: #{_lambda_.24}
  #allocation0 [shape = 'u32[]', space=smem, size = 0x4, offset = 0x4, fixed_abs, tag = 'smem constant byte address 0x4 - core index']
  #allocation1 [shape = 'u32[72,128]{1,0:T(1,128)}', space=vmem, size = 0x9000, scoped, tag = 'internal scratch']
  %s0 = inlined_call_operand.vmem [shape: f32[2,16,32], index: 0, kind: input, shape index: {}]
  %s1 = inlined_call_operand.vmem [shape: f32[1,32], index: 1, kind: input, shape index: {}]
  %s2 = inlined_call_operand.vmem [shape: f32[1,32], index: 2, kind: input, shape index: {}]
  %s3 = inlined_call_operand.vmem [shape: f32[2,16,32], index: 3, kind: output, shape index: {}]
  %s4 = sld [smem:[#allocation0]]
  $region45: #{_lambda_.24} parent=0
    _
  %s6 = ssub.s32 1, %s4
  %s7 = scalar_select 0, %s6, %s4
  loop: start=0, step=1, limit=4
  $region2: #{_lambda_.24} parent=0 // loop_pre_header
    _
  $region3: #{_lambda_.24} parent=0 // loop_header
    %s9 = sphi 0, %s13
    %p10 = scmp.ge.s32.totalorder %s9, 4
    %s19 = sphi 0, %s21
    %s22 = sphi 0, %s19
    %s23 = sphi 0, %s22
    %s39 = sphi 0, %s23
    %s43 = sphi 0, %s43
    %s45 = sphi 0, %s43
    %s46 = sphi 0, %s45
    %s60 = sphi 0, %s46
    %s64 = sphi 0, %s64
    %s66 = sphi 0, %s64
    %s67 = sphi 0, %s66
    %s81 = sphi 0, %s67
    %s87 = sphi 0, %s89
    %s90 = sphi 0, %s87
    %s91 = sphi 0, %s90
    %s107 = sphi 0, %s91
  $region4: #{_lambda_.24} parent=0 // loop_header_branch
    %12 = sbr.rel (%p10) target = $region8
  $region5: #{_lambda_.24} parent=0 // loop_body
    %s14 = ssub.s32 %s9, 1
    %s15 = ssub.s32 %s9, 2
    %s16 = sadd.s32 %s9, 1
    %s17 = ssub.s32 %s9, %s16
    %p18 = scmp.eq.s32.totalorder %s17, 0
    %s20 = sadd.s32 %s19, 1
    %s21 = scalar_select %p18, %s19, %s20
    %p24 = pneg %p18
    %p25 = scmp.eq.s32.totalorder %s9, 1
    %p26 = por %p24, %p25
    %p27 = scmp.ne.s32.totalorder %s19, %s22
    %p28 = scmp.eq.s32.totalorder %s9, 0
    %p29 = por %p27, %p28
    %p30 = scmp.ne.s32.totalorder %s19, %s22
    %p31 = scmp.eq.s32.totalorder %s14, 1
    %p32 = por %p30, %p31
    %p33 = scmp.ne.s32.totalorder %s22, %s23
    %p34 = scmp.eq.s32.totalorder %s14, 0
    %p35 = por %p33, %p34
    %p36 = scmp.ne.s32.totalorder %s22, %s23
    %p37 = scmp.eq.s32.totalorder %s15, 1
    %p38 = por %p36, %p37
    %p40 = scmp.ne.s32.totalorder %s23, %s39
    %p41 = scmp.eq.s32.totalorder %s15, 0
    %p42 = por %p40, %p41
    %s44 = sadd.s32 %s43, 1
    %p47 = scmp.eq.s32.totalorder %s9, 1
    %p48 = scmp.ne.s32.totalorder %s43, %s45
    %p49 = scmp.eq.s32.totalorder %s9, 0
    %p50 = por %p48, %p49
    %p51 = scmp.ne.s32.totalorder %s43, %s45
    %p52 = scmp.eq.s32.totalorder %s14, 1
    %p53 = por %p51, %p52
    %p54 = scmp.ne.s32.totalorder %s45, %s46
    %p55 = scmp.eq.s32.totalorder %s14, 0
    %p56 = por %p54, %p55
    %p57 = scmp.ne.s32.totalorder %s45, %s46
    %p58 = scmp.eq.s32.totalorder %s15, 1
    %p59 = por %p57, %p58
    %p61 = scmp.ne.s32.totalorder %s46, %s60
    %p62 = scmp.eq.s32.totalorder %s15, 0
    %p63 = por %p61, %p62
    %s65 = sadd.s32 %s64, 1
    %p68 = scmp.eq.s32.totalorder %s9, 1
    %p69 = scmp.ne.s32.totalorder %s64, %s66
    %p70 = scmp.eq.s32.totalorder %s9, 0
    %p71 = por %p69, %p70
    %p72 = scmp.ne.s32.totalorder %s64, %s66
    %p73 = scmp.eq.s32.totalorder %s14, 1
    %p74 = por %p72, %p73
    %p75 = scmp.ne.s32.totalorder %s66, %s67
    %p76 = scmp.eq.s32.totalorder %s14, 0
    %p77 = por %p75, %p76
    %p78 = scmp.ne.s32.totalorder %s66, %s67
    %p79 = scmp.eq.s32.totalorder %s15, 1
    %p80 = por %p78, %p79
    %p82 = scmp.ne.s32.totalorder %s67, %s81
    %p83 = scmp.eq.s32.totalorder %s15, 0
    %p84 = por %p82, %p83
    %s85 = ssub.s32 %s9, %s16
    %p86 = scmp.eq.s32.totalorder %s85, 0
    %s88 = sadd.s32 %s87, 1
    %s89 = scalar_select %p86, %s87, %s88
    %p92 = pneg %p86
    %p93 = scmp.eq.s32.totalorder %s9, 1
    %p94 = por %p92, %p93
    %p95 = scmp.ne.s32.totalorder %s87, %s90
    %p96 = scmp.eq.s32.totalorder %s9, 0
    %p97 = por %p95, %p96
    %p98 = scmp.ne.s32.totalorder %s87, %s90
    %p99 = scmp.eq.s32.totalorder %s14, 1
    %p100 = por %p98, %p99
    %p101 = scmp.ne.s32.totalorder %s90, %s91
    %p102 = scmp.eq.s32.totalorder %s14, 0
    %p103 = por %p101, %p102
    %p104 = scmp.ne.s32.totalorder %s90, %s91
    %p105 = scmp.eq.s32.totalorder %s15, 1
    %p106 = por %p104, %p105
    %p108 = scmp.ne.s32.totalorder %s91, %s107
    %p109 = scmp.eq.s32.totalorder %s15, 0
    %p110 = por %p108, %p109
    %p111 = scmp.le.s32.totalorder 1, %s9
    %p112 = scmp.lt.s32.totalorder %s9, 3
    %p113 = pnand %p111, %p112
    %p114 = pneg %p113
    // Predicated region
    $region9: #{_lambda_.24} parent=5 // pred_check
      _
    $region10: #{_lambda_.24} parent=5 // pred_check_branch
      %116 = sbr.rel (%p113) target = $region12
    $region11: #{_lambda_.24} parent=5 // pred_region
      %s117 = ssub.s32 %s9, 1
      // Predicated region
      $region13: #{_lambda_.24} parent=11 // pred_check
        %p118 = pneg %p56
      $region14: #{_lambda_.24} parent=11 // pred_check_branch
        %120 = sbr.rel (%p118) target = $region16
      $region15: #{_lambda_.24} parent=11 // pred_region
        _
      $region16: #{_lambda_.24} parent=11 // pred_fallthru
        _
      // Predicated region
      $region17: #{_lambda_.24} parent=11 // pred_check
        %p121 = pneg %p77
      $region18: #{_lambda_.24} parent=11 // pred_check_branch
        %123 = sbr.rel (%p121) target = $region20
      $region19: #{_lambda_.24} parent=11 // pred_region
        _
      $region20: #{_lambda_.24} parent=11 // pred_fallthru
        _
    $region12: #{_lambda_.24} parent=5 // pred_fallthru
      _
    %p124 = scmp.lt.s32.totalorder %s9, 2
    // Predicated region
    $region21: #{_lambda_.24} parent=5 // pred_check
      %p125 = pneg %p124
    $region22: #{_lambda_.24} parent=5 // pred_check_branch
      %127 = sbr.rel (%p125) target = $region24
    $region23: #{_lambda_.24} parent=5 // pred_region
      // Predicated region
      $region25: #{_lambda_.24} parent=23 // pred_check
        %p128 = pneg %p29
      $region26: #{_lambda_.24} parent=23 // pred_check_branch
        %130 = sbr.rel (%p128) target = $region28
      $region27: #{_lambda_.24} parent=23 // pred_region
        %p131 = scmp.lt.s32.totalorder %s9, 1
        %s132 = scalar_select %p131, %s9, 1
        %s133 = smul.addr %s132, 2
        %s134 = smul.addr %s133, 8
        %s135 = scalar_lea.vmem %s0, %s134
      $region28: #{_lambda_.24} parent=23 // pred_fallthru
        _
    $region24: #{_lambda_.24} parent=5 // pred_fallthru
      _
    %p136 = scmp.le.s32.totalorder 1, %s9
    %p137 = scmp.lt.s32.totalorder %s9, 3
    %p138 = pnand %p136, %p137
    %p139 = pneg %p138
    // Predicated region
    $region29: #{_lambda_.24} parent=5 // pred_check
      _
    $region30: #{_lambda_.24} parent=5 // pred_check_branch
      %141 = sbr.rel (%p138) target = $region32
    $region31: #{_lambda_.24} parent=5 // pred_region
      %s142 = ssub.s32 %s9, 1
      %p143 = scmp.lt.s32.totalorder %s14, 1
      %s144 = scalar_select %p143, %s14, 1
      %s145 = smul.addr %s144, 2
      %s146 = smul.addr %s145, 8
      %s147 = scalar_lea.vmem %s0, %s146
      %p148 = pneg %p35
      %p149 = pneg %p32
      %p150 = pneg %p56
      %p151 = pneg %p53
      %p152 = pneg %p77
      %p153 = pneg %p74
      %p154 = pneg %p103
      %p155 = pneg %p100
      %p156 = scmp.lt.s32.totalorder %s14, 1
      %s157 = scalar_select %p156, %s14, 1
      %s158 = smul.addr %s157, 2
      %s159 = smul.addr %s158, 8
      %s160 = scalar_lea.vmem %s3, %s159
      %p161 = scmp.lt.s32.totalorder %s14, 1
      %s162 = scalar_select %p161, %s14, 1
      %s163 = smul.addr %s162, 2
      %s164 = smul.addr %s163, 8
      %s165 = scalar_lea.vmem %s0, %s164
      %p166 = scmp.lt.s32.totalorder %s14, 1
      %s167 = scalar_select %p166, %s14, 1
      %s168 = smul.addr %s167, 2
      %s169 = smul.addr %s168, 8
      %s170 = scalar_lea.vmem %s3, %s169
      %v171 = vld [vmem:[%s165] sm:$0xff]
      %v172 = vld [vmem:[%s165 + $0x8] sm:$0xff]
      %vm173 = vcmask 261120
      %v174 = vsel %vm173, %v171, 0.0
      %175 = vadd.xlane.f32.xlu0 %v174
      %v176 = vpop.xlane.xlu0 %175
      %v177 = vsel %vm173, %v172, 0.0
      %178 = vadd.xlane.f32.xlu0 %v177
      %v179 = vpop.xlane.xlu0 %178
      %v180 = vrcp.pop 32.0
      %v181 = vmul.f32 32.0, %v180
      %v182 = vsub.f32 1.0, %v181
      %v183 = vmul.f32 %v180, %v182
      %v184 = vadd.f32 %v180, %v183
      %vm185 = vweird.f32 %v180
      %v186 = vsel %vm185, %v180, %v184
      %v187 = vmul.f32 %v176, %v186
      %v188 = vmul.f32 %v179, %v186
      %v189 = vsub.f32 %v171, %v187
      %v190 = vsub.f32 %v172, %v188
      %v191 = vmul.f32 %v189, %v189
      %v192 = vmul.f32 %v190, %v190
      %v193 = vsel %vm173, %v191, 0.0
      %194 = vadd.xlane.f32.xlu0 %v193
      %v195 = vpop.xlane.xlu0 %194
      %v196 = vsel %vm173, %v192, 0.0
      %197 = vadd.xlane.f32.xlu0 %v196
      %v198 = vpop.xlane.xlu0 %197
      %v199 = vmul.f32 %v195, %v186
      %v200 = vmul.f32 %v198, %v186
      %v201 = vadd.f32 %v199, 1e-05
      %v202 = vadd.f32 %v200, 1e-05
      %v203 = vrsqrt.pop %v201
      %v204 = vmul.f32 %v203, %v201
      %v205 = vmul.f32 %v204, %v203
      %v206 = vmul.f32 0.5, %v205
      %v207 = vsub.f32 1.5, %v206
      %v208 = vmul.f32 %v203, %v207
      %vm209 = vweird.f32 %v201
      %vm210 = vweird.f32 %v203
      %vm211 = vmor %vm209, %vm210
      %v212 = vsel %vm211, %v203, %v208
      %v213 = vrsqrt.pop %v202
      %v214 = vmul.f32 %v213, %v202
      %v215 = vmul.f32 %v214, %v213
      %v216 = vmul.f32 0.5, %v215
      %v217 = vsub.f32 1.5, %v216
      %v218 = vmul.f32 %v213, %v217
      %vm219 = vweird.f32 %v202
      %vm220 = vweird.f32 %v213
      %vm221 = vmor %vm219, %vm220
      %v222 = vsel %vm221, %v213, %v218
      %v223 = vmul.f32 %v189, %v212
      %v224 = vmul.f32 %v190, %v222
      %v225 = vld [vmem:[%s1] sm:$0x1]
      %v227 = vperm.slane %v225, 0
      %v229 = vmul.f32 %v223, %v227
      %v230 = vmul.f32 %v224, %v227
      %v231 = vld [vmem:[%s2] sm:$0x1]
      %v233 = vperm.slane %v231, 0
      %v235 = vadd.f32 %v229, %v233
      %v236 = vadd.f32 %v230, %v233
      %v237 = vsel %vm173, %v235, 0.0
      %v238 = vsel %vm173, %v236, 0.0
      %v239 = vadd.f32 %v237, %v238
      %v240 = vrot.slane %v239, 4
      %v241 = vadd.f32 %v239, %v240
      %v242 = vrot.slane %v241, 2
      %v243 = vadd.f32 %v241, %v242
      %v244 = vrot.slane %v243, 1
      %v245 = vadd.f32 %v243, %v244
      %v246 = vrcp.pop 16.0
      %v247 = vmul.f32 16.0, %v246
      %v248 = vsub.f32 1.0, %v247
      %v249 = vmul.f32 %v246, %v248
      %v250 = vadd.f32 %v246, %v249
      %vm251 = vweird.f32 %v246
      %v252 = vsel %vm251, %v246, %v250
      %v253 = vmul.f32 %v245, %v252
      %v254 = vsub.f32 %v235, %v253
      %v255 = vsub.f32 %v236, %v253
      %256 = vst.msk [vmem:[%s170] sm:$0xff] %vm173, %v254
      %257 = vst.msk [vmem:[%s170 + $0x8] sm:$0xff] %vm173, %v255
      %p258 = scmp.lt.s32.totalorder %s14, 1
      %s259 = scalar_select %p258, %s14, 1
      %s260 = smul.addr %s259, 2
      %s261 = smul.addr %s260, 8
      %s262 = scalar_lea.vmem %s3, %s261
      // Predicated region
      $region33: #{_lambda_.24} parent=31 // pred_check
        %p263 = pneg %p100
      $region34: #{_lambda_.24} parent=31 // pred_check_branch
        %265 = sbr.rel (%p263) target = $region36
      $region35: #{_lambda_.24} parent=31 // pred_region
        _
      $region36: #{_lambda_.24} parent=31 // pred_fallthru
        _
    $region32: #{_lambda_.24} parent=5 // pred_fallthru
      _
    %p266 = scmp.le.s32.totalorder 2, %s9
    // Predicated region
    $region37: #{_lambda_.24} parent=5 // pred_check
      %p267 = pneg %p266
    $region38: #{_lambda_.24} parent=5 // pred_check_branch
      %269 = sbr.rel (%p267) target = $region40
    $region39: #{_lambda_.24} parent=5 // pred_region
      %s270 = ssub.s32 %s9, 2
      // Predicated region
      $region41: #{_lambda_.24} parent=39 // pred_check
        %p271 = pneg %p106
      $region42: #{_lambda_.24} parent=39 // pred_check_branch
        %273 = sbr.rel (%p271) target = $region44
      $region43: #{_lambda_.24} parent=39 // pred_region
        %p274 = scmp.lt.s32.totalorder %s15, 1
        %s275 = scalar_select %p274, %s15, 1
        %s276 = smul.addr %s275, 2
        %s277 = smul.addr %s276, 8
        %s278 = scalar_lea.vmem %s3, %s277
      $region44: #{_lambda_.24} parent=39 // pred_fallthru
        _
    $region40: #{_lambda_.24} parent=5 // pred_fallthru
      _
  $region6: #{_lambda_.24} parent=0 // loop_footer
    %s13 = sadd.s32 1, %s9
  $region7: #{_lambda_.24} parent=0 // loop_footer_branch
    %8 = sbr.rel target = $region3
  $region8: #{_lambda_.24} parent=0 // loop_exit
    _

// kernel: _lambda_.27
$region0: #{_lambda_.27}
  #allocation0 [shape = 'u32[]', space=smem, size = 0x4, offset = 0x4, fixed_abs, tag = 'smem constant byte address 0x4 - core index']
  #allocation1 [shape = 'u32[72,128]{1,0:T(1,128)}', space=vmem, size = 0x9000, scoped, tag = 'internal scratch']
  %s0 = inlined_call_operand.vmem [shape: f32[2,16,32], index: 0, kind: input, shape index: {}]
  %s1 = inlined_call_operand.vmem [shape: bf16[32,64], index: 1, kind: input, shape index: {}]
  %s2 = inlined_call_operand.vmem [shape: bf16[64,32], index: 2, kind: input, shape index: {}]
  %s3 = inlined_call_operand.vmem [shape: f32[16,16], index: 3, kind: input, shape index: {}]
  %s4 = inlined_call_operand.vmem [shape: f32[2,16,32], index: 4, kind: output, shape index: {0}]
  %s5 = inlined_call_operand.vmem [shape: f32[2,16,32], index: 5, kind: output, shape index: {1}]
  %6 = xla_tuple %s4, %s5
  %s7 = sld [smem:[#allocation0]]
  $region57: #{_lambda_.27} parent=0
    _
  %s9 = ssub.s32 1, %s7
  %s10 = scalar_select 0, %s9, %s7
  loop: start=0, step=1, limit=4
  $region2: #{_lambda_.27} parent=0 // loop_pre_header
    _
  $region3: #{_lambda_.27} parent=0 // loop_header
    %s12 = sphi 0, %s16
    %p13 = scmp.ge.s32.totalorder %s12, 4
    %s22 = sphi 0, %s24
    %s25 = sphi 0, %s22
    %s26 = sphi 0, %s25
    %s42 = sphi 0, %s26
    %s46 = sphi 0, %s46
    %s48 = sphi 0, %s46
    %s49 = sphi 0, %s48
    %s63 = sphi 0, %s49
    %s67 = sphi 0, %s67
    %s69 = sphi 0, %s67
    %s70 = sphi 0, %s69
    %s84 = sphi 0, %s70
    %s88 = sphi 0, %s88
    %s90 = sphi 0, %s88
    %s91 = sphi 0, %s90
    %s105 = sphi 0, %s91
    %s111 = sphi 0, %s113
    %s114 = sphi 0, %s111
    %s115 = sphi 0, %s114
    %s131 = sphi 0, %s115
    %s137 = sphi 0, %s139
    %s140 = sphi 0, %s137
    %s141 = sphi 0, %s140
    %s157 = sphi 0, %s141
  $region4: #{_lambda_.27} parent=0 // loop_header_branch
    %15 = sbr.rel (%p13) target = $region8
  $region5: #{_lambda_.27} parent=0 // loop_body
    %s17 = ssub.s32 %s12, 1
    %s18 = ssub.s32 %s12, 2
    %s19 = sadd.s32 %s12, 1
    %s20 = ssub.s32 %s12, %s19
    %p21 = scmp.eq.s32.totalorder %s20, 0
    %s23 = sadd.s32 %s22, 1
    %s24 = scalar_select %p21, %s22, %s23
    %p27 = pneg %p21
    %p28 = scmp.eq.s32.totalorder %s12, 1
    %p29 = por %p27, %p28
    %p30 = scmp.ne.s32.totalorder %s22, %s25
    %p31 = scmp.eq.s32.totalorder %s12, 0
    %p32 = por %p30, %p31
    %p33 = scmp.ne.s32.totalorder %s22, %s25
    %p34 = scmp.eq.s32.totalorder %s17, 1
    %p35 = por %p33, %p34
    %p36 = scmp.ne.s32.totalorder %s25, %s26
    %p37 = scmp.eq.s32.totalorder %s17, 0
    %p38 = por %p36, %p37
    %p39 = scmp.ne.s32.totalorder %s25, %s26
    %p40 = scmp.eq.s32.totalorder %s18, 1
    %p41 = por %p39, %p40
    %p43 = scmp.ne.s32.totalorder %s26, %s42
    %p44 = scmp.eq.s32.totalorder %s18, 0
    %p45 = por %p43, %p44
    %s47 = sadd.s32 %s46, 1
    %p50 = scmp.eq.s32.totalorder %s12, 1
    %p51 = scmp.ne.s32.totalorder %s46, %s48
    %p52 = scmp.eq.s32.totalorder %s12, 0
    %p53 = por %p51, %p52
    %p54 = scmp.ne.s32.totalorder %s46, %s48
    %p55 = scmp.eq.s32.totalorder %s17, 1
    %p56 = por %p54, %p55
    %p57 = scmp.ne.s32.totalorder %s48, %s49
    %p58 = scmp.eq.s32.totalorder %s17, 0
    %p59 = por %p57, %p58
    %p60 = scmp.ne.s32.totalorder %s48, %s49
    %p61 = scmp.eq.s32.totalorder %s18, 1
    %p62 = por %p60, %p61
    %p64 = scmp.ne.s32.totalorder %s49, %s63
    %p65 = scmp.eq.s32.totalorder %s18, 0
    %p66 = por %p64, %p65
    %s68 = sadd.s32 %s67, 1
    %p71 = scmp.eq.s32.totalorder %s12, 1
    %p72 = scmp.ne.s32.totalorder %s67, %s69
    %p73 = scmp.eq.s32.totalorder %s12, 0
    %p74 = por %p72, %p73
    %p75 = scmp.ne.s32.totalorder %s67, %s69
    %p76 = scmp.eq.s32.totalorder %s17, 1
    %p77 = por %p75, %p76
    %p78 = scmp.ne.s32.totalorder %s69, %s70
    %p79 = scmp.eq.s32.totalorder %s17, 0
    %p80 = por %p78, %p79
    %p81 = scmp.ne.s32.totalorder %s69, %s70
    %p82 = scmp.eq.s32.totalorder %s18, 1
    %p83 = por %p81, %p82
    %p85 = scmp.ne.s32.totalorder %s70, %s84
    %p86 = scmp.eq.s32.totalorder %s18, 0
    %p87 = por %p85, %p86
    %s89 = sadd.s32 %s88, 1
    %p92 = scmp.eq.s32.totalorder %s12, 1
    %p93 = scmp.ne.s32.totalorder %s88, %s90
    %p94 = scmp.eq.s32.totalorder %s12, 0
    %p95 = por %p93, %p94
    %p96 = scmp.ne.s32.totalorder %s88, %s90
    %p97 = scmp.eq.s32.totalorder %s17, 1
    %p98 = por %p96, %p97
    %p99 = scmp.ne.s32.totalorder %s90, %s91
    %p100 = scmp.eq.s32.totalorder %s17, 0
    %p101 = por %p99, %p100
    %p102 = scmp.ne.s32.totalorder %s90, %s91
    %p103 = scmp.eq.s32.totalorder %s18, 1
    %p104 = por %p102, %p103
    %p106 = scmp.ne.s32.totalorder %s91, %s105
    %p107 = scmp.eq.s32.totalorder %s18, 0
    %p108 = por %p106, %p107
    %s109 = ssub.s32 %s12, %s19
    %p110 = scmp.eq.s32.totalorder %s109, 0
    %s112 = sadd.s32 %s111, 1
    %s113 = scalar_select %p110, %s111, %s112
    %p116 = pneg %p110
    %p117 = scmp.eq.s32.totalorder %s12, 1
    %p118 = por %p116, %p117
    %p119 = scmp.ne.s32.totalorder %s111, %s114
    %p120 = scmp.eq.s32.totalorder %s12, 0
    %p121 = por %p119, %p120
    %p122 = scmp.ne.s32.totalorder %s111, %s114
    %p123 = scmp.eq.s32.totalorder %s17, 1
    %p124 = por %p122, %p123
    %p125 = scmp.ne.s32.totalorder %s114, %s115
    %p126 = scmp.eq.s32.totalorder %s17, 0
    %p127 = por %p125, %p126
    %p128 = scmp.ne.s32.totalorder %s114, %s115
    %p129 = scmp.eq.s32.totalorder %s18, 1
    %p130 = por %p128, %p129
    %p132 = scmp.ne.s32.totalorder %s115, %s131
    %p133 = scmp.eq.s32.totalorder %s18, 0
    %p134 = por %p132, %p133
    %s135 = ssub.s32 %s12, %s19
    %p136 = scmp.eq.s32.totalorder %s135, 0
    %s138 = sadd.s32 %s137, 1
    %s139 = scalar_select %p136, %s137, %s138
    %p142 = pneg %p136
    %p143 = scmp.eq.s32.totalorder %s12, 1
    %p144 = por %p142, %p143
    %p145 = scmp.ne.s32.totalorder %s137, %s140
    %p146 = scmp.eq.s32.totalorder %s12, 0
    %p147 = por %p145, %p146
    %p148 = scmp.ne.s32.totalorder %s137, %s140
    %p149 = scmp.eq.s32.totalorder %s17, 1
    %p150 = por %p148, %p149
    %p151 = scmp.ne.s32.totalorder %s140, %s141
    %p152 = scmp.eq.s32.totalorder %s17, 0
    %p153 = por %p151, %p152
    %p154 = scmp.ne.s32.totalorder %s140, %s141
    %p155 = scmp.eq.s32.totalorder %s18, 1
    %p156 = por %p154, %p155
    %p158 = scmp.ne.s32.totalorder %s141, %s157
    %p159 = scmp.eq.s32.totalorder %s18, 0
    %p160 = por %p158, %p159
    %p161 = scmp.le.s32.totalorder 1, %s12
    %p162 = scmp.lt.s32.totalorder %s12, 3
    %p163 = pnand %p161, %p162
    %p164 = pneg %p163
    // Predicated region
    $region9: #{_lambda_.27} parent=5 // pred_check
      _
    $region10: #{_lambda_.27} parent=5 // pred_check_branch
      %166 = sbr.rel (%p163) target = $region12
    $region11: #{_lambda_.27} parent=5 // pred_region
      %s167 = ssub.s32 %s12, 1
      // Predicated region
      $region13: #{_lambda_.27} parent=11 // pred_check
        %p168 = pneg %p59
      $region14: #{_lambda_.27} parent=11 // pred_check_branch
        %170 = sbr.rel (%p168) target = $region16
      $region15: #{_lambda_.27} parent=11 // pred_region
        _
      $region16: #{_lambda_.27} parent=11 // pred_fallthru
        _
      // Predicated region
      $region17: #{_lambda_.27} parent=11 // pred_check
        %p171 = pneg %p80
      $region18: #{_lambda_.27} parent=11 // pred_check_branch
        %173 = sbr.rel (%p171) target = $region20
      $region19: #{_lambda_.27} parent=11 // pred_region
        _
      $region20: #{_lambda_.27} parent=11 // pred_fallthru
        _
      // Predicated region
      $region21: #{_lambda_.27} parent=11 // pred_check
        %p174 = pneg %p101
      $region22: #{_lambda_.27} parent=11 // pred_check_branch
        %176 = sbr.rel (%p174) target = $region24
      $region23: #{_lambda_.27} parent=11 // pred_region
        _
      $region24: #{_lambda_.27} parent=11 // pred_fallthru
        _
    $region12: #{_lambda_.27} parent=5 // pred_fallthru
      _
    %p177 = scmp.lt.s32.totalorder %s12, 2
    // Predicated region
    $region25: #{_lambda_.27} parent=5 // pred_check
      %p178 = pneg %p177
    $region26: #{_lambda_.27} parent=5 // pred_check_branch
      %180 = sbr.rel (%p178) target = $region28
    $region27: #{_lambda_.27} parent=5 // pred_region
      // Predicated region
      $region29: #{_lambda_.27} parent=27 // pred_check
        %p181 = pneg %p32
      $region30: #{_lambda_.27} parent=27 // pred_check_branch
        %183 = sbr.rel (%p181) target = $region32
      $region31: #{_lambda_.27} parent=27 // pred_region
        %p184 = scmp.lt.s32.totalorder %s12, 1
        %s185 = scalar_select %p184, %s12, 1
        %s186 = smul.addr %s185, 2
        %s187 = smul.addr %s186, 8
        %s188 = scalar_lea.vmem %s0, %s187
      $region32: #{_lambda_.27} parent=27 // pred_fallthru
        _
    $region28: #{_lambda_.27} parent=5 // pred_fallthru
      _
    %p189 = scmp.le.s32.totalorder 1, %s12
    %p190 = scmp.lt.s32.totalorder %s12, 3
    %p191 = pnand %p189, %p190
    %p192 = pneg %p191
    // Predicated region
    $region33: #{_lambda_.27} parent=5 // pred_check
      _
    $region34: #{_lambda_.27} parent=5 // pred_check_branch
      %194 = sbr.rel (%p191) target = $region36
    $region35: #{_lambda_.27} parent=5 // pred_region
      %s195 = ssub.s32 %s12, 1
      %p196 = scmp.lt.s32.totalorder %s17, 1
      %s197 = scalar_select %p196, %s17, 1
      %s198 = smul.addr %s197, 2
      %s199 = smul.addr %s198, 8
      %s200 = scalar_lea.vmem %s0, %s199
      %p201 = pneg %p38
      %p202 = pneg %p35
      %p203 = pneg %p59
      %p204 = pneg %p56
      %p205 = pneg %p80
      %p206 = pneg %p77
      %p207 = pneg %p101
      %p208 = pneg %p98
      %p209 = pneg %p127
      %p210 = pneg %p124
      %p211 = scmp.lt.s32.totalorder %s17, 1
      %s212 = scalar_select %p211, %s17, 1
      %s213 = smul.addr %s212, 2
      %s214 = smul.addr %s213, 8
      %s215 = scalar_lea.vmem %s4, %s214
      %p216 = pneg %p153
      %p217 = pneg %p150
      %p218 = scmp.lt.s32.totalorder %s17, 1
      %s219 = scalar_select %p218, %s17, 1
      %s220 = smul.addr %s219, 2
      %s221 = smul.addr %s220, 8
      %s222 = scalar_lea.vmem %s5, %s221
      %p223 = scmp.lt.s32.totalorder %s17, 1
      %s224 = scalar_select %p223, %s17, 1
      %s225 = smul.addr %s224, 2
      %s226 = smul.addr %s225, 8
      %s227 = scalar_lea.vmem %s0, %s226
      %p228 = scmp.lt.s32.totalorder %s17, 1
      %s229 = scalar_select %p228, %s17, 1
      %s230 = smul.addr %s229, 2
      %s231 = smul.addr %s230, 8
      %s232 = scalar_lea.vmem %s4, %s231
      %p233 = scmp.lt.s32.totalorder %s17, 1
      %s234 = scalar_select %p233, %s17, 1
      %s235 = smul.addr %s234, 2
      %s236 = smul.addr %s235, 8
      %s237 = scalar_lea.vmem %s5, %s236
      %v239 = vld [vmem:[%s227] sm:$0xff]
      %v240 = vld [vmem:[%s227 + $0x8] sm:$0xff]
      %v241 = vpack.c.bf16 %v240, %v239
      %v242 = vld [vmem:[%s1] sm:$0xf]
      %v243 = vld [vmem:[%s1 + $0x4] sm:$0xf]
      %v244 = vld [vmem:[%s1 + $0x8] sm:$0xf]
      %v245 = vld [vmem:[%s1 + $0xc] sm:$0xf]
      %v250 = vunpack.c.l.b16 %v242
      %v251 = vunpack.c.l.b16 %v243
      %v252 = vunpack.c.l.b16 %v244
      %v253 = vunpack.c.l.b16 %v245
      %v254 = vpack.c.b16 %v251, %v250
      %v255 = vpack.c.b16 %v253, %v252
      %vm258 = vcmask 261120
      %v260 = vsel %vm258, %v241, 0
      %262 = vmatpush.bf16.msra.mxu0 0
      %263 = vmatpush.bf16.msra.mxu0 0
      %264 = vmatpush.bf16.msra.mxu0 0
      %265 = vmatpush.bf16.msra.mxu0 0
      %266 = vmatpush.bf16.msra.mxu0 0
      %267 = vmatpush.bf16.msra.mxu0 0
      %268 = vmatpush.bf16.msra.mxu0 %v255
      %269 = vmatpush.bf16.msra.mxu0 %v254
      %270 = vmatmul.bf16.gmra.mxu0 %v260
      %v271 = vpop.f32.mrf.mxu0
      %v272 = vadd.f32 0.0, %v271
      %v273 = vpop.f32.mrf.mxu0
      %v274 = vadd.f32 0.0, %v273
      %275 = vdwg.mxu0
      %v276 = vmax.f32 %v272, 0.0
      %v277 = vmax.f32 %v274, 0.0
      %v278 = vpack.c.bf16 %v277, %v276
      %v279 = vld [vmem:[%s2] sm:$0xf]
      %v280 = vld [vmem:[%s2 + $0x4] sm:$0xf]
      %v281 = vld [vmem:[%s2 + $0x8] sm:$0xf]
      %v282 = vld [vmem:[%s2 + $0xc] sm:$0xf]
      %v283 = vld [vmem:[%s2 + $0x10] sm:$0xf]
      %v284 = vld [vmem:[%s2 + $0x14] sm:$0xf]
      %v285 = vld [vmem:[%s2 + $0x18] sm:$0xf]
      %v286 = vld [vmem:[%s2 + $0x1c] sm:$0xf]
      %v295 = vunpack.c.l.b16 %v279
      %v296 = vunpack.c.l.b16 %v280
      %v297 = vunpack.c.l.b16 %v281
      %v298 = vunpack.c.l.b16 %v282
      %v299 = vunpack.c.l.b16 %v283
      %v300 = vunpack.c.l.b16 %v284
      %v301 = vunpack.c.l.b16 %v285
      %v302 = vunpack.c.l.b16 %v286
      %v303 = vpack.c.b16 %v296, %v295
      %v304 = vpack.c.b16 %v298, %v297
      %v305 = vpack.c.b16 %v300, %v299
      %v306 = vpack.c.b16 %v302, %v301
      %vm311 = vcmask 523264
      %v313 = vsel %vm311, %v278, 0
      %315 = vmatpush.bf16.msra.mxu0 0
      %316 = vmatpush.bf16.msra.mxu0 0
      %317 = vmatpush.bf16.msra.mxu0 0
      %318 = vmatpush.bf16.msra.mxu0 0
      %319 = vmatpush.bf16.msra.mxu0 %v306
      %320 = vmatpush.bf16.msra.mxu0 %v305
      %321 = vmatpush.bf16.msra.mxu0 %v304
      %322 = vmatpush.bf16.msra.mxu0 %v303
      %323 = vmatmul.bf16.gmra.mxu0 %v313
      %v324 = vpop.f32.mrf.mxu0
      %v325 = vadd.f32 0.0, %v324
      %v326 = vpop.f32.mrf.mxu0
      %v327 = vadd.f32 0.0, %v326
      %328 = vdwg.mxu0
      %v329 = vadd.f32 %v239, %v325
      %v330 = vadd.f32 %v240, %v327
      %v331 = vld [vmem:[%s3] sm:$0xff]
      %v332 = vld [vmem:[%s3 + $0x8] sm:$0xff]
      %vm333 = vcmask 130048
      %v335 = vsel %vm333, %v331, 0
      %v338 = vsel %vm333, %v332, 0
      %340 = vmatpush.msra.mxu0 0.0
      %341 = vmatpush.msra.mxu0 0.0
      %342 = vmatpush.msra.mxu0 0.0
      %343 = vmatpush.msra.mxu0 0.0
      %344 = vmatpush.msra.mxu0 0.0
      %345 = vmatpush.msra.mxu0 0.0
      %346 = vmatpush.msra.mxu0 0.0
      %347 = vmatpush.msra.mxu0 0.0
      %348 = vmatpush.msra.mxu0 0.0
      %349 = vmatpush.msra.mxu0 0.0
      %350 = vmatpush.msra.mxu0 0.0
      %351 = vmatpush.msra.mxu0 0.0
      %352 = vmatpush.msra.mxu0 0.0
      %353 = vmatpush.msra.mxu0 0.0
      %354 = vmatpush.msra.mxu0 %v330
      %355 = vmatpush.msra.mxu0 %v329
      %356 = vmatmul.f32.gmra.mxu0 %v335
      %v357 = vpop.f32.mrf.mxu0
      %v358 = vadd.f32 0.0, %v357
      %359 = vmatmul.f32.gmra.mxu0 %v338
      %v360 = vpop.f32.mrf.mxu0
      %v361 = vadd.f32 0.0, %v360
      %362 = vdwg.mxu0
      %v363 = vsub.f32 %v329, %v358
      %v364 = vsub.f32 %v330, %v361
      %365 = vst.msk [vmem:[%s232] sm:$0xff] %vm258, %v363
      %366 = vst.msk [vmem:[%s232 + $0x8] sm:$0xff] %vm258, %v364
      %367 = vst.msk [vmem:[%s237] sm:$0xff] %vm258, %v358
      %368 = vst.msk [vmem:[%s237 + $0x8] sm:$0xff] %vm258, %v361
      %p369 = scmp.lt.s32.totalorder %s17, 1
      %s370 = scalar_select %p369, %s17, 1
      %s371 = smul.addr %s370, 2
      %s372 = smul.addr %s371, 8
      %s373 = scalar_lea.vmem %s4, %s372
      %p374 = scmp.lt.s32.totalorder %s17, 1
      %s375 = scalar_select %p374, %s17, 1
      %s376 = smul.addr %s375, 2
      %s377 = smul.addr %s376, 8
      %s378 = scalar_lea.vmem %s5, %s377
      // Predicated region
      $region37: #{_lambda_.27} parent=35 // pred_check
        %p379 = pneg %p124
      $region38: #{_lambda_.27} parent=35 // pred_check_branch
        %381 = sbr.rel (%p379) target = $region40
      $region39: #{_lambda_.27} parent=35 // pred_region
        _
      $region40: #{_lambda_.27} parent=35 // pred_fallthru
        _
      // Predicated region
      $region41: #{_lambda_.27} parent=35 // pred_check
        %p382 = pneg %p150
      $region42: #{_lambda_.27} parent=35 // pred_check_branch
        %384 = sbr.rel (%p382) target = $region44
      $region43: #{_lambda_.27} parent=35 // pred_region
        _
      $region44: #{_lambda_.27} parent=35 // pred_fallthru
        _
    $region36: #{_lambda_.27} parent=5 // pred_fallthru
      _
    %p385 = scmp.le.s32.totalorder 2, %s12
    // Predicated region
    $region45: #{_lambda_.27} parent=5 // pred_check
      %p386 = pneg %p385
    $region46: #{_lambda_.27} parent=5 // pred_check_branch
      %388 = sbr.rel (%p386) target = $region48
    $region47: #{_lambda_.27} parent=5 // pred_region
      %s389 = ssub.s32 %s12, 2
      // Predicated region
      $region49: #{_lambda_.27} parent=47 // pred_check
        %p390 = pneg %p130
      $region50: #{_lambda_.27} parent=47 // pred_check_branch
        %392 = sbr.rel (%p390) target = $region52
      $region51: #{_lambda_.27} parent=47 // pred_region
        %p393 = scmp.lt.s32.totalorder %s18, 1
        %s394 = scalar_select %p393, %s18, 1
        %s395 = smul.addr %s394, 2
        %s396 = smul.addr %s395, 8
        %s397 = scalar_lea.vmem %s4, %s396
      $region52: #{_lambda_.27} parent=47 // pred_fallthru
        _
      // Predicated region
      $region53: #{_lambda_.27} parent=47 // pred_check
        %p398 = pneg %p156
      $region54: #{_lambda_.27} parent=47 // pred_check_branch
        %400 = sbr.rel (%p398) target = $region56
      $region55: #{_lambda_.27} parent=47 // pred_region
        %p401 = scmp.lt.s32.totalorder %s18, 1
        %s402 = scalar_select %p401, %s18, 1
        %s403 = smul.addr %s402, 2
        %s404 = smul.addr %s403, 8
        %s405 = scalar_lea.vmem %s5, %s404
      $region56: #{_lambda_.27} parent=47 // pred_fallthru
        _
    $region48: #{_lambda_.27} parent=5 // pred_fallthru
      _
  $region6: #{_lambda_.27} parent=0 // loop_footer
    %s16 = sadd.s32 1, %s12
  $region7: #{_lambda_.27} parent=0 // loop_footer_branch
    %11 = sbr.rel target = $region3
  $region8: #{_lambda_.27} parent=0 // loop_exit
    _

// kernel: _lambda_.28
$region0: #{_lambda_.28}
  #allocation0 [shape = 'u32[]', space=smem, size = 0x4, offset = 0x4, fixed_abs, tag = 'smem constant byte address 0x4 - core index']
  #allocation1 [shape = 'u32[72,128]{1,0:T(1,128)}', space=vmem, size = 0x9000, scoped, tag = 'internal scratch']
  %s0 = inlined_call_operand.vmem [shape: f32[2,16,4], index: 0, kind: input, shape index: {}]
  %s1 = inlined_call_operand.vmem [shape: f32[2,16,32], index: 1, kind: input, shape index: {}]
  %s2 = inlined_call_operand.vmem [shape: f32[2,16,32], index: 2, kind: input, shape index: {}]
  %s3 = inlined_call_operand.vmem [shape: f32[2,16,32], index: 3, kind: input, shape index: {}]
  %s4 = inlined_call_operand.vmem [shape: f32[3,32,4], index: 4, kind: input, shape index: {}]
  %s5 = inlined_call_operand.vmem [shape: f32[2,16,16], index: 5, kind: input, shape index: {}]
  %s6 = inlined_call_operand.vmem [shape: f32[2,16,4], index: 6, kind: output, shape index: {}]
  %s7 = sld [smem:[#allocation0]]
  $region57: #{_lambda_.28} parent=0
    _
  %s9 = ssub.s32 1, %s7
  %s10 = scalar_select 0, %s9, %s7
  loop: start=0, step=1, limit=4
  $region2: #{_lambda_.28} parent=0 // loop_pre_header
    _
  $region3: #{_lambda_.28} parent=0 // loop_header
    %s12 = sphi 0, %s16
    %p13 = scmp.ge.s32.totalorder %s12, 4
    %s22 = sphi 0, %s24
    %s25 = sphi 0, %s22
    %s26 = sphi 0, %s25
    %s42 = sphi 0, %s26
    %s48 = sphi 0, %s50
    %s51 = sphi 0, %s48
    %s52 = sphi 0, %s51
    %s68 = sphi 0, %s52
    %s74 = sphi 0, %s76
    %s77 = sphi 0, %s74
    %s78 = sphi 0, %s77
    %s94 = sphi 0, %s78
    %s100 = sphi 0, %s102
    %s103 = sphi 0, %s100
    %s104 = sphi 0, %s103
    %s120 = sphi 0, %s104
    %s124 = sphi 0, %s124
    %s126 = sphi 0, %s124
    %s127 = sphi 0, %s126
    %s141 = sphi 0, %s127
    %s145 = sphi 0, %s145
    %s147 = sphi 0, %s145
    %s148 = sphi 0, %s147
    %s162 = sphi 0, %s148
    %s168 = sphi 0, %s170
    %s171 = sphi 0, %s168
    %s172 = sphi 0, %s171
    %s188 = sphi 0, %s172
  $region4: #{_lambda_.28} parent=0 // loop_header_branch
    %15 = sbr.rel (%p13) target = $region8
  $region5: #{_lambda_.28} parent=0 // loop_body
    %s17 = ssub.s32 %s12, 1
    %s18 = ssub.s32 %s12, 2
    %s19 = sadd.s32 %s12, 1
    %s20 = ssub.s32 %s12, %s19
    %p21 = scmp.eq.s32.totalorder %s20, 0
    %s23 = sadd.s32 %s22, 1
    %s24 = scalar_select %p21, %s22, %s23
    %p27 = pneg %p21
    %p28 = scmp.eq.s32.totalorder %s12, 1
    %p29 = por %p27, %p28
    %p30 = scmp.ne.s32.totalorder %s22, %s25
    %p31 = scmp.eq.s32.totalorder %s12, 0
    %p32 = por %p30, %p31
    %p33 = scmp.ne.s32.totalorder %s22, %s25
    %p34 = scmp.eq.s32.totalorder %s17, 1
    %p35 = por %p33, %p34
    %p36 = scmp.ne.s32.totalorder %s25, %s26
    %p37 = scmp.eq.s32.totalorder %s17, 0
    %p38 = por %p36, %p37
    %p39 = scmp.ne.s32.totalorder %s25, %s26
    %p40 = scmp.eq.s32.totalorder %s18, 1
    %p41 = por %p39, %p40
    %p43 = scmp.ne.s32.totalorder %s26, %s42
    %p44 = scmp.eq.s32.totalorder %s18, 0
    %p45 = por %p43, %p44
    %s46 = ssub.s32 %s12, %s19
    %p47 = scmp.eq.s32.totalorder %s46, 0
    %s49 = sadd.s32 %s48, 1
    %s50 = scalar_select %p47, %s48, %s49
    %p53 = pneg %p47
    %p54 = scmp.eq.s32.totalorder %s12, 1
    %p55 = por %p53, %p54
    %p56 = scmp.ne.s32.totalorder %s48, %s51
    %p57 = scmp.eq.s32.totalorder %s12, 0
    %p58 = por %p56, %p57
    %p59 = scmp.ne.s32.totalorder %s48, %s51
    %p60 = scmp.eq.s32.totalorder %s17, 1
    %p61 = por %p59, %p60
    %p62 = scmp.ne.s32.totalorder %s51, %s52
    %p63 = scmp.eq.s32.totalorder %s17, 0
    %p64 = por %p62, %p63
    %p65 = scmp.ne.s32.totalorder %s51, %s52
    %p66 = scmp.eq.s32.totalorder %s18, 1
    %p67 = por %p65, %p66
    %p69 = scmp.ne.s32.totalorder %s52, %s68
    %p70 = scmp.eq.s32.totalorder %s18, 0
    %p71 = por %p69, %p70
    %s72 = ssub.s32 %s12, %s19
    %p73 = scmp.eq.s32.totalorder %s72, 0
    %s75 = sadd.s32 %s74, 1
    %s76 = scalar_select %p73, %s74, %s75
    %p79 = pneg %p73
    %p80 = scmp.eq.s32.totalorder %s12, 1
    %p81 = por %p79, %p80
    %p82 = scmp.ne.s32.totalorder %s74, %s77
    %p83 = scmp.eq.s32.totalorder %s12, 0
    %p84 = por %p82, %p83
    %p85 = scmp.ne.s32.totalorder %s74, %s77
    %p86 = scmp.eq.s32.totalorder %s17, 1
    %p87 = por %p85, %p86
    %p88 = scmp.ne.s32.totalorder %s77, %s78
    %p89 = scmp.eq.s32.totalorder %s17, 0
    %p90 = por %p88, %p89
    %p91 = scmp.ne.s32.totalorder %s77, %s78
    %p92 = scmp.eq.s32.totalorder %s18, 1
    %p93 = por %p91, %p92
    %p95 = scmp.ne.s32.totalorder %s78, %s94
    %p96 = scmp.eq.s32.totalorder %s18, 0
    %p97 = por %p95, %p96
    %s98 = ssub.s32 %s12, %s19
    %p99 = scmp.eq.s32.totalorder %s98, 0
    %s101 = sadd.s32 %s100, 1
    %s102 = scalar_select %p99, %s100, %s101
    %p105 = pneg %p99
    %p106 = scmp.eq.s32.totalorder %s12, 1
    %p107 = por %p105, %p106
    %p108 = scmp.ne.s32.totalorder %s100, %s103
    %p109 = scmp.eq.s32.totalorder %s12, 0
    %p110 = por %p108, %p109
    %p111 = scmp.ne.s32.totalorder %s100, %s103
    %p112 = scmp.eq.s32.totalorder %s17, 1
    %p113 = por %p111, %p112
    %p114 = scmp.ne.s32.totalorder %s103, %s104
    %p115 = scmp.eq.s32.totalorder %s17, 0
    %p116 = por %p114, %p115
    %p117 = scmp.ne.s32.totalorder %s103, %s104
    %p118 = scmp.eq.s32.totalorder %s18, 1
    %p119 = por %p117, %p118
    %p121 = scmp.ne.s32.totalorder %s104, %s120
    %p122 = scmp.eq.s32.totalorder %s18, 0
    %p123 = por %p121, %p122
    %s125 = sadd.s32 %s124, 1
    %p128 = scmp.eq.s32.totalorder %s12, 1
    %p129 = scmp.ne.s32.totalorder %s124, %s126
    %p130 = scmp.eq.s32.totalorder %s12, 0
    %p131 = por %p129, %p130
    %p132 = scmp.ne.s32.totalorder %s124, %s126
    %p133 = scmp.eq.s32.totalorder %s17, 1
    %p134 = por %p132, %p133
    %p135 = scmp.ne.s32.totalorder %s126, %s127
    %p136 = scmp.eq.s32.totalorder %s17, 0
    %p137 = por %p135, %p136
    %p138 = scmp.ne.s32.totalorder %s126, %s127
    %p139 = scmp.eq.s32.totalorder %s18, 1
    %p140 = por %p138, %p139
    %p142 = scmp.ne.s32.totalorder %s127, %s141
    %p143 = scmp.eq.s32.totalorder %s18, 0
    %p144 = por %p142, %p143
    %s146 = sadd.s32 %s145, 1
    %p149 = scmp.eq.s32.totalorder %s12, 1
    %p150 = scmp.ne.s32.totalorder %s145, %s147
    %p151 = scmp.eq.s32.totalorder %s12, 0
    %p152 = por %p150, %p151
    %p153 = scmp.ne.s32.totalorder %s145, %s147
    %p154 = scmp.eq.s32.totalorder %s17, 1
    %p155 = por %p153, %p154
    %p156 = scmp.ne.s32.totalorder %s147, %s148
    %p157 = scmp.eq.s32.totalorder %s17, 0
    %p158 = por %p156, %p157
    %p159 = scmp.ne.s32.totalorder %s147, %s148
    %p160 = scmp.eq.s32.totalorder %s18, 1
    %p161 = por %p159, %p160
    %p163 = scmp.ne.s32.totalorder %s148, %s162
    %p164 = scmp.eq.s32.totalorder %s18, 0
    %p165 = por %p163, %p164
    %s166 = ssub.s32 %s12, %s19
    %p167 = scmp.eq.s32.totalorder %s166, 0
    %s169 = sadd.s32 %s168, 1
    %s170 = scalar_select %p167, %s168, %s169
    %p173 = pneg %p167
    %p174 = scmp.eq.s32.totalorder %s12, 1
    %p175 = por %p173, %p174
    %p176 = scmp.ne.s32.totalorder %s168, %s171
    %p177 = scmp.eq.s32.totalorder %s12, 0
    %p178 = por %p176, %p177
    %p179 = scmp.ne.s32.totalorder %s168, %s171
    %p180 = scmp.eq.s32.totalorder %s17, 1
    %p181 = por %p179, %p180
    %p182 = scmp.ne.s32.totalorder %s171, %s172
    %p183 = scmp.eq.s32.totalorder %s17, 0
    %p184 = por %p182, %p183
    %p185 = scmp.ne.s32.totalorder %s171, %s172
    %p186 = scmp.eq.s32.totalorder %s18, 1
    %p187 = por %p185, %p186
    %p189 = scmp.ne.s32.totalorder %s172, %s188
    %p190 = scmp.eq.s32.totalorder %s18, 0
    %p191 = por %p189, %p190
    %p192 = scmp.le.s32.totalorder 1, %s12
    %p193 = scmp.lt.s32.totalorder %s12, 3
    %p194 = pnand %p192, %p193
    %p195 = pneg %p194
    // Predicated region
    $region9: #{_lambda_.28} parent=5 // pred_check
      _
    $region10: #{_lambda_.28} parent=5 // pred_check_branch
      %197 = sbr.rel (%p194) target = $region12
    $region11: #{_lambda_.28} parent=5 // pred_region
      %s198 = ssub.s32 %s12, 1
      // Predicated region
      $region13: #{_lambda_.28} parent=11 // pred_check
        %p199 = pneg %p137
      $region14: #{_lambda_.28} parent=11 // pred_check_branch
        %201 = sbr.rel (%p199) target = $region16
      $region15: #{_lambda_.28} parent=11 // pred_region
        _
      $region16: #{_lambda_.28} parent=11 // pred_fallthru
        _
      // Predicated region
      $region17: #{_lambda_.28} parent=11 // pred_check
        %p202 = pneg %p158
      $region18: #{_lambda_.28} parent=11 // pred_check_branch
        %204 = sbr.rel (%p202) target = $region20
      $region19: #{_lambda_.28} parent=11 // pred_region
        _
      $region20: #{_lambda_.28} parent=11 // pred_fallthru
        _
    $region12: #{_lambda_.28} parent=5 // pred_fallthru
      _
    %p205 = scmp.lt.s32.totalorder %s12, 2
    // Predicated region
    $region21: #{_lambda_.28} parent=5 // pred_check
      %p206 = pneg %p205
    $region22: #{_lambda_.28} parent=5 // pred_check_branch
      %208 = sbr.rel (%p206) target = $region24
    $region23: #{_lambda_.28} parent=5 // pred_region
      // Predicated region
      $region25: #{_lambda_.28} parent=23 // pred_check
        %p209 = pneg %p32
      $region26: #{_lambda_.28} parent=23 // pred_check_branch
        %211 = sbr.rel (%p209) target = $region28
      $region27: #{_lambda_.28} parent=23 // pred_region
        %p212 = scmp.lt.s32.totalorder %s12, 1
        %s213 = scalar_select %p212, %s12, 1
        %s214 = smul.addr %s213, 2
        %s215 = smul.addr %s214, 8
        %s216 = scalar_lea.vmem %s0, %s215
      $region28: #{_lambda_.28} parent=23 // pred_fallthru
        _
      // Predicated region
      $region29: #{_lambda_.28} parent=23 // pred_check
        %p217 = pneg %p58
      $region30: #{_lambda_.28} parent=23 // pred_check_branch
        %219 = sbr.rel (%p217) target = $region32
      $region31: #{_lambda_.28} parent=23 // pred_region
        %p220 = scmp.lt.s32.totalorder %s12, 1
        %s221 = scalar_select %p220, %s12, 1
        %s222 = smul.addr %s221, 2
        %s223 = smul.addr %s222, 8
        %s224 = scalar_lea.vmem %s1, %s223
      $region32: #{_lambda_.28} parent=23 // pred_fallthru
        _
      // Predicated region
      $region33: #{_lambda_.28} parent=23 // pred_check
        %p225 = pneg %p84
      $region34: #{_lambda_.28} parent=23 // pred_check_branch
        %227 = sbr.rel (%p225) target = $region36
      $region35: #{_lambda_.28} parent=23 // pred_region
        %p228 = scmp.lt.s32.totalorder %s12, 1
        %s229 = scalar_select %p228, %s12, 1
        %s230 = smul.addr %s229, 2
        %s231 = smul.addr %s230, 8
        %s232 = scalar_lea.vmem %s2, %s231
      $region36: #{_lambda_.28} parent=23 // pred_fallthru
        _
      // Predicated region
      $region37: #{_lambda_.28} parent=23 // pred_check
        %p233 = pneg %p110
      $region38: #{_lambda_.28} parent=23 // pred_check_branch
        %235 = sbr.rel (%p233) target = $region40
      $region39: #{_lambda_.28} parent=23 // pred_region
        %p236 = scmp.lt.s32.totalorder %s12, 1
        %s237 = scalar_select %p236, %s12, 1
        %s238 = smul.addr %s237, 2
        %s239 = smul.addr %s238, 8
        %s240 = scalar_lea.vmem %s3, %s239
      $region40: #{_lambda_.28} parent=23 // pred_fallthru
        _
    $region24: #{_lambda_.28} parent=5 // pred_fallthru
      _
    %p241 = scmp.le.s32.totalorder 1, %s12
    %p242 = scmp.lt.s32.totalorder %s12, 3
    %p243 = pnand %p241, %p242
    %p244 = pneg %p243
    // Predicated region
    $region41: #{_lambda_.28} parent=5 // pred_check
      _
    $region42: #{_lambda_.28} parent=5 // pred_check_branch
      %246 = sbr.rel (%p243) target = $region44
    $region43: #{_lambda_.28} parent=5 // pred_region
      %s247 = ssub.s32 %s12, 1
      %p248 = scmp.lt.s32.totalorder %s17, 1
      %s249 = scalar_select %p248, %s17, 1
      %s250 = smul.addr %s249, 2
      %s251 = smul.addr %s250, 8
      %s252 = scalar_lea.vmem %s0, %s251
      %p253 = pneg %p38
      %p254 = pneg %p35
      %p255 = scmp.lt.s32.totalorder %s17, 1
      %s256 = scalar_select %p255, %s17, 1
      %s257 = smul.addr %s256, 2
      %s258 = smul.addr %s257, 8
      %s259 = scalar_lea.vmem %s1, %s258
      %p260 = pneg %p64
      %p261 = pneg %p61
      %p262 = scmp.lt.s32.totalorder %s17, 1
      %s263 = scalar_select %p262, %s17, 1
      %s264 = smul.addr %s263, 2
      %s265 = smul.addr %s264, 8
      %s266 = scalar_lea.vmem %s2, %s265
      %p267 = pneg %p90
      %p268 = pneg %p87
      %p269 = scmp.lt.s32.totalorder %s17, 1
      %s270 = scalar_select %p269, %s17, 1
      %s271 = smul.addr %s270, 2
      %s272 = smul.addr %s271, 8
      %s273 = scalar_lea.vmem %s3, %s272
      %p274 = pneg %p116
      %p275 = pneg %p113
      %p276 = pneg %p137
      %p277 = pneg %p134
      %p278 = pneg %p158
      %p279 = pneg %p155
      %p280 = pneg %p184
      %p281 = pneg %p181
      %p282 = scmp.lt.s32.totalorder %s17, 1
      %s283 = scalar_select %p282, %s17, 1
      %s284 = smul.addr %s283, 2
      %s285 = smul.addr %s284, 8
      %s286 = scalar_lea.vmem %s6, %s285
      %p287 = scmp.lt.s32.totalorder %s17, 1
      %s288 = scalar_select %p287, %s17, 1
      %s289 = smul.addr %s288, 2
      %s290 = smul.addr %s289, 8
      %s291 = scalar_lea.vmem %s0, %s290
      %p292 = scmp.lt.s32.totalorder %s17, 1
      %s293 = scalar_select %p292, %s17, 1
      %s294 = smul.addr %s293, 2
      %s295 = smul.addr %s294, 8
      %s296 = scalar_lea.vmem %s1, %s295
      %p297 = scmp.lt.s32.totalorder %s17, 1
      %s298 = scalar_select %p297, %s17, 1
      %s299 = smul.addr %s298, 2
      %s300 = smul.addr %s299, 8
      %s301 = scalar_lea.vmem %s2, %s300
      %p302 = scmp.lt.s32.totalorder %s17, 1
      %s303 = scalar_select %p302, %s17, 1
      %s304 = smul.addr %s303, 2
      %s305 = smul.addr %s304, 8
      %s306 = scalar_lea.vmem %s3, %s305
      %p307 = scmp.lt.s32.totalorder %s17, 1
      %s308 = scalar_select %p307, %s17, 1
      %s309 = smul.addr %s308, 2
      %s310 = smul.addr %s309, 8
      %s311 = scalar_lea.vmem %s6, %s310
      %v312 = vld [vmem:[%s296] sm:$0xff]
      %v313 = vld [vmem:[%s296 + $0x8] sm:$0xff]
      %v314 = vld [vmem:[%s301] sm:$0xff]
      %v315 = vld [vmem:[%s301 + $0x8] sm:$0xff]
      %v316 = vadd.f32 %v312, %v314
      %v317 = vadd.f32 %v313, %v315
      %v318 = vld [vmem:[%s306] sm:$0xff]
      %v319 = vld [vmem:[%s306 + $0x8] sm:$0xff]
      %v320 = vadd.f32 %v316, %v318
      %v321 = vadd.f32 %v317, %v319
      %v322 = vld [vmem:[%s5] sm:$0xff]
      %v323 = vld [vmem:[%s5 + $0x8] sm:$0xff]
      %vm324 = vcmask 130048
      %v326 = vsel %vm324, %v322, 0
      %v329 = vsel %vm324, %v323, 0
      %331 = vmatpush.msra.mxu0 0.0
      %332 = vmatpush.msra.mxu0 0.0
      %333 = vmatpush.msra.mxu0 0.0
      %334 = vmatpush.msra.mxu0 0.0
      %335 = vmatpush.msra.mxu0 0.0
      %336 = vmatpush.msra.mxu0 0.0
      %337 = vmatpush.msra.mxu0 0.0
      %338 = vmatpush.msra.mxu0 0.0
      %339 = vmatpush.msra.mxu0 0.0
      %340 = vmatpush.msra.mxu0 0.0
      %341 = vmatpush.msra.mxu0 0.0
      %342 = vmatpush.msra.mxu0 0.0
      %343 = vmatpush.msra.mxu0 0.0
      %344 = vmatpush.msra.mxu0 0.0
      %345 = vmatpush.msra.mxu0 %v321
      %346 = vmatpush.msra.mxu0 %v320
      %347 = vmatmul.f32.gmra.mxu0 %v326
      %v348 = vpop.f32.mrf.mxu0
      %v349 = vadd.f32 0.0, %v348
      %350 = vmatmul.f32.gmra.mxu0 %v329
      %v351 = vpop.f32.mrf.mxu0
      %v352 = vadd.f32 0.0, %v351
      %353 = vdwg.mxu0
      %s354 = scalar_lea.vmem %s5, 16
      %v355 = vld [vmem:[%s354] sm:$0xff]
      %v356 = vld [vmem:[%s354 + $0x8] sm:$0xff]
      %v358 = vsel %vm324, %v355, 0
      %v361 = vsel %vm324, %v356, 0
      %363 = vmatpush.msra.mxu0 0.0
      %364 = vmatpush.msra.mxu0 0.0
      %365 = vmatpush.msra.mxu0 0.0
      %366 = vmatpush.msra.mxu0 0.0
      %367 = vmatpush.msra.mxu0 0.0
      %368 = vmatpush.msra.mxu0 0.0
      %369 = vmatpush.msra.mxu0 0.0
      %370 = vmatpush.msra.mxu0 0.0
      %371 = vmatpush.msra.mxu0 0.0
      %372 = vmatpush.msra.mxu0 0.0
      %373 = vmatpush.msra.mxu0 0.0
      %374 = vmatpush.msra.mxu0 0.0
      %375 = vmatpush.msra.mxu0 0.0
      %376 = vmatpush.msra.mxu0 0.0
      %377 = vmatpush.msra.mxu0 %v321
      %378 = vmatpush.msra.mxu0 %v320
      %379 = vmatmul.f32.gmra.mxu0 %v358
      %v380 = vpop.f32.mrf.mxu0
      %v381 = vadd.f32 0.0, %v380
      %382 = vmatmul.f32.gmra.mxu0 %v361
      %v383 = vpop.f32.mrf.mxu0
      %v384 = vadd.f32 0.0, %v383
      %385 = vdwg.mxu0
      %v386 = vld [vmem:[%s4] sm:$0xff]
      %v387 = vld [vmem:[%s4 + $0x8] sm:$0xff]
      %v388 = vld [vmem:[%s4 + $0x10] sm:$0xff]
      %v389 = vld [vmem:[%s4 + $0x18] sm:$0xff]
      %s390 = scalar_lea.vmem %s4, 32
      %v391 = vld [vmem:[%s390] sm:$0xff]
      %v392 = vld [vmem:[%s390 + $0x8] sm:$0xff]
      %v393 = vld [vmem:[%s390 + $0x10] sm:$0xff]
      %v394 = vld [vmem:[%s390 + $0x18] sm:$0xff]
      %vm395 = vcmask 261120
      %v397 = vsel %vm395, %v320, 0
      %v400 = vsel %vm395, %v321, 0
      %402 = vmatpush.msra.mxu0 0.0
      %403 = vmatpush.msra.mxu0 0.0
      %404 = vmatpush.msra.mxu0 0.0
      %405 = vmatpush.msra.mxu0 0.0
      %406 = vmatpush.msra.mxu0 0.0
      %407 = vmatpush.msra.mxu0 0.0
      %408 = vmatpush.msra.mxu0 0.0
      %409 = vmatpush.msra.mxu0 0.0
      %410 = vmatpush.msra.mxu0 0.0
      %411 = vmatpush.msra.mxu0 0.0
      %412 = vmatpush.msra.mxu0 0.0
      %413 = vmatpush.msra.mxu0 0.0
      %414 = vmatpush.msra.mxu0 %v394
      %415 = vmatpush.msra.mxu0 %v393
      %416 = vmatpush.msra.mxu0 %v392
      %417 = vmatpush.msra.mxu0 %v391
      %418 = vmatmul.f32.gmra.mxu0 %v397
      %v419 = vpop.f32.mrf.mxu0
      %v420 = vadd.f32 0.0, %v419
      %421 = vmatmul.f32.gmra.mxu0 %v400
      %v422 = vpop.f32.mrf.mxu0
      %v423 = vadd.f32 0.0, %v422
      %424 = vdwg.mxu0
      %v426 = vsel %vm395, %v349, 0
      %v429 = vsel %vm395, %v352, 0
      %431 = vmatpush.msra.mxu0 0.0
      %432 = vmatpush.msra.mxu0 0.0
      %433 = vmatpush.msra.mxu0 0.0
      %434 = vmatpush.msra.mxu0 0.0
      %435 = vmatpush.msra.mxu0 0.0
      %436 = vmatpush.msra.mxu0 0.0
      %437 = vmatpush.msra.mxu0 0.0
      %438 = vmatpush.msra.mxu0 0.0
      %439 = vmatpush.msra.mxu0 0.0
      %440 = vmatpush.msra.mxu0 0.0
      %441 = vmatpush.msra.mxu0 0.0
      %442 = vmatpush.msra.mxu0 0.0
      %443 = vmatpush.msra.mxu0 %v389
      %444 = vmatpush.msra.mxu0 %v388
      %445 = vmatpush.msra.mxu0 %v387
      %446 = vmatpush.msra.mxu0 %v386
      %447 = vmatmul.f32.gmra.mxu0 %v426
      %v448 = vpop.f32.mrf.mxu0
      %v449 = vadd.f32 %v420, %v448
      %450 = vmatmul.f32.gmra.mxu0 %v429
      %v451 = vpop.f32.mrf.mxu0
      %v452 = vadd.f32 %v423, %v451
      %453 = vdwg.mxu0
      %s454 = scalar_lea.vmem %s4, 64
      %v455 = vld [vmem:[%s454] sm:$0xff]
      %v456 = vld [vmem:[%s454 + $0x8] sm:$0xff]
      %v457 = vld [vmem:[%s454 + $0x10] sm:$0xff]
      %v458 = vld [vmem:[%s454 + $0x18] sm:$0xff]
      %v460 = vsel %vm395, %v381, 0
      %v463 = vsel %vm395, %v384, 0
      %465 = vmatpush.msra.mxu0 0.0
      %466 = vmatpush.msra.mxu0 0.0
      %467 = vmatpush.msra.mxu0 0.0
      %468 = vmatpush.msra.mxu0 0.0
      %469 = vmatpush.msra.mxu0 0.0
      %470 = vmatpush.msra.mxu0 0.0
      %471 = vmatpush.msra.mxu0 0.0
      %472 = vmatpush.msra.mxu0 0.0
      %473 = vmatpush.msra.mxu0 0.0
      %474 = vmatpush.msra.mxu0 0.0
      %475 = vmatpush.msra.mxu0 0.0
      %476 = vmatpush.msra.mxu0 0.0
      %477 = vmatpush.msra.mxu0 %v458
      %478 = vmatpush.msra.mxu0 %v457
      %479 = vmatpush.msra.mxu0 %v456
      %480 = vmatpush.msra.mxu0 %v455
      %481 = vmatmul.f32.gmra.mxu0 %v460
      %v482 = vpop.f32.mrf.mxu0
      %v483 = vadd.f32 0.0, %v482
      %484 = vmatmul.f32.gmra.mxu0 %v463
      %v485 = vpop.f32.mrf.mxu0
      %v486 = vadd.f32 0.0, %v485
      %487 = vdwg.mxu0
      %v488 = vadd.f32 %v449, %v483
      %v489 = vadd.f32 %v452, %v486
      %v490 = vld [vmem:[%s291] sm:$0xff]
      %v491 = vld [vmem:[%s291 + $0x8] sm:$0xff]
      %v492 = vadd.f32 %v490, %v488
      %v493 = vadd.f32 %v491, %v489
      %vm494 = vcmask 31744
      %495 = vst.msk [vmem:[%s311] sm:$0xff] %vm494, %v492
      %496 = vst.msk [vmem:[%s311 + $0x8] sm:$0xff] %vm494, %v493
      %p497 = scmp.lt.s32.totalorder %s17, 1
      %s498 = scalar_select %p497, %s17, 1
      %s499 = smul.addr %s498, 2
      %s500 = smul.addr %s499, 8
      %s501 = scalar_lea.vmem %s6, %s500
      // Predicated region
      $region45: #{_lambda_.28} parent=43 // pred_check
        %p502 = pneg %p181
      $region46: #{_lambda_.28} parent=43 // pred_check_branch
        %504 = sbr.rel (%p502) target = $region48
      $region47: #{_lambda_.28} parent=43 // pred_region
        _
      $region48: #{_lambda_.28} parent=43 // pred_fallthru
        _
    $region44: #{_lambda_.28} parent=5 // pred_fallthru
      _
    %p505 = scmp.le.s32.totalorder 2, %s12
    // Predicated region
    $region49: #{_lambda_.28} parent=5 // pred_check
      %p506 = pneg %p505
    $region50: #{_lambda_.28} parent=5 // pred_check_branch
      %508 = sbr.rel (%p506) target = $region52
    $region51: #{_lambda_.28} parent=5 // pred_region
      %s509 = ssub.s32 %s12, 2
      // Predicated region
      $region53: #{_lambda_.28} parent=51 // pred_check
        %p510 = pneg %p187
      $region54: #{_lambda_.28} parent=51 // pred_check_branch
        %512 = sbr.rel (%p510) target = $region56
      $region55: #{_lambda_.28} parent=51 // pred_region
        %p513 = scmp.lt.s32.totalorder %s18, 1
        %s514 = scalar_select %p513, %s18, 1
        %s515 = smul.addr %s514, 2
        %s516 = smul.addr %s515, 8
        %s517 = scalar_lea.vmem %s6, %s516
      $region56: #{_lambda_.28} parent=51 // pred_fallthru
        _
    $region52: #{_lambda_.28} parent=5 // pred_fallthru
      _
  $region6: #{_lambda_.28} parent=0 // loop_footer
    %s16 = sadd.s32 1, %s12
  $region7: #{_lambda_.28} parent=0 // loop_footer_branch
    %11 = sbr.rel target = $region3
  $region8: #{_lambda_.28} parent=0 // loop_exit
    _

// kernel: _lambda_.29
$region0: #{_lambda_.29}
  #allocation0 [shape = 'u32[]', space=smem, size = 0x4, offset = 0x4, fixed_abs, tag = 'smem constant byte address 0x4 - core index']
  #allocation1 [shape = 'u32[72,128]{1,0:T(1,128)}', space=vmem, size = 0x9000, scoped, tag = 'internal scratch']
  %s0 = inlined_call_operand.vmem [shape: f32[2,16,32], index: 0, kind: input, shape index: {}]
  %s1 = inlined_call_operand.vmem [shape: f32[1,32], index: 1, kind: input, shape index: {}]
  %s2 = inlined_call_operand.vmem [shape: f32[1,32], index: 2, kind: input, shape index: {}]
  %s3 = inlined_call_operand.vmem [shape: f32[32,4], index: 3, kind: input, shape index: {}]
  %s4 = inlined_call_operand.vmem [shape: f32[1,4], index: 4, kind: input, shape index: {}]
  %s5 = inlined_call_operand.vmem [shape: f32[2,16,4], index: 5, kind: input, shape index: {}]
  %s6 = inlined_call_operand.vmem [shape: f32[2,16,4], index: 6, kind: output, shape index: {}]
  %s7 = sld [smem:[#allocation0]]
  $region57: #{_lambda_.29} parent=0
    _
  %s9 = ssub.s32 1, %s7
  %s10 = scalar_select 0, %s9, %s7
  loop: start=0, step=1, limit=4
  $region2: #{_lambda_.29} parent=0 // loop_pre_header
    _
  $region3: #{_lambda_.29} parent=0 // loop_header
    %s12 = sphi 0, %s16
    %p13 = scmp.ge.s32.totalorder %s12, 4
    %s22 = sphi 0, %s24
    %s25 = sphi 0, %s22
    %s26 = sphi 0, %s25
    %s42 = sphi 0, %s26
    %s46 = sphi 0, %s46
    %s48 = sphi 0, %s46
    %s49 = sphi 0, %s48
    %s63 = sphi 0, %s49
    %s67 = sphi 0, %s67
    %s69 = sphi 0, %s67
    %s70 = sphi 0, %s69
    %s84 = sphi 0, %s70
    %s88 = sphi 0, %s88
    %s90 = sphi 0, %s88
    %s91 = sphi 0, %s90
    %s105 = sphi 0, %s91
    %s109 = sphi 0, %s109
    %s111 = sphi 0, %s109
    %s112 = sphi 0, %s111
    %s126 = sphi 0, %s112
    %s132 = sphi 0, %s134
    %s135 = sphi 0, %s132
    %s136 = sphi 0, %s135
    %s152 = sphi 0, %s136
    %s158 = sphi 0, %s160
    %s161 = sphi 0, %s158
    %s162 = sphi 0, %s161
    %s178 = sphi 0, %s162
  $region4: #{_lambda_.29} parent=0 // loop_header_branch
    %15 = sbr.rel (%p13) target = $region8
  $region5: #{_lambda_.29} parent=0 // loop_body
    %s17 = ssub.s32 %s12, 1
    %s18 = ssub.s32 %s12, 2
    %s19 = sadd.s32 %s12, 1
    %s20 = ssub.s32 %s12, %s19
    %p21 = scmp.eq.s32.totalorder %s20, 0
    %s23 = sadd.s32 %s22, 1
    %s24 = scalar_select %p21, %s22, %s23
    %p27 = pneg %p21
    %p28 = scmp.eq.s32.totalorder %s12, 1
    %p29 = por %p27, %p28
    %p30 = scmp.ne.s32.totalorder %s22, %s25
    %p31 = scmp.eq.s32.totalorder %s12, 0
    %p32 = por %p30, %p31
    %p33 = scmp.ne.s32.totalorder %s22, %s25
    %p34 = scmp.eq.s32.totalorder %s17, 1
    %p35 = por %p33, %p34
    %p36 = scmp.ne.s32.totalorder %s25, %s26
    %p37 = scmp.eq.s32.totalorder %s17, 0
    %p38 = por %p36, %p37
    %p39 = scmp.ne.s32.totalorder %s25, %s26
    %p40 = scmp.eq.s32.totalorder %s18, 1
    %p41 = por %p39, %p40
    %p43 = scmp.ne.s32.totalorder %s26, %s42
    %p44 = scmp.eq.s32.totalorder %s18, 0
    %p45 = por %p43, %p44
    %s47 = sadd.s32 %s46, 1
    %p50 = scmp.eq.s32.totalorder %s12, 1
    %p51 = scmp.ne.s32.totalorder %s46, %s48
    %p52 = scmp.eq.s32.totalorder %s12, 0
    %p53 = por %p51, %p52
    %p54 = scmp.ne.s32.totalorder %s46, %s48
    %p55 = scmp.eq.s32.totalorder %s17, 1
    %p56 = por %p54, %p55
    %p57 = scmp.ne.s32.totalorder %s48, %s49
    %p58 = scmp.eq.s32.totalorder %s17, 0
    %p59 = por %p57, %p58
    %p60 = scmp.ne.s32.totalorder %s48, %s49
    %p61 = scmp.eq.s32.totalorder %s18, 1
    %p62 = por %p60, %p61
    %p64 = scmp.ne.s32.totalorder %s49, %s63
    %p65 = scmp.eq.s32.totalorder %s18, 0
    %p66 = por %p64, %p65
    %s68 = sadd.s32 %s67, 1
    %p71 = scmp.eq.s32.totalorder %s12, 1
    %p72 = scmp.ne.s32.totalorder %s67, %s69
    %p73 = scmp.eq.s32.totalorder %s12, 0
    %p74 = por %p72, %p73
    %p75 = scmp.ne.s32.totalorder %s67, %s69
    %p76 = scmp.eq.s32.totalorder %s17, 1
    %p77 = por %p75, %p76
    %p78 = scmp.ne.s32.totalorder %s69, %s70
    %p79 = scmp.eq.s32.totalorder %s17, 0
    %p80 = por %p78, %p79
    %p81 = scmp.ne.s32.totalorder %s69, %s70
    %p82 = scmp.eq.s32.totalorder %s18, 1
    %p83 = por %p81, %p82
    %p85 = scmp.ne.s32.totalorder %s70, %s84
    %p86 = scmp.eq.s32.totalorder %s18, 0
    %p87 = por %p85, %p86
    %s89 = sadd.s32 %s88, 1
    %p92 = scmp.eq.s32.totalorder %s12, 1
    %p93 = scmp.ne.s32.totalorder %s88, %s90
    %p94 = scmp.eq.s32.totalorder %s12, 0
    %p95 = por %p93, %p94
    %p96 = scmp.ne.s32.totalorder %s88, %s90
    %p97 = scmp.eq.s32.totalorder %s17, 1
    %p98 = por %p96, %p97
    %p99 = scmp.ne.s32.totalorder %s90, %s91
    %p100 = scmp.eq.s32.totalorder %s17, 0
    %p101 = por %p99, %p100
    %p102 = scmp.ne.s32.totalorder %s90, %s91
    %p103 = scmp.eq.s32.totalorder %s18, 1
    %p104 = por %p102, %p103
    %p106 = scmp.ne.s32.totalorder %s91, %s105
    %p107 = scmp.eq.s32.totalorder %s18, 0
    %p108 = por %p106, %p107
    %s110 = sadd.s32 %s109, 1
    %p113 = scmp.eq.s32.totalorder %s12, 1
    %p114 = scmp.ne.s32.totalorder %s109, %s111
    %p115 = scmp.eq.s32.totalorder %s12, 0
    %p116 = por %p114, %p115
    %p117 = scmp.ne.s32.totalorder %s109, %s111
    %p118 = scmp.eq.s32.totalorder %s17, 1
    %p119 = por %p117, %p118
    %p120 = scmp.ne.s32.totalorder %s111, %s112
    %p121 = scmp.eq.s32.totalorder %s17, 0
    %p122 = por %p120, %p121
    %p123 = scmp.ne.s32.totalorder %s111, %s112
    %p124 = scmp.eq.s32.totalorder %s18, 1
    %p125 = por %p123, %p124
    %p127 = scmp.ne.s32.totalorder %s112, %s126
    %p128 = scmp.eq.s32.totalorder %s18, 0
    %p129 = por %p127, %p128
    %s130 = ssub.s32 %s12, %s19
    %p131 = scmp.eq.s32.totalorder %s130, 0
    %s133 = sadd.s32 %s132, 1
    %s134 = scalar_select %p131, %s132, %s133
    %p137 = pneg %p131
    %p138 = scmp.eq.s32.totalorder %s12, 1
    %p139 = por %p137, %p138
    %p140 = scmp.ne.s32.totalorder %s132, %s135
    %p141 = scmp.eq.s32.totalorder %s12, 0
    %p142 = por %p140, %p141
    %p143 = scmp.ne.s32.totalorder %s132, %s135
    %p144 = scmp.eq.s32.totalorder %s17, 1
    %p145 = por %p143, %p144
    %p146 = scmp.ne.s32.totalorder %s135, %s136
    %p147 = scmp.eq.s32.totalorder %s17, 0
    %p148 = por %p146, %p147
    %p149 = scmp.ne.s32.totalorder %s135, %s136
    %p150 = scmp.eq.s32.totalorder %s18, 1
    %p151 = por %p149, %p150
    %p153 = scmp.ne.s32.totalorder %s136, %s152
    %p154 = scmp.eq.s32.totalorder %s18, 0
    %p155 = por %p153, %p154
    %s156 = ssub.s32 %s12, %s19
    %p157 = scmp.eq.s32.totalorder %s156, 0
    %s159 = sadd.s32 %s158, 1
    %s160 = scalar_select %p157, %s158, %s159
    %p163 = pneg %p157
    %p164 = scmp.eq.s32.totalorder %s12, 1
    %p165 = por %p163, %p164
    %p166 = scmp.ne.s32.totalorder %s158, %s161
    %p167 = scmp.eq.s32.totalorder %s12, 0
    %p168 = por %p166, %p167
    %p169 = scmp.ne.s32.totalorder %s158, %s161
    %p170 = scmp.eq.s32.totalorder %s17, 1
    %p171 = por %p169, %p170
    %p172 = scmp.ne.s32.totalorder %s161, %s162
    %p173 = scmp.eq.s32.totalorder %s17, 0
    %p174 = por %p172, %p173
    %p175 = scmp.ne.s32.totalorder %s161, %s162
    %p176 = scmp.eq.s32.totalorder %s18, 1
    %p177 = por %p175, %p176
    %p179 = scmp.ne.s32.totalorder %s162, %s178
    %p180 = scmp.eq.s32.totalorder %s18, 0
    %p181 = por %p179, %p180
    %p182 = scmp.le.s32.totalorder 1, %s12
    %p183 = scmp.lt.s32.totalorder %s12, 3
    %p184 = pnand %p182, %p183
    %p185 = pneg %p184
    // Predicated region
    $region9: #{_lambda_.29} parent=5 // pred_check
      _
    $region10: #{_lambda_.29} parent=5 // pred_check_branch
      %187 = sbr.rel (%p184) target = $region12
    $region11: #{_lambda_.29} parent=5 // pred_region
      %s188 = ssub.s32 %s12, 1
      // Predicated region
      $region13: #{_lambda_.29} parent=11 // pred_check
        %p189 = pneg %p59
      $region14: #{_lambda_.29} parent=11 // pred_check_branch
        %191 = sbr.rel (%p189) target = $region16
      $region15: #{_lambda_.29} parent=11 // pred_region
        _
      $region16: #{_lambda_.29} parent=11 // pred_fallthru
        _
      // Predicated region
      $region17: #{_lambda_.29} parent=11 // pred_check
        %p192 = pneg %p80
      $region18: #{_lambda_.29} parent=11 // pred_check_branch
        %194 = sbr.rel (%p192) target = $region20
      $region19: #{_lambda_.29} parent=11 // pred_region
        _
      $region20: #{_lambda_.29} parent=11 // pred_fallthru
        _
      // Predicated region
      $region21: #{_lambda_.29} parent=11 // pred_check
        %p195 = pneg %p101
      $region22: #{_lambda_.29} parent=11 // pred_check_branch
        %197 = sbr.rel (%p195) target = $region24
      $region23: #{_lambda_.29} parent=11 // pred_region
        _
      $region24: #{_lambda_.29} parent=11 // pred_fallthru
        _
      // Predicated region
      $region25: #{_lambda_.29} parent=11 // pred_check
        %p198 = pneg %p122
      $region26: #{_lambda_.29} parent=11 // pred_check_branch
        %200 = sbr.rel (%p198) target = $region28
      $region27: #{_lambda_.29} parent=11 // pred_region
        _
      $region28: #{_lambda_.29} parent=11 // pred_fallthru
        _
    $region12: #{_lambda_.29} parent=5 // pred_fallthru
      _
    %p201 = scmp.lt.s32.totalorder %s12, 2
    // Predicated region
    $region29: #{_lambda_.29} parent=5 // pred_check
      %p202 = pneg %p201
    $region30: #{_lambda_.29} parent=5 // pred_check_branch
      %204 = sbr.rel (%p202) target = $region32
    $region31: #{_lambda_.29} parent=5 // pred_region
      // Predicated region
      $region33: #{_lambda_.29} parent=31 // pred_check
        %p205 = pneg %p32
      $region34: #{_lambda_.29} parent=31 // pred_check_branch
        %207 = sbr.rel (%p205) target = $region36
      $region35: #{_lambda_.29} parent=31 // pred_region
        %p208 = scmp.lt.s32.totalorder %s12, 1
        %s209 = scalar_select %p208, %s12, 1
        %s210 = smul.addr %s209, 2
        %s211 = smul.addr %s210, 8
        %s212 = scalar_lea.vmem %s0, %s211
      $region36: #{_lambda_.29} parent=31 // pred_fallthru
        _
      // Predicated region
      $region37: #{_lambda_.29} parent=31 // pred_check
        %p213 = pneg %p142
      $region38: #{_lambda_.29} parent=31 // pred_check_branch
        %215 = sbr.rel (%p213) target = $region40
      $region39: #{_lambda_.29} parent=31 // pred_region
        %p216 = scmp.lt.s32.totalorder %s12, 1
        %s217 = scalar_select %p216, %s12, 1
        %s218 = smul.addr %s217, 2
        %s219 = smul.addr %s218, 8
        %s220 = scalar_lea.vmem %s5, %s219
      $region40: #{_lambda_.29} parent=31 // pred_fallthru
        _
    $region32: #{_lambda_.29} parent=5 // pred_fallthru
      _
    %p221 = scmp.le.s32.totalorder 1, %s12
    %p222 = scmp.lt.s32.totalorder %s12, 3
    %p223 = pnand %p221, %p222
    %p224 = pneg %p223
    // Predicated region
    $region41: #{_lambda_.29} parent=5 // pred_check
      _
    $region42: #{_lambda_.29} parent=5 // pred_check_branch
      %226 = sbr.rel (%p223) target = $region44
    $region43: #{_lambda_.29} parent=5 // pred_region
      %s227 = ssub.s32 %s12, 1
      %p228 = scmp.lt.s32.totalorder %s17, 1
      %s229 = scalar_select %p228, %s17, 1
      %s230 = smul.addr %s229, 2
      %s231 = smul.addr %s230, 8
      %s232 = scalar_lea.vmem %s0, %s231
      %p233 = pneg %p38
      %p234 = pneg %p35
      %p235 = pneg %p59
      %p236 = pneg %p56
      %p237 = pneg %p80
      %p238 = pneg %p77
      %p239 = pneg %p101
      %p240 = pneg %p98
      %p241 = pneg %p122
      %p242 = pneg %p119
      %p243 = scmp.lt.s32.totalorder %s17, 1
      %s244 = scalar_select %p243, %s17, 1
      %s245 = smul.addr %s244, 2
      %s246 = smul.addr %s245, 8
      %s247 = scalar_lea.vmem %s5, %s246
      %p248 = pneg %p148
      %p249 = pneg %p145
      %p250 = pneg %p174
      %p251 = pneg %p171
      %p252 = scmp.lt.s32.totalorder %s17, 1
      %s253 = scalar_select %p252, %s17, 1
      %s254 = smul.addr %s253, 2
      %s255 = smul.addr %s254, 8
      %s256 = scalar_lea.vmem %s6, %s255
      %p257 = scmp.lt.s32.totalorder %s17, 1
      %s258 = scalar_select %p257, %s17, 1
      %s259 = smul.addr %s258, 2
      %s260 = smul.addr %s259, 8
      %s261 = scalar_lea.vmem %s0, %s260
      %p262 = scmp.lt.s32.totalorder %s17, 1
      %s263 = scalar_select %p262, %s17, 1
      %s264 = smul.addr %s263, 2
      %s265 = smul.addr %s264, 8
      %s266 = scalar_lea.vmem %s5, %s265
      %p267 = scmp.lt.s32.totalorder %s17, 1
      %s268 = scalar_select %p267, %s17, 1
      %s269 = smul.addr %s268, 2
      %s270 = smul.addr %s269, 8
      %s271 = scalar_lea.vmem %s6, %s270
      %v272 = vld [vmem:[%s261] sm:$0xff]
      %v273 = vld [vmem:[%s261 + $0x8] sm:$0xff]
      %vm274 = vcmask 261120
      %v275 = vsel %vm274, %v272, 0.0
      %276 = vadd.xlane.f32.xlu0 %v275
      %v277 = vpop.xlane.xlu0 %276
      %v278 = vsel %vm274, %v273, 0.0
      %279 = vadd.xlane.f32.xlu0 %v278
      %v280 = vpop.xlane.xlu0 %279
      %v281 = vrcp.pop 32.0
      %v282 = vmul.f32 32.0, %v281
      %v283 = vsub.f32 1.0, %v282
      %v284 = vmul.f32 %v281, %v283
      %v285 = vadd.f32 %v281, %v284
      %vm286 = vweird.f32 %v281
      %v287 = vsel %vm286, %v281, %v285
      %v288 = vmul.f32 %v277, %v287
      %v289 = vmul.f32 %v280, %v287
      %v290 = vsub.f32 %v272, %v288
      %v291 = vsub.f32 %v273, %v289
      %v292 = vmul.f32 %v290, %v290
      %v293 = vmul.f32 %v291, %v291
      %v294 = vsel %vm274, %v292, 0.0
      %295 = vadd.xlane.f32.xlu0 %v294
      %v296 = vpop.xlane.xlu0 %295
      %v297 = vsel %vm274, %v293, 0.0
      %298 = vadd.xlane.f32.xlu0 %v297
      %v299 = vpop.xlane.xlu0 %298
      %v300 = vmul.f32 %v296, %v287
      %v301 = vmul.f32 %v299, %v287
      %v302 = vadd.f32 %v300, 1e-05
      %v303 = vadd.f32 %v301, 1e-05
      %v304 = vrsqrt.pop %v302
      %v305 = vmul.f32 %v304, %v302
      %v306 = vmul.f32 %v305, %v304
      %v307 = vmul.f32 0.5, %v306
      %v308 = vsub.f32 1.5, %v307
      %v309 = vmul.f32 %v304, %v308
      %vm310 = vweird.f32 %v302
      %vm311 = vweird.f32 %v304
      %vm312 = vmor %vm310, %vm311
      %v313 = vsel %vm312, %v304, %v309
      %v314 = vrsqrt.pop %v303
      %v315 = vmul.f32 %v314, %v303
      %v316 = vmul.f32 %v315, %v314
      %v317 = vmul.f32 0.5, %v316
      %v318 = vsub.f32 1.5, %v317
      %v319 = vmul.f32 %v314, %v318
      %vm320 = vweird.f32 %v303
      %vm321 = vweird.f32 %v314
      %vm322 = vmor %vm320, %vm321
      %v323 = vsel %vm322, %v314, %v319
      %v324 = vmul.f32 %v290, %v313
      %v325 = vmul.f32 %v291, %v323
      %v326 = vld [vmem:[%s1] sm:$0x1]
      %v328 = vperm.slane %v326, 0
      %v330 = vmul.f32 %v324, %v328
      %v331 = vmul.f32 %v325, %v328
      %v332 = vld [vmem:[%s2] sm:$0x1]
      %v334 = vperm.slane %v332, 0
      %v336 = vadd.f32 %v330, %v334
      %v337 = vadd.f32 %v331, %v334
      %v338 = vsel %vm274, %v336, 0.0
      %v339 = vsel %vm274, %v337, 0.0
      %v340 = vadd.f32 %v338, %v339
      %v341 = vrot.slane %v340, 4
      %v342 = vadd.f32 %v340, %v341
      %v343 = vrot.slane %v342, 2
      %v344 = vadd.f32 %v342, %v343
      %v345 = vrot.slane %v344, 1
      %v346 = vadd.f32 %v344, %v345
      %v347 = vrcp.pop 16.0
      %v348 = vmul.f32 16.0, %v347
      %v349 = vsub.f32 1.0, %v348
      %v350 = vmul.f32 %v347, %v349
      %v351 = vadd.f32 %v347, %v350
      %vm352 = vweird.f32 %v347
      %v353 = vsel %vm352, %v347, %v351
      %v354 = vmul.f32 %v346, %v353
      %v355 = vsub.f32 %v336, %v354
      %v356 = vsub.f32 %v337, %v354
      %v357 = vld [vmem:[%s3] sm:$0xff]
      %v358 = vld [vmem:[%s3 + $0x8] sm:$0xff]
      %v359 = vld [vmem:[%s3 + $0x10] sm:$0xff]
      %v360 = vld [vmem:[%s3 + $0x18] sm:$0xff]
      %v361 = vld [vmem:[%s4] sm:$0x1]
      %v363 = vperm.slane %v361, 0
      %v366 = vsel %vm274, %v355, 0
      %v369 = vsel %vm274, %v356, 0
      %371 = vmatpush.msra.mxu0 0.0
      %372 = vmatpush.msra.mxu0 0.0
      %373 = vmatpush.msra.mxu0 0.0
      %374 = vmatpush.msra.mxu0 0.0
      %375 = vmatpush.msra.mxu0 0.0
      %376 = vmatpush.msra.mxu0 0.0
      %377 = vmatpush.msra.mxu0 0.0
      %378 = vmatpush.msra.mxu0 0.0
      %379 = vmatpush.msra.mxu0 0.0
      %380 = vmatpush.msra.mxu0 0.0
      %381 = vmatpush.msra.mxu0 0.0
      %382 = vmatpush.msra.mxu0 0.0
      %383 = vmatpush.msra.mxu0 %v360
      %384 = vmatpush.msra.mxu0 %v359
      %385 = vmatpush.msra.mxu0 %v358
      %386 = vmatpush.msra.mxu0 %v357
      %387 = vmatmul.f32.gmra.mxu0 %v366
      %v388 = vpop.f32.mrf.mxu0
      %v389 = vadd.f32 %v363, %v388
      %390 = vmatmul.f32.gmra.mxu0 %v369
      %v391 = vpop.f32.mrf.mxu0
      %v392 = vadd.f32 %v363, %v391
      %393 = vdwg.mxu0
      %v394 = vld [vmem:[%s266] sm:$0xff]
      %v395 = vld [vmem:[%s266 + $0x8] sm:$0xff]
      %v396 = vadd.f32 %v394, %v389
      %v397 = vadd.f32 %v395, %v392
      %vm398 = vcmask 31744
      %399 = vst.msk [vmem:[%s271] sm:$0xff] %vm398, %v396
      %400 = vst.msk [vmem:[%s271 + $0x8] sm:$0xff] %vm398, %v397
      %p401 = scmp.lt.s32.totalorder %s17, 1
      %s402 = scalar_select %p401, %s17, 1
      %s403 = smul.addr %s402, 2
      %s404 = smul.addr %s403, 8
      %s405 = scalar_lea.vmem %s6, %s404
      // Predicated region
      $region45: #{_lambda_.29} parent=43 // pred_check
        %p406 = pneg %p171
      $region46: #{_lambda_.29} parent=43 // pred_check_branch
        %408 = sbr.rel (%p406) target = $region48
      $region47: #{_lambda_.29} parent=43 // pred_region
        _
      $region48: #{_lambda_.29} parent=43 // pred_fallthru
        _
    $region44: #{_lambda_.29} parent=5 // pred_fallthru
      _
    %p409 = scmp.le.s32.totalorder 2, %s12
    // Predicated region
    $region49: #{_lambda_.29} parent=5 // pred_check
      %p410 = pneg %p409
    $region50: #{_lambda_.29} parent=5 // pred_check_branch
      %412 = sbr.rel (%p410) target = $region52
    $region51: #{_lambda_.29} parent=5 // pred_region
      %s413 = ssub.s32 %s12, 2
      // Predicated region
      $region53: #{_lambda_.29} parent=51 // pred_check
        %p414 = pneg %p177
      $region54: #{_lambda_.29} parent=51 // pred_check_branch
        %416 = sbr.rel (%p414) target = $region56
      $region55: #{_lambda_.29} parent=51 // pred_region
        %p417 = scmp.lt.s32.totalorder %s18, 1
        %s418 = scalar_select %p417, %s18, 1
        %s419 = smul.addr %s418, 2
        %s420 = smul.addr %s419, 8
        %s421 = scalar_lea.vmem %s6, %s420
      $region56: #{_lambda_.29} parent=51 // pred_fallthru
        _
    $region52: #{_lambda_.29} parent=5 // pred_fallthru
      _
  $region6: #{_lambda_.29} parent=0 // loop_footer
    %s16 = sadd.s32 1, %s12
  $region7: #{_lambda_.29} parent=0 // loop_footer_branch
    %11 = sbr.rel target = $region3
  $region8: #{_lambda_.29} parent=0 // loop_exit
    _

</llo_original>
